<compile_context>
chip_gen: v6e
topology: v6e:2x2x1
jax: 0.10.0
libtpu: 0.0.40
codegen_flags: <defaults>
</compile_context>

<pallas_src>
import functools

import jax
import jax.numpy as jnp
from jax.experimental import pallas as pl
from jax.experimental.pallas import tpu as pltpu


def _head_kernel(*refs, eps, has_bias):
    if has_bias:
        (x_ref, wd_ref, bd_ref, g_ref, beta_ref, wdec_ref, bdec_ref,
         o_ref, h_scr) = refs
    else:
        (x_ref, wd_ref, bd_ref, g_ref, beta_ref, wdec_ref,
         o_ref, h_scr) = refs
        bdec_ref = None

    # Grid axis 0: row tiles (parallel).  Grid axis 1: vocab tiles (arbitrary,
    # innermost) — required because h_scr is carried across the vocab axis for
    # a fixed row tile and must be written at vocab tile 0 first.
    @pl.when(pl.program_id(1) == 0)
    def _():
        h = jnp.dot(x_ref[...], wd_ref[...],
                    preferred_element_type=jnp.float32) + bd_ref[...]
        h = jnp.maximum(h, 0.0)                                   # relu
        mean = jnp.mean(h, axis=-1, keepdims=True)
        var = jnp.mean((h - mean) ** 2, axis=-1, keepdims=True)   # biased var
        h = (h - mean) * jax.lax.rsqrt(var + eps)                 # EUP rsqrt
        h_scr[...] = (h * g_ref[...] + beta_ref[...]).astype(h_scr.dtype)

    logits = jnp.dot(h_scr[...], wdec_ref[...],
                     preferred_element_type=jnp.float32)
    if has_bias:
        logits = logits + bdec_ref[...]
    o_ref[...] = logits.astype(o_ref.dtype)


def _round_up(a, b):
    return (a + b - 1) // b * b


def _vmem_budget_bytes():
    """~75% of per-core VMEM: ≈96 MiB on v5e/v6e, ≈48 MiB on v7x."""
    try:
        cap = pltpu.get_tpu_info().vmem_capacity_bytes
        return int(cap) * 3 // 4
    except Exception:
        return 48 * 1024 * 1024   # conservative fallback, safe on every gen


def _vmem_estimate(tm, tv, H, out_bytes, has_bias):
    use = 2 * tm * H * 2            # x row tile, double-buffered bf16
    use += H * H * 2                # Wd, single-buffered bf16
    use += 3 * H * 4                # bd / gamma / beta, single-buffered f32
    use += 2 * H * tv * 2           # Wdec tile, double-buffered bf16
    if has_bias:
        use += 2 * tv * 4           # lm bias tile, double-buffered f32
    use += 2 * tm * tv * out_bytes  # output tile, double-buffered
    use += tm * H * 2               # h_scr scratch (bf16)
    use += tm * H * 4               # f32 epilogue transient (approx)
    return use


def t5encoder_lm_head(x, wd, bd, gamma, beta, wdec, b_lm=None,
                      *, eps=1e-6, tm=1024, tv=1024,
                      out_dtype=jnp.bfloat16, single_buffer_consts=True):
    """x: [B, S, H]; wd: [H, H] ([in, out]); bd/gamma/beta: [H];
    wdec: [H, V] ([in, out]); b_lm: [V] or None (skips the bias stream)."""
    B, S, H = x.shape
    V = wdec.shape[1]
    N = B * S
    has_bias = b_lm is not None
    out_bytes = jnp.dtype(out_dtype).itemsize

    GRAN = 256  # MXU-friendly row/vocab granularity (also a multiple of 128)

    # Tile sizes: MXU-friendly multiples of 256, clamped to the padded problem.
    tm_eff = max(GRAN, min(_round_up(tm, GRAN), _round_up(N, GRAN)))
    tv_eff = max(GRAN, min(_round_up(tv, GRAN), _round_up(V, GRAN)))

    # Shrink tiles until the (approximate) VMEM footprint fits the budget.
    budget = _vmem_budget_bytes()
    while (_vmem_estimate(tm_eff, tv_eff, H, out_bytes, has_bias) > budget
           and (tm_eff > GRAN or tv_eff > GRAN)):
        if tm_eff >= tv_eff and tm_eff > GRAN:
            tm_eff //= 2
        elif tv_eff > GRAN:
            tv_eff //= 2
        else:
            break

    # Keep >= 2 row tiles when N permits so both v7x TensorCores get work.
    while (_round_up(N, tm_eff) // tm_eff) < 2 and tm_eff >= 2 * GRAN and N > GRAN:
        tm_eff //= 2

    n_pad = _round_up(N, tm_eff)
    v_pad = _round_up(V, tv_eff)

    # bf16 for the large streamed / MXU operands; f32 for the tiny vectors.
    x2 = x.reshape(N, H).astype(jnp.bfloat16)
    if n_pad != N:
        x2 = jnp.pad(x2, ((0, n_pad - N), (0, 0)))
    wd_b = wd.astype(jnp.bfloat16)
    bd2 = bd.reshape(1, H).astype(jnp.float32)
    g2 = gamma.reshape(1, H).astype(jnp.float32)
    be2 = beta.reshape(1, H).astype(jnp.float32)
    wdec_b = wdec.astype(jnp.bfloat16)
    if v_pad != V:
        wdec_b = jnp.pad(wdec_b, ((0, 0), (0, v_pad - V)))

    # Constant-index operands are never re-DMA'd -> single buffer saves VMEM.
    const_mode = pl.Buffered(1) if single_buffer_consts else None

    in_specs = [
        pl.BlockSpec((tm_eff, H), lambda i, v: (i, 0)),          # x row tile
        pl.BlockSpec((H, H), lambda i, v: (0, 0),
                     pipeline_mode=const_mode),                   # dense weight
        pl.BlockSpec((1, H), lambda i, v: (0, 0),
                     pipeline_mode=const_mode),                   # dense bias
        pl.BlockSpec((1, H), lambda i, v: (0, 0),
                     pipeline_mode=const_mode),                   # LN gamma
        pl.BlockSpec((1, H), lambda i, v: (0, 0),
                     pipeline_mode=const_mode),                   # LN beta
        pl.BlockSpec((H, tv_eff), lambda i, v: (0, v)),           # decoder W tile
    ]
    operands = [x2, wd_b, bd2, g2, be2, wdec_b]
    if has_bias:
        blm2 = b_lm.reshape(1, V).astype(jnp.float32)
        if v_pad != V:
            blm2 = jnp.pad(blm2, ((0, 0), (0, v_pad - V)))
        in_specs.append(pl.BlockSpec((1, tv_eff), lambda i, v: (0, v)))
        operands.append(blm2)

    kernel = functools.partial(_head_kernel, eps=eps, has_bias=has_bias)

    out = pl.pallas_call(
        kernel,
        out_shape=jax.ShapeDtypeStruct((n_pad, v_pad), out_dtype),
        grid_spec=pltpu.PrefetchScalarGridSpec(
            num_scalar_prefetch=0,
            grid=(n_pad // tm_eff, v_pad // tv_eff),   # rows outer, vocab inner
            in_specs=in_specs,
            out_specs=pl.BlockSpec((tm_eff, tv_eff), lambda i, v: (i, v)),
            scratch_shapes=[pltpu.VMEM((tm_eff, H), jnp.bfloat16)],
        ),
        compiler_params=pltpu.CompilerParams(
            # Row axis parallel (v7x dual-TC / megacore); vocab axis must stay
            # arbitrary & innermost because h_scr is carried across it.
            dimension_semantics=("parallel", "arbitrary"),
            vmem_limit_bytes=budget),
    )(*operands)

    return out[:N, :V].reshape(B, S, V)


def _reference(x, wd, bd, gamma, beta, wdec, b_lm, eps=1e-6,
               out_dtype=jnp.bfloat16):
    # Mirrors the kernel's bf16 matmul inputs / f32 accumulation / bf16 store
    # so the comparison is tight; the math matches the PyTorch module.
    B, S, H = x.shape
    xb = x.reshape(B * S, H).astype(jnp.bfloat16)
    h = jnp.dot(xb, wd.astype(jnp.bfloat16),
                preferred_element_type=jnp.float32) + bd
    h = jnp.maximum(h, 0.0)
    mean = jnp.mean(h, axis=-1, keepdims=True)
    var = jnp.mean((h - mean) ** 2, axis=-1, keepdims=True)
    h = (h - mean) * jax.lax.rsqrt(var + eps) * gamma + beta
    h = h.astype(jnp.bfloat16)
    out = jnp.dot(h, wdec.astype(jnp.bfloat16),
                  preferred_element_type=jnp.float32)
    if b_lm is not None:
        out = out + b_lm
    return out.astype(out_dtype).reshape(B, S, -1)


if __name__ == "__main__":
    # Small, shape-consistent config: batch=2, seq=8, hidden=128, vocab=256.
    B, S, H, V = 2, 8, 128, 256
    eps = 1e-6

    key = jax.random.PRNGKey(0)
    kx, kwd, kbd, kwdec = jax.random.split(key, 4)

    x = jax.random.normal(kx, (B, S, H), dtype=jnp.float32)
    # nn.Linear(H, H): weight pre-transposed to [in, out]; bias [H].
    wd = jax.random.normal(kwd, (H, H), dtype=jnp.float32) * (1.0 / jnp.sqrt(H))
    bd = jax.random.normal(kbd, (H,), dtype=jnp.float32) * 0.02
    # LayerNorm params: gamma=1, beta=0 (PyTorch default init).
    gamma = jnp.ones((H,), dtype=jnp.float32)
    beta = jnp.zeros((H,), dtype=jnp.float32)
    # decoder nn.Linear(H, V, bias=False) weight -> [in, out]; shared bias zeros.
    wdec = jax.random.normal(kwdec, (H, V), dtype=jnp.float32) * (1.0 / jnp.sqrt(H))
    b_lm = jnp.zeros((V,), dtype=jnp.float32)

    try:
        out = t5encoder_lm_head(x, wd, bd, gamma, beta, wdec, b_lm, eps=eps)
    except Exception:
        # Fallback in case this jax build rejects single-buffered BlockSpecs.
        out = t5encoder_lm_head(x, wd, bd, gamma, beta, wdec, b_lm, eps=eps,
                                single_buffer_consts=False)
    out = jax.block_until_ready(out)

    ref = _reference(x, wd, bd, gamma, beta, wdec, b_lm, eps=eps)
    assert out.shape == (B, S, V)
    assert jnp.allclose(out.astype(jnp.float32), ref.astype(jnp.float32),
                        atol=3e-2, rtol=3e-2), "mismatch vs reference"

    print("KERNEL_OK")
</pallas_src>

<mosaic_0001>
module attributes {stable_mosaic.version = 11 : i64} {
  func.func @_head_kernel(%arg0: i32, %arg1: i32, %arg2: memref<256x128xbf16, #tpu.memory_space<vmem>>, %arg3: memref<128x128xbf16, #tpu.memory_space<vmem>>, %arg4: memref<1x128xf32, #tpu.memory_space<vmem>>, %arg5: memref<1x128xf32, #tpu.memory_space<vmem>>, %arg6: memref<1x128xf32, #tpu.memory_space<vmem>>, %arg7: memref<128x256xbf16, #tpu.memory_space<vmem>>, %arg8: memref<1x256xf32, #tpu.memory_space<vmem>>, %arg9: memref<256x256xbf16, #tpu.memory_space<vmem>>, %arg10: memref<256x128xbf16, #tpu.memory_space<vmem>>) attributes {dimension_semantics = [#tpu.dimension_semantics<parallel>, #tpu.dimension_semantics<arbitrary>], iteration_bounds = array<i64: 1, 1>, scalar_prefetch = 0 : i64, scratch_operands = 1 : i64, tpu.core_type = #tpu.core_type<tc>, window_params = [{transform_indices = @transform_0, window_bounds = array<i64: 256, 128>}, {pipeline_mode = #tpu.pipeline_mode<synchronous>, transform_indices = @transform_1, window_bounds = array<i64: 128, 128>}, {pipeline_mode = #tpu.pipeline_mode<synchronous>, transform_indices = @transform_2, window_bounds = array<i64: 1, 128>}, {pipeline_mode = #tpu.pipeline_mode<synchronous>, transform_indices = @transform_3, window_bounds = array<i64: 1, 128>}, {pipeline_mode = #tpu.pipeline_mode<synchronous>, transform_indices = @transform_4, window_bounds = array<i64: 1, 128>}, {transform_indices = @transform_5, window_bounds = array<i64: 128, 256>}, {transform_indices = @transform_6, window_bounds = array<i64: 1, 256>}, {transform_indices = @transform_7, window_bounds = array<i64: 256, 256>}]} {
    %c0_i32 = arith.constant 0 : i32
    %0 = arith.cmpi eq, %arg1, %c0_i32 : i32
    %1 = arith.extui %0 : i1 to i32
    %c0_i32_0 = arith.constant 0 : i32
    %2 = arith.cmpi ne, %1, %c0_i32_0 : i32
    scf.if %2 {
      %c0_8 = arith.constant 0 : index
      %c0_9 = arith.constant 0 : index
      %11 = vector.load %arg2[%c0_8, %c0_9] : memref<256x128xbf16, #tpu.memory_space<vmem>>, vector<256x128xbf16>
      %c0_10 = arith.constant 0 : index
      %c0_11 = arith.constant 0 : index
      %12 = vector.load %arg3[%c0_10, %c0_11] : memref<128x128xbf16, #tpu.memory_space<vmem>>, vector<128x128xbf16>
      %cst_12 = arith.constant dense<0.000000e+00> : vector<256x128xf32>
      %13 = tpu.matmul %11, %12, %cst_12 {dimension_numbers = #tpu.dot_dimension_numbers<[1], [0], [0], [1], [0, 0, 1, 1], [], []>} : vector<256x128xbf16>, vector<128x128xbf16>, vector<256x128xf32> -> vector<256x128xf32>
      %c0_13 = arith.constant 0 : index
      %c0_14 = arith.constant 0 : index
      %14 = vector.load %arg4[%c0_13, %c0_14] : memref<1x128xf32, #tpu.memory_space<vmem>>, vector<1x128xf32>
      %15 = vector.broadcast %14 : vector<1x128xf32> to vector<256x128xf32>
      %16 = arith.addf %13, %15 : vector<256x128xf32>
      %cst_15 = arith.constant 0.000000e+00 : f32
      %17 = vector.broadcast %cst_15 : f32 to vector<256x128xf32>
      %18 = arith.maximumf %16, %17 : vector<256x128xf32>
      %cst_16 = arith.constant dense<0.000000e+00> : vector<256xf32>
      %19 = vector.multi_reduction <add>, %18, %cst_16 [1] : vector<256x128xf32> to vector<256xf32>
      %20 = vector.shape_cast %19 : vector<256xf32> to vector<256x1xf32>
      %cst_17 = arith.constant 1.280000e+02 : f32
      %21 = vector.broadcast %cst_17 : f32 to vector<256x1xf32>
      %22 = arith.divf %20, %21 : vector<256x1xf32>
      %23 = vector.broadcast %22 : vector<256x1xf32> to vector<256x128xf32>
      %24 = arith.subf %18, %23 : vector<256x128xf32>
      %25 = arith.mulf %24, %24 : vector<256x128xf32>
      %cst_18 = arith.constant dense<0.000000e+00> : vector<256xf32>
      %26 = vector.multi_reduction <add>, %25, %cst_18 [1] : vector<256x128xf32> to vector<256xf32>
      %27 = vector.shape_cast %26 : vector<256xf32> to vector<256x1xf32>
      %cst_19 = arith.constant 1.280000e+02 : f32
      %28 = vector.broadcast %cst_19 : f32 to vector<256x1xf32>
      %29 = arith.divf %27, %28 : vector<256x1xf32>
      %30 = vector.broadcast %22 : vector<256x1xf32> to vector<256x128xf32>
      %31 = arith.subf %18, %30 : vector<256x128xf32>
      %cst_20 = arith.constant 9.99999997E-7 : f32
      %32 = vector.broadcast %cst_20 : f32 to vector<256x1xf32>
      %33 = arith.addf %29, %32 : vector<256x1xf32>
      %34 = math.rsqrt %33 : vector<256x1xf32>
      %35 = vector.broadcast %34 : vector<256x1xf32> to vector<256x128xf32>
      %36 = arith.mulf %31, %35 : vector<256x128xf32>
      %c0_21 = arith.constant 0 : index
      %c0_22 = arith.constant 0 : index
      %37 = vector.load %arg5[%c0_21, %c0_22] : memref<1x128xf32, #tpu.memory_space<vmem>>, vector<1x128xf32>
      %38 = vector.broadcast %37 : vector<1x128xf32> to vector<256x128xf32>
      %39 = arith.mulf %36, %38 : vector<256x128xf32>
      %c0_23 = arith.constant 0 : index
      %c0_24 = arith.constant 0 : index
      %40 = vector.load %arg6[%c0_23, %c0_24] : memref<1x128xf32, #tpu.memory_space<vmem>>, vector<1x128xf32>
      %41 = vector.broadcast %40 : vector<1x128xf32> to vector<256x128xf32>
      %42 = arith.addf %39, %41 : vector<256x128xf32>
      %43 = arith.truncf %42 : vector<256x128xf32> to vector<256x128xbf16>
      %c0_25 = arith.constant 0 : index
      %c0_26 = arith.constant 0 : index
      %44 = vector.load %arg10[%c0_25, %c0_26] : memref<256x128xbf16, #tpu.memory_space<vmem>>, vector<256x128xbf16>
      tpu.vector_store %arg10[%c0_25, %c0_26], %43 {strides = array<i32>} : memref<256x128xbf16, #tpu.memory_space<vmem>>, vector<256x128xbf16>,
    } else {
    }
    %c0 = arith.constant 0 : index
    %c0_1 = arith.constant 0 : index
    %3 = vector.load %arg10[%c0, %c0_1] : memref<256x128xbf16, #tpu.memory_space<vmem>>, vector<256x128xbf16>
    %c0_2 = arith.constant 0 : index
    %c0_3 = arith.constant 0 : index
    %4 = vector.load %arg7[%c0_2, %c0_3] : memref<128x256xbf16, #tpu.memory_space<vmem>>, vector<128x256xbf16>
    %cst = arith.constant dense<0.000000e+00> : vector<256x256xf32>
    %5 = tpu.matmul %3, %4, %cst {dimension_numbers = #tpu.dot_dimension_numbers<[1], [0], [0], [1], [0, 0, 1, 1], [], []>} : vector<256x128xbf16>, vector<128x256xbf16>, vector<256x256xf32> -> vector<256x256xf32>
    %c0_4 = arith.constant 0 : index
    %c0_5 = arith.constant 0 : index
    %6 = vector.load %arg8[%c0_4, %c0_5] : memref<1x256xf32, #tpu.memory_space<vmem>>, vector<1x256xf32>
    %7 = vector.broadcast %6 : vector<1x256xf32> to vector<256x256xf32>
    %8 = arith.addf %5, %7 : vector<256x256xf32>
    %9 = arith.truncf %8 : vector<256x256xf32> to vector<256x256xbf16>
    %c0_6 = arith.constant 0 : index
    %c0_7 = arith.constant 0 : index
    %10 = vector.load %arg9[%c0_6, %c0_7] : memref<256x256xbf16, #tpu.memory_space<vmem>>, vector<256x256xbf16>
    tpu.vector_store %arg9[%c0_6, %c0_7], %9 {strides = array<i32>} : memref<256x256xbf16, #tpu.memory_space<vmem>>, vector<256x256xbf16>,
    return
  }
  func.func @transform_0(%arg0: i32, %arg1: i32) -> (i32, i32) {
    %c0_i32 = arith.constant 0 : i32
    %c0_i32_0 = arith.constant 0 : i32
    return %arg0, %c0_i32 : i32, i32
  }
  func.func @transform_1(%arg0: i32, %arg1: i32) -> (i32, i32) {
    %c0_i32 = arith.constant 0 : i32
    %c0_i32_0 = arith.constant 0 : i32
    %c0_i32_1 = arith.constant 0 : i32
    return %c0_i32, %c0_i32_0 : i32, i32
  }
  func.func @transform_2(%arg0: i32, %arg1: i32) -> (i32, i32) {
    %c0_i32 = arith.constant 0 : i32
    %c0_i32_0 = arith.constant 0 : i32
    %c0_i32_1 = arith.constant 0 : i32
    return %c0_i32, %c0_i32_0 : i32, i32
  }
  func.func @transform_3(%arg0: i32, %arg1: i32) -> (i32, i32) {
    %c0_i32 = arith.constant 0 : i32
    %c0_i32_0 = arith.constant 0 : i32
    %c0_i32_1 = arith.constant 0 : i32
    return %c0_i32, %c0_i32_0 : i32, i32
  }
  func.func @transform_4(%arg0: i32, %arg1: i32) -> (i32, i32) {
    %c0_i32 = arith.constant 0 : i32
    %c0_i32_0 = arith.constant 0 : i32
    %c0_i32_1 = arith.constant 0 : i32
    return %c0_i32, %c0_i32_0 : i32, i32
  }
  func.func @transform_5(%arg0: i32, %arg1: i32) -> (i32, i32) {
    %c0_i32 = arith.constant 0 : i32
    %c0_i32_0 = arith.constant 0 : i32
    return %c0_i32, %arg1 : i32, i32
  }
  func.func @transform_6(%arg0: i32, %arg1: i32) -> (i32, i32) {
    %c0_i32 = arith.constant 0 : i32
    %c0_i32_0 = arith.constant 0 : i32
    return %c0_i32, %arg1 : i32, i32
  }
  func.func @transform_7(%arg0: i32, %arg1: i32) -> (i32, i32) {
    %c0_i32 = arith.constant 0 : i32
    return %arg0, %arg1 : i32, i32
  }
}

module attributes {stable_mosaic.version = 11 : i64} {
  func.func @_head_kernel(%arg0: i32, %arg1: i32, %arg2: memref<256x128xbf16, #tpu.memory_space<vmem>>, %arg3: memref<128x128xbf16, #tpu.memory_space<vmem>>, %arg4: memref<1x128xf32, #tpu.memory_space<vmem>>, %arg5: memref<1x128xf32, #tpu.memory_space<vmem>>, %arg6: memref<1x128xf32, #tpu.memory_space<vmem>>, %arg7: memref<128x256xbf16, #tpu.memory_space<vmem>>, %arg8: memref<1x256xf32, #tpu.memory_space<vmem>>, %arg9: memref<256x256xbf16, #tpu.memory_space<vmem>>, %arg10: memref<256x128xbf16, #tpu.memory_space<vmem>>) attributes {dimension_semantics = [#tpu.dimension_semantics<parallel>, #tpu.dimension_semantics<arbitrary>], iteration_bounds = array<i64: 1, 1>, scalar_prefetch = 0 : i64, scratch_operands = 1 : i64, tpu.core_type = #tpu.core_type<tc>, window_params = [{transform_indices = @transform_0, window_bounds = array<i64: 256, 128>}, {pipeline_mode = #tpu.pipeline_mode<synchronous>, transform_indices = @transform_1, window_bounds = array<i64: 128, 128>}, {pipeline_mode = #tpu.pipeline_mode<synchronous>, transform_indices = @transform_2, window_bounds = array<i64: 1, 128>}, {pipeline_mode = #tpu.pipeline_mode<synchronous>, transform_indices = @transform_3, window_bounds = array<i64: 1, 128>}, {pipeline_mode = #tpu.pipeline_mode<synchronous>, transform_indices = @transform_4, window_bounds = array<i64: 1, 128>}, {transform_indices = @transform_5, window_bounds = array<i64: 128, 256>}, {transform_indices = @transform_6, window_bounds = array<i64: 1, 256>}, {transform_indices = @transform_7, window_bounds = array<i64: 256, 256>}]} {
    %c0_i32 = arith.constant 0 : i32
    %0 = arith.cmpi eq, %arg1, %c0_i32 : i32
    %1 = arith.extui %0 : i1 to i32
    %c0_i32_0 = arith.constant 0 : i32
    %2 = arith.cmpi ne, %1, %c0_i32_0 : i32
    scf.if %2 {
      %c0_8 = arith.constant 0 : index
      %c0_9 = arith.constant 0 : index
      %11 = vector.load %arg2[%c0_8, %c0_9] : memref<256x128xbf16, #tpu.memory_space<vmem>>, vector<256x128xbf16>
      %c0_10 = arith.constant 0 : index
      %c0_11 = arith.constant 0 : index
      %12 = vector.load %arg3[%c0_10, %c0_11] : memref<128x128xbf16, #tpu.memory_space<vmem>>, vector<128x128xbf16>
      %cst_12 = arith.constant dense<0.000000e+00> : vector<256x128xf32>
      %13 = tpu.matmul %11, %12, %cst_12 {dimension_numbers = #tpu.dot_dimension_numbers<[1], [0], [0], [1], [0, 0, 1, 1], [], []>} : vector<256x128xbf16>, vector<128x128xbf16>, vector<256x128xf32> -> vector<256x128xf32>
      %c0_13 = arith.constant 0 : index
      %c0_14 = arith.constant 0 : index
      %14 = vector.load %arg4[%c0_13, %c0_14] : memref<1x128xf32, #tpu.memory_space<vmem>>, vector<1x128xf32>
      %15 = vector.broadcast %14 : vector<1x128xf32> to vector<256x128xf32>
      %16 = arith.addf %13, %15 : vector<256x128xf32>
      %cst_15 = arith.constant 0.000000e+00 : f32
      %17 = vector.broadcast %cst_15 : f32 to vector<256x128xf32>
      %18 = arith.maximumf %16, %17 : vector<256x128xf32>
      %cst_16 = arith.constant dense<0.000000e+00> : vector<256xf32>
      %19 = vector.multi_reduction <add>, %18, %cst_16 [1] : vector<256x128xf32> to vector<256xf32>
      %20 = vector.shape_cast %19 : vector<256xf32> to vector<256x1xf32>
      %cst_17 = arith.constant 1.280000e+02 : f32
      %21 = vector.broadcast %cst_17 : f32 to vector<256x1xf32>
      %22 = arith.divf %20, %21 : vector<256x1xf32>
      %23 = vector.broadcast %22 : vector<256x1xf32> to vector<256x128xf32>
      %24 = arith.subf %18, %23 : vector<256x128xf32>
      %25 = arith.mulf %24, %24 : vector<256x128xf32>
      %cst_18 = arith.constant dense<0.000000e+00> : vector<256xf32>
      %26 = vector.multi_reduction <add>, %25, %cst_18 [1] : vector<256x128xf32> to vector<256xf32>
      %27 = vector.shape_cast %26 : vector<256xf32> to vector<256x1xf32>
      %cst_19 = arith.constant 1.280000e+02 : f32
      %28 = vector.broadcast %cst_19 : f32 to vector<256x1xf32>
      %29 = arith.divf %27, %28 : vector<256x1xf32>
      %30 = vector.broadcast %22 : vector<256x1xf32> to vector<256x128xf32>
      %31 = arith.subf %18, %30 : vector<256x128xf32>
      %cst_20 = arith.constant 9.99999997E-7 : f32
      %32 = vector.broadcast %cst_20 : f32 to vector<256x1xf32>
      %33 = arith.addf %29, %32 : vector<256x1xf32>
      %34 = math.rsqrt %33 : vector<256x1xf32>
      %35 = vector.broadcast %34 : vector<256x1xf32> to vector<256x128xf32>
      %36 = arith.mulf %31, %35 : vector<256x128xf32>
      %c0_21 = arith.constant 0 : index
      %c0_22 = arith.constant 0 : index
      %37 = vector.load %arg5[%c0_21, %c0_22] : memref<1x128xf32, #tpu.memory_space<vmem>>, vector<1x128xf32>
      %38 = vector.broadcast %37 : vector<1x128xf32> to vector<256x128xf32>
      %39 = arith.mulf %36, %38 : vector<256x128xf32>
      %c0_23 = arith.constant 0 : index
      %c0_24 = arith.constant 0 : index
      %40 = vector.load %arg6[%c0_23, %c0_24] : memref<1x128xf32, #tpu.memory_space<vmem>>, vector<1x128xf32>
      %41 = vector.broadcast %40 : vector<1x128xf32> to vector<256x128xf32>
      %42 = arith.addf %39, %41 : vector<256x128xf32>
      %43 = arith.truncf %42 : vector<256x128xf32> to vector<256x128xbf16>
      %c0_25 = arith.constant 0 : index
      %c0_26 = arith.constant 0 : index
      %44 = vector.load %arg10[%c0_25, %c0_26] : memref<256x128xbf16, #tpu.memory_space<vmem>>, vector<256x128xbf16>
      tpu.vector_store %arg10[%c0_25, %c0_26], %43 {strides = array<i32>} : memref<256x128xbf16, #tpu.memory_space<vmem>>, vector<256x128xbf16>,
    } else {
    }
    %c0 = arith.constant 0 : index
    %c0_1 = arith.constant 0 : index
    %3 = vector.load %arg10[%c0, %c0_1] : memref<256x128xbf16, #tpu.memory_space<vmem>>, vector<256x128xbf16>
    %c0_2 = arith.constant 0 : index
    %c0_3 = arith.constant 0 : index
    %4 = vector.load %arg7[%c0_2, %c0_3] : memref<128x256xbf16, #tpu.memory_space<vmem>>, vector<128x256xbf16>
    %cst = arith.constant dense<0.000000e+00> : vector<256x256xf32>
    %5 = tpu.matmul %3, %4, %cst {dimension_numbers = #tpu.dot_dimension_numbers<[1], [0], [0], [1], [0, 0, 1, 1], [], []>} : vector<256x128xbf16>, vector<128x256xbf16>, vector<256x256xf32> -> vector<256x256xf32>
    %c0_4 = arith.constant 0 : index
    %c0_5 = arith.constant 0 : index
    %6 = vector.load %arg8[%c0_4, %c0_5] : memref<1x256xf32, #tpu.memory_space<vmem>>, vector<1x256xf32>
    %7 = vector.broadcast %6 : vector<1x256xf32> to vector<256x256xf32>
    %8 = arith.addf %5, %7 : vector<256x256xf32>
    %9 = arith.truncf %8 : vector<256x256xf32> to vector<256x256xbf16>
    %c0_6 = arith.constant 0 : index
    %c0_7 = arith.constant 0 : index
    %10 = vector.load %arg9[%c0_6, %c0_7] : memref<256x256xbf16, #tpu.memory_space<vmem>>, vector<256x256xbf16>
    tpu.vector_store %arg9[%c0_6, %c0_7], %9 {strides = array<i32>} : memref<256x256xbf16, #tpu.memory_space<vmem>>, vector<256x256xbf16>,
    return
  }
  func.func @transform_0(%arg0: i32, %arg1: i32) -> (i32, i32) {
    %c0_i32 = arith.constant 0 : i32
    %c0_i32_0 = arith.constant 0 : i32
    return %arg0, %c0_i32 : i32, i32
  }
  func.func @transform_1(%arg0: i32, %arg1: i32) -> (i32, i32) {
    %c0_i32 = arith.constant 0 : i32
    %c0_i32_0 = arith.constant 0 : i32
    %c0_i32_1 = arith.constant 0 : i32
    return %c0_i32, %c0_i32_0 : i32, i32
  }
  func.func @transform_2(%arg0: i32, %arg1: i32) -> (i32, i32) {
    %c0_i32 = arith.constant 0 : i32
    %c0_i32_0 = arith.constant 0 : i32
    %c0_i32_1 = arith.constant 0 : i32
    return %c0_i32, %c0_i32_0 : i32, i32
  }
  func.func @transform_3(%arg0: i32, %arg1: i32) -> (i32, i32) {
    %c0_i32 = arith.constant 0 : i32
    %c0_i32_0 = arith.constant 0 : i32
    %c0_i32_1 = arith.constant 0 : i32
    return %c0_i32, %c0_i32_0 : i32, i32
  }
  func.func @transform_4(%arg0: i32, %arg1: i32) -> (i32, i32) {
    %c0_i32 = arith.constant 0 : i32
    %c0_i32_0 = arith.constant 0 : i32
    %c0_i32_1 = arith.constant 0 : i32
    return %c0_i32, %c0_i32_0 : i32, i32
  }
  func.func @transform_5(%arg0: i32, %arg1: i32) -> (i32, i32) {
    %c0_i32 = arith.constant 0 : i32
    %c0_i32_0 = arith.constant 0 : i32
    return %c0_i32, %arg1 : i32, i32
  }
  func.func @transform_6(%arg0: i32, %arg1: i32) -> (i32, i32) {
    %c0_i32 = arith.constant 0 : i32
    %c0_i32_0 = arith.constant 0 : i32
    return %c0_i32, %arg1 : i32, i32
  }
  func.func @transform_7(%arg0: i32, %arg1: i32) -> (i32, i32) {
    %c0_i32 = arith.constant 0 : i32
    return %arg0, %arg1 : i32, i32
  }
}

</mosaic_0001>

<llo_original>
// kernel: tpu_custom_call.1
$region0: #{tpu_custom_call.1}
  #allocation0 [shape = 'u32[]', space=smem, size = 0x4, offset = 0x4, fixed_abs, tag = 'smem constant byte address 0x4 - core index']
  #allocation1 [shape = 'u32[144,128]{1,0:T(1,128)}', space=vmem, size = 0x12000, scoped, tag = 'internal scratch']
  #allocation2 [shape = 'bf16[256,128]{1,0:T(8,128)(2,1)}', space=vmem, size = 0x10000, scoped, tag = 'scratch operand']
  %s0 = inlined_call_operand.hbm [shape: bf16[256,128], index: 0, kind: input, shape index: {}]
  %s1 = inlined_call_operand.hbm [shape: bf16[128,128], index: 1, kind: input, shape index: {}]
  %s2 = inlined_call_operand.vmem [shape: f32[1,128], index: 2, kind: input, shape index: {}]
  %s3 = inlined_call_operand.vmem [shape: f32[1,128], index: 3, kind: input, shape index: {}]
  %s4 = inlined_call_operand.vmem [shape: f32[1,128], index: 4, kind: input, shape index: {}]
  %s5 = inlined_call_operand.hbm [shape: bf16[128,256], index: 5, kind: input, shape index: {}]
  %s6 = inlined_call_operand.vmem [shape: f32[1,256], index: 6, kind: input, shape index: {}]
  %s7 = inlined_call_operand.hbm [shape: bf16[256,256], index: 7, kind: output, shape index: {}]
  %s8 = sld [smem:[#allocation0]]
  $region54: #{tpu_custom_call.1} parent=0
    _
  %s10 = ssub.s32 1, %s8
  %s11 = scalar_select 0, %s10, %s8
  $region1: #{tpu_custom_call.1} parent=0
    #allocation3 [shape = 'u8[65536]{0}', space=vmem, size = 0x10000, scoped, tag = 'input window, operand 0, single buffered']
    #allocation4 [shape = 's32[1]{0}', space=sflag, size = 0x4, scoped, tag = 'scoped memory for tpu_custom_call.1']
    #allocation5 [shape = 's32[1]{0}', space=sflag, size = 0x4, scoped, tag = 'scoped memory for tpu_custom_call.1']
    #allocation6 [shape = 'u8[32768]{0}', space=vmem, size = 0x8000, scoped, tag = 'input window, operand 1, single buffered']
    #allocation7 [shape = 's32[1]{0}', space=sflag, size = 0x4, scoped, tag = 'scoped memory for tpu_custom_call.1']
    #allocation8 [shape = 'u8[65536]{0}', space=vmem, size = 0x10000, scoped, tag = 'input window, operand 5, single buffered']
    #allocation9 [shape = 'u8[131072]{0}', space=vmem, size = 0x20000, scoped, tag = 'output window, operand 0, single buffered']
    %12 = vsyncpa [#allocation4], 0
    %13 = vsyncpa [#allocation7], 0
    %14 = vsyncpa [#allocation5], 0
    // Predicated region
    $region2: #{tpu_custom_call.1} parent=1 // pred_check
      _
    $region3: #{tpu_custom_call.1} parent=1 // pred_check_branch
      %16 = sbr.rel (0) target = $region5
    $region4: #{tpu_custom_call.1} parent=1 // pred_region
      %s18 = ssub.s32 2048, 2048
      %19 = vsyncadd [#allocation4], %s18
      %s20 = sshll.u32 [#allocation3], 4
      %s21 = int_to_ptr.vmem [resolvable:$true] %s20
      %26 = dma.hbm_to_vmem [thread:$0]  %s0, 2048, %s21, [#allocation4], 64, 64, 4
    $region5: #{tpu_custom_call.1} parent=1 // pred_fallthru
      _
    // Predicated region
    $region6: #{tpu_custom_call.1} parent=1 // pred_check
      _
    $region7: #{tpu_custom_call.1} parent=1 // pred_check_branch
      %28 = sbr.rel (0) target = $region9
    $region8: #{tpu_custom_call.1} parent=1 // pred_region
      %s30 = ssub.s32 1024, 1024
      %31 = vsyncadd [#allocation7], %s30
      %s32 = sshll.u32 [#allocation6], 4
      %s33 = int_to_ptr.vmem [resolvable:$true] %s32
      %38 = dma.hbm_to_vmem [thread:$0]  %s1, 1024, %s33, [#allocation7], 64, 64, 4
    $region9: #{tpu_custom_call.1} parent=1 // pred_fallthru
      _
    // Predicated region
    $region10: #{tpu_custom_call.1} parent=1 // pred_check
      _
    $region11: #{tpu_custom_call.1} parent=1 // pred_check_branch
      %40 = sbr.rel (0) target = $region13
    $region12: #{tpu_custom_call.1} parent=1 // pred_region
      _
    $region13: #{tpu_custom_call.1} parent=1 // pred_fallthru
      _
    // Predicated region
    $region14: #{tpu_custom_call.1} parent=1 // pred_check
      _
    $region15: #{tpu_custom_call.1} parent=1 // pred_check_branch
      %42 = sbr.rel (0) target = $region17
    $region16: #{tpu_custom_call.1} parent=1 // pred_region
      _
    $region17: #{tpu_custom_call.1} parent=1 // pred_fallthru
      _
    // Predicated region
    $region18: #{tpu_custom_call.1} parent=1 // pred_check
      _
    $region19: #{tpu_custom_call.1} parent=1 // pred_check_branch
      %44 = sbr.rel (0) target = $region21
    $region20: #{tpu_custom_call.1} parent=1 // pred_region
      _
    $region21: #{tpu_custom_call.1} parent=1 // pred_fallthru
      _
    // Predicated region
    $region22: #{tpu_custom_call.1} parent=1 // pred_check
      _
    $region23: #{tpu_custom_call.1} parent=1 // pred_check_branch
      %46 = sbr.rel (0) target = $region25
    $region24: #{tpu_custom_call.1} parent=1 // pred_region
      %s48 = ssub.s32 2048, 2048
      %49 = vsyncadd [#allocation7], %s48
      %s50 = sshll.u32 [#allocation8], 4
      %s51 = int_to_ptr.vmem [resolvable:$true] %s50
      %56 = dma.hbm_to_vmem [thread:$0]  %s5, 2048, %s51, [#allocation7], 128, 128, 8
    $region25: #{tpu_custom_call.1} parent=1 // pred_fallthru
      _
    // Predicated region
    $region26: #{tpu_custom_call.1} parent=1 // pred_check
      _
    $region27: #{tpu_custom_call.1} parent=1 // pred_check_branch
      %58 = sbr.rel (0) target = $region29
    $region28: #{tpu_custom_call.1} parent=1 // pred_region
      _
    $region29: #{tpu_custom_call.1} parent=1 // pred_fallthru
      _
    // Predicated region
    $region30: #{tpu_custom_call.1} parent=1 // pred_check
      _
    $region31: #{tpu_custom_call.1} parent=1 // pred_check_branch
      %60 = sbr.rel (0) target = $region33
    $region32: #{tpu_custom_call.1} parent=1 // pred_region
      %61 = dma.done [#allocation4], 2048
    $region33: #{tpu_custom_call.1} parent=1 // pred_fallthru
      _
    // Predicated region
    $region34: #{tpu_custom_call.1} parent=1 // pred_check
      _
    $region35: #{tpu_custom_call.1} parent=1 // pred_check_branch
      %63 = sbr.rel (0) target = $region37
    $region36: #{tpu_custom_call.1} parent=1 // pred_region
      %64 = dma.done [#allocation7], 1024
    $region37: #{tpu_custom_call.1} parent=1 // pred_fallthru
      _
    // Predicated region
    $region38: #{tpu_custom_call.1} parent=1 // pred_check
      _
    $region39: #{tpu_custom_call.1} parent=1 // pred_check_branch
      %66 = sbr.rel (0) target = $region41
    $region40: #{tpu_custom_call.1} parent=1 // pred_region
      %67 = dma.done [#allocation7], 2048
    $region41: #{tpu_custom_call.1} parent=1 // pred_fallthru
      _
    %p69 = scmp.eq.s32.totalorder 0, 0
    // Predicated region
    $region42: #{tpu_custom_call.1} parent=1 // pred_check
      %p70 = pneg %p69
    $region43: #{tpu_custom_call.1} parent=1 // pred_check_branch
      %72 = sbr.rel (%p70) target = $region45
    $region44: #{tpu_custom_call.1} parent=1 // pred_region
      %v73 = vld [vmem:[#allocation3] sm:$0xf]
      %v74 = vld [vmem:[#allocation3 + $0x4] sm:$0xf]
      %v75 = vld [vmem:[#allocation3 + $0x8] sm:$0xf]
      %v76 = vld [vmem:[#allocation3 + $0xc] sm:$0xf]
      %v77 = vld [vmem:[#allocation3 + $0x10] sm:$0xf]
      %v78 = vld [vmem:[#allocation3 + $0x14] sm:$0xf]
      %v79 = vld [vmem:[#allocation3 + $0x18] sm:$0xf]
      %v80 = vld [vmem:[#allocation3 + $0x1c] sm:$0xf]
      %v81 = vld [vmem:[#allocation3 + $0x20] sm:$0xf]
      %v82 = vld [vmem:[#allocation3 + $0x24] sm:$0xf]
      %v83 = vld [vmem:[#allocation3 + $0x28] sm:$0xf]
      %v84 = vld [vmem:[#allocation3 + $0x2c] sm:$0xf]
      %v85 = vld [vmem:[#allocation3 + $0x30] sm:$0xf]
      %v86 = vld [vmem:[#allocation3 + $0x34] sm:$0xf]
      %v87 = vld [vmem:[#allocation3 + $0x38] sm:$0xf]
      %v88 = vld [vmem:[#allocation3 + $0x3c] sm:$0xf]
      %v89 = vld [vmem:[#allocation3 + $0x40] sm:$0xf]
      %v90 = vld [vmem:[#allocation3 + $0x44] sm:$0xf]
      %v91 = vld [vmem:[#allocation3 + $0x48] sm:$0xf]
      %v92 = vld [vmem:[#allocation3 + $0x4c] sm:$0xf]
      %v93 = vld [vmem:[#allocation3 + $0x50] sm:$0xf]
      %v94 = vld [vmem:[#allocation3 + $0x54] sm:$0xf]
      %v95 = vld [vmem:[#allocation3 + $0x58] sm:$0xf]
      %v96 = vld [vmem:[#allocation3 + $0x5c] sm:$0xf]
      %v97 = vld [vmem:[#allocation3 + $0x60] sm:$0xf]
      %v98 = vld [vmem:[#allocation3 + $0x64] sm:$0xf]
      %v99 = vld [vmem:[#allocation3 + $0x68] sm:$0xf]
      %v100 = vld [vmem:[#allocation3 + $0x6c] sm:$0xf]
      %v101 = vld [vmem:[#allocation3 + $0x70] sm:$0xf]
      %v102 = vld [vmem:[#allocation3 + $0x74] sm:$0xf]
      %v103 = vld [vmem:[#allocation3 + $0x78] sm:$0xf]
      %v104 = vld [vmem:[#allocation3 + $0x7c] sm:$0xf]
      %v105 = vld [vmem:[#allocation6] sm:$0xf]
      %v106 = vld [vmem:[#allocation6 + $0x4] sm:$0xf]
      %v107 = vld [vmem:[#allocation6 + $0x8] sm:$0xf]
      %v108 = vld [vmem:[#allocation6 + $0xc] sm:$0xf]
      %v109 = vld [vmem:[#allocation6 + $0x10] sm:$0xf]
      %v110 = vld [vmem:[#allocation6 + $0x14] sm:$0xf]
      %v111 = vld [vmem:[#allocation6 + $0x18] sm:$0xf]
      %v112 = vld [vmem:[#allocation6 + $0x1c] sm:$0xf]
      %v113 = vld [vmem:[#allocation6 + $0x20] sm:$0xf]
      %v114 = vld [vmem:[#allocation6 + $0x24] sm:$0xf]
      %v115 = vld [vmem:[#allocation6 + $0x28] sm:$0xf]
      %v116 = vld [vmem:[#allocation6 + $0x2c] sm:$0xf]
      %v117 = vld [vmem:[#allocation6 + $0x30] sm:$0xf]
      %v118 = vld [vmem:[#allocation6 + $0x34] sm:$0xf]
      %v119 = vld [vmem:[#allocation6 + $0x38] sm:$0xf]
      %v120 = vld [vmem:[#allocation6 + $0x3c] sm:$0xf]
      %v121 = vld [vmem:[%s2] sm:$0x1]
      %v123 = vlaneseq
      %v124 = vshrl.u32 %v123, 7
      %v125 = vsub.s32 0, %v124
      %v126 = vrot.slane %v121, %v125
      %v160 = vunpack.c.l.b16 %v73
      %v161 = vunpack.c.l.b16 %v74
      %v162 = vunpack.c.l.b16 %v75
      %v163 = vunpack.c.l.b16 %v76
      %v164 = vunpack.c.l.b16 %v77
      %v165 = vunpack.c.l.b16 %v78
      %v166 = vunpack.c.l.b16 %v79
      %v167 = vunpack.c.l.b16 %v80
      %v168 = vunpack.c.l.b16 %v81
      %v169 = vunpack.c.l.b16 %v82
      %v170 = vunpack.c.l.b16 %v83
      %v171 = vunpack.c.l.b16 %v84
      %v172 = vunpack.c.l.b16 %v85
      %v173 = vunpack.c.l.b16 %v86
      %v174 = vunpack.c.l.b16 %v87
      %v175 = vunpack.c.l.b16 %v88
      %v176 = vunpack.c.l.b16 %v89
      %v177 = vunpack.c.l.b16 %v90
      %v178 = vunpack.c.l.b16 %v91
      %v179 = vunpack.c.l.b16 %v92
      %v180 = vunpack.c.l.b16 %v93
      %v181 = vunpack.c.l.b16 %v94
      %v182 = vunpack.c.l.b16 %v95
      %v183 = vunpack.c.l.b16 %v96
      %v184 = vunpack.c.l.b16 %v97
      %v185 = vunpack.c.l.b16 %v98
      %v186 = vunpack.c.l.b16 %v99
      %v187 = vunpack.c.l.b16 %v100
      %v188 = vunpack.c.l.b16 %v101
      %v189 = vunpack.c.l.b16 %v102
      %v190 = vunpack.c.l.b16 %v103
      %v191 = vunpack.c.l.b16 %v104
      %v192 = vpack.c.b16 %v161, %v160
      %v193 = vpack.c.b16 %v163, %v162
      %v194 = vpack.c.b16 %v165, %v164
      %v195 = vpack.c.b16 %v167, %v166
      %v196 = vpack.c.b16 %v169, %v168
      %v197 = vpack.c.b16 %v171, %v170
      %v198 = vpack.c.b16 %v173, %v172
      %v199 = vpack.c.b16 %v175, %v174
      %v200 = vpack.c.b16 %v177, %v176
      %v201 = vpack.c.b16 %v179, %v178
      %v202 = vpack.c.b16 %v181, %v180
      %v203 = vpack.c.b16 %v183, %v182
      %v204 = vpack.c.b16 %v185, %v184
      %v205 = vpack.c.b16 %v187, %v186
      %v206 = vpack.c.b16 %v189, %v188
      %v207 = vpack.c.b16 %v191, %v190
      %v240 = vunpack.c.l.b16 %v105
      %v241 = vunpack.c.l.b16 %v106
      %v242 = vunpack.c.l.b16 %v107
      %v243 = vunpack.c.l.b16 %v108
      %v244 = vunpack.c.l.b16 %v109
      %v245 = vunpack.c.l.b16 %v110
      %v246 = vunpack.c.l.b16 %v111
      %v247 = vunpack.c.l.b16 %v112
      %v248 = vunpack.c.l.b16 %v113
      %v249 = vunpack.c.l.b16 %v114
      %v250 = vunpack.c.l.b16 %v115
      %v251 = vunpack.c.l.b16 %v116
      %v252 = vunpack.c.l.b16 %v117
      %v253 = vunpack.c.l.b16 %v118
      %v254 = vunpack.c.l.b16 %v119
      %v255 = vunpack.c.l.b16 %v120
      %v256 = vpack.c.b16 %v241, %v240
      %v257 = vpack.c.b16 %v243, %v242
      %v258 = vpack.c.b16 %v245, %v244
      %v259 = vpack.c.b16 %v247, %v246
      %v260 = vpack.c.b16 %v249, %v248
      %v261 = vpack.c.b16 %v251, %v250
      %v262 = vpack.c.b16 %v253, %v252
      %v263 = vpack.c.b16 %v255, %v254
      %272 = vmatprep.subr.bf16.mxu0 0
      %273 = vmatpush1.bf16.msra.mxu0 %v263
      %274 = vmatprep.subr.bf16.mxu0 0
      %275 = vmatpush1.bf16.msra.mxu0 %v262
      %276 = vmatprep.subr.bf16.mxu0 0
      %277 = vmatpush1.bf16.msra.mxu0 %v261
      %278 = vmatprep.subr.bf16.mxu0 0
      %279 = vmatpush1.bf16.msra.mxu0 %v260
      %280 = vmatprep.subr.bf16.mxu0 0
      %281 = vmatpush1.bf16.msra.mxu0 %v259
      %282 = vmatprep.subr.bf16.mxu0 0
      %283 = vmatpush1.bf16.msra.mxu0 %v258
      %284 = vmatprep.subr.bf16.mxu0 0
      %285 = vmatpush1.bf16.msra.mxu0 %v257
      %286 = vmatprep.subr.bf16.mxu0 0
      %287 = vmatpush1.bf16.msra.mxu0 %v256
      %288 = vmatprep.subr.bf16.mxu0 0
      %289 = vmatpush2.bf16.msra.mxu0 0
      %290 = vmatprep.subr.bf16.mxu0 0
      %291 = vmatpush2.bf16.msra.mxu0 0
      %292 = vmatprep.subr.bf16.mxu0 0
      %293 = vmatpush2.bf16.msra.mxu0 0
      %294 = vmatprep.subr.bf16.mxu0 0
      %295 = vmatpush2.bf16.msra.mxu0 0
      %296 = vmatprep.subr.bf16.mxu0 0
      %297 = vmatpush2.bf16.msra.mxu0 0
      %298 = vmatprep.subr.bf16.mxu0 0
      %299 = vmatpush2.bf16.msra.mxu0 0
      %300 = vmatprep.subr.bf16.mxu0 0
      %301 = vmatpush2.bf16.msra.mxu0 0
      %302 = vmatprep.subr.bf16.mxu0 0
      %303 = vmatpush2.bf16.msra.mxu0 0
      %304 = vmatprep.mubr.bf16.mxu0 0
      %305 = vmatmul.mubr.bf16.gmra.mxu0 %v192
      %v306 = vpop.f32.mrf.mxu0
      %v307 = vadd.f32 %v126, %v306
      %v308 = vpop.f32.mrf.mxu0
      %v309 = vpop.f32.mrf.mxu0
      %v310 = vadd.f32 %v126, %v309
      %v311 = vpop.f32.mrf.mxu0
      %312 = vmatprep.mubr.bf16.mxu0 0
      %313 = vmatmul.mubr.bf16.gmra.mxu0 %v193
      %v314 = vpop.f32.mrf.mxu0
      %v315 = vadd.f32 %v126, %v314
      %v316 = vpop.f32.mrf.mxu0
      %v317 = vpop.f32.mrf.mxu0
      %v318 = vadd.f32 %v126, %v317
      %v319 = vpop.f32.mrf.mxu0
      %320 = vmatprep.mubr.bf16.mxu0 0
      %321 = vmatmul.mubr.bf16.gmra.mxu0 %v194
      %v322 = vpop.f32.mrf.mxu0
      %v323 = vadd.f32 %v126, %v322
      %v324 = vpop.f32.mrf.mxu0
      %v325 = vpop.f32.mrf.mxu0
      %v326 = vadd.f32 %v126, %v325
      %v327 = vpop.f32.mrf.mxu0
      %328 = vmatprep.mubr.bf16.mxu0 0
      %329 = vmatmul.mubr.bf16.gmra.mxu0 %v195
      %v330 = vpop.f32.mrf.mxu0
      %v331 = vadd.f32 %v126, %v330
      %v332 = vpop.f32.mrf.mxu0
      %v333 = vpop.f32.mrf.mxu0
      %v334 = vadd.f32 %v126, %v333
      %v335 = vpop.f32.mrf.mxu0
      %336 = vmatprep.mubr.bf16.mxu0 0
      %337 = vmatmul.mubr.bf16.gmra.mxu0 %v196
      %v338 = vpop.f32.mrf.mxu0
      %v339 = vadd.f32 %v126, %v338
      %v340 = vpop.f32.mrf.mxu0
      %v341 = vpop.f32.mrf.mxu0
      %v342 = vadd.f32 %v126, %v341
      %v343 = vpop.f32.mrf.mxu0
      %344 = vmatprep.mubr.bf16.mxu0 0
      %345 = vmatmul.mubr.bf16.gmra.mxu0 %v197
      %v346 = vpop.f32.mrf.mxu0
      %v347 = vadd.f32 %v126, %v346
      %v348 = vpop.f32.mrf.mxu0
      %v349 = vpop.f32.mrf.mxu0
      %v350 = vadd.f32 %v126, %v349
      %v351 = vpop.f32.mrf.mxu0
      %352 = vmatprep.mubr.bf16.mxu0 0
      %353 = vmatmul.mubr.bf16.gmra.mxu0 %v198
      %v354 = vpop.f32.mrf.mxu0
      %v355 = vadd.f32 %v126, %v354
      %v356 = vpop.f32.mrf.mxu0
      %v357 = vpop.f32.mrf.mxu0
      %v358 = vadd.f32 %v126, %v357
      %v359 = vpop.f32.mrf.mxu0
      %360 = vmatprep.mubr.bf16.mxu0 0
      %361 = vmatmul.mubr.bf16.gmra.mxu0 %v199
      %v362 = vpop.f32.mrf.mxu0
      %v363 = vadd.f32 %v126, %v362
      %v364 = vpop.f32.mrf.mxu0
      %v365 = vpop.f32.mrf.mxu0
      %v366 = vadd.f32 %v126, %v365
      %v367 = vpop.f32.mrf.mxu0
      %368 = vmatprep.mubr.bf16.mxu0 0
      %369 = vmatmul.mubr.bf16.gmra.mxu0 %v200
      %v370 = vpop.f32.mrf.mxu0
      %v371 = vadd.f32 %v126, %v370
      %v372 = vpop.f32.mrf.mxu0
      %v373 = vpop.f32.mrf.mxu0
      %v374 = vadd.f32 %v126, %v373
      %v375 = vpop.f32.mrf.mxu0
      %376 = vmatprep.mubr.bf16.mxu0 0
      %377 = vmatmul.mubr.bf16.gmra.mxu0 %v201
      %v378 = vpop.f32.mrf.mxu0
      %v379 = vadd.f32 %v126, %v378
      %v380 = vpop.f32.mrf.mxu0
      %v381 = vpop.f32.mrf.mxu0
      %v382 = vadd.f32 %v126, %v381
      %v383 = vpop.f32.mrf.mxu0
      %384 = vmatprep.mubr.bf16.mxu0 0
      %385 = vmatmul.mubr.bf16.gmra.mxu0 %v202
      %v386 = vpop.f32.mrf.mxu0
      %v387 = vadd.f32 %v126, %v386
      %v388 = vpop.f32.mrf.mxu0
      %v389 = vpop.f32.mrf.mxu0
      %v390 = vadd.f32 %v126, %v389
      %v391 = vpop.f32.mrf.mxu0
      %392 = vmatprep.mubr.bf16.mxu0 0
      %393 = vmatmul.mubr.bf16.gmra.mxu0 %v203
      %v394 = vpop.f32.mrf.mxu0
      %v395 = vadd.f32 %v126, %v394
      %v396 = vpop.f32.mrf.mxu0
      %v397 = vpop.f32.mrf.mxu0
      %v398 = vadd.f32 %v126, %v397
      %v399 = vpop.f32.mrf.mxu0
      %400 = vmatprep.mubr.bf16.mxu0 0
      %401 = vmatmul.mubr.bf16.gmra.mxu0 %v204
      %v402 = vpop.f32.mrf.mxu0
      %v403 = vadd.f32 %v126, %v402
      %v404 = vpop.f32.mrf.mxu0
      %v405 = vpop.f32.mrf.mxu0
      %v406 = vadd.f32 %v126, %v405
      %v407 = vpop.f32.mrf.mxu0
      %408 = vmatprep.mubr.bf16.mxu0 0
      %409 = vmatmul.mubr.bf16.gmra.mxu0 %v205
      %v410 = vpop.f32.mrf.mxu0
      %v411 = vadd.f32 %v126, %v410
      %v412 = vpop.f32.mrf.mxu0
      %v413 = vpop.f32.mrf.mxu0
      %v414 = vadd.f32 %v126, %v413
      %v415 = vpop.f32.mrf.mxu0
      %416 = vmatprep.mubr.bf16.mxu0 0
      %417 = vmatmul.mubr.bf16.gmra.mxu0 %v206
      %v418 = vpop.f32.mrf.mxu0
      %v419 = vadd.f32 %v126, %v418
      %v420 = vpop.f32.mrf.mxu0
      %v421 = vpop.f32.mrf.mxu0
      %v422 = vadd.f32 %v126, %v421
      %v423 = vpop.f32.mrf.mxu0
      %424 = vmatprep.mubr.bf16.mxu0 0
      %425 = vmatmul.mubr.bf16.gmra.mxu0 %v207
      %v426 = vpop.f32.mrf.mxu0
      %v427 = vadd.f32 %v126, %v426
      %v428 = vpop.f32.mrf.mxu0
      %v429 = vpop.f32.mrf.mxu0
      %v430 = vadd.f32 %v126, %v429
      %v431 = vpop.f32.mrf.mxu0
      %432 = vdwg.mxu0
      %v433 = vmax.f32 %v307, 0.0
      %v434 = vmax.f32 %v310, 0.0
      %v435 = vmax.f32 %v315, 0.0
      %v436 = vmax.f32 %v318, 0.0
      %v437 = vmax.f32 %v323, 0.0
      %v438 = vmax.f32 %v326, 0.0
      %v439 = vmax.f32 %v331, 0.0
      %v440 = vmax.f32 %v334, 0.0
      %v441 = vmax.f32 %v339, 0.0
      %v442 = vmax.f32 %v342, 0.0
      %v443 = vmax.f32 %v347, 0.0
      %v444 = vmax.f32 %v350, 0.0
      %v445 = vmax.f32 %v355, 0.0
      %v446 = vmax.f32 %v358, 0.0
      %v447 = vmax.f32 %v363, 0.0
      %v448 = vmax.f32 %v366, 0.0
      %v449 = vmax.f32 %v371, 0.0
      %v450 = vmax.f32 %v374, 0.0
      %v451 = vmax.f32 %v379, 0.0
      %v452 = vmax.f32 %v382, 0.0
      %v453 = vmax.f32 %v387, 0.0
      %v454 = vmax.f32 %v390, 0.0
      %v455 = vmax.f32 %v395, 0.0
      %v456 = vmax.f32 %v398, 0.0
      %v457 = vmax.f32 %v403, 0.0
      %v458 = vmax.f32 %v406, 0.0
      %v459 = vmax.f32 %v411, 0.0
      %v460 = vmax.f32 %v414, 0.0
      %v461 = vmax.f32 %v419, 0.0
      %v462 = vmax.f32 %v422, 0.0
      %v463 = vmax.f32 %v427, 0.0
      %v464 = vmax.f32 %v430, 0.0
      %465 = vadd.xlane.f32.xlu0 %v433
      %v466 = vpop.xlane.xlu0 %465
      %467 = vadd.xlane.f32.xlu0 %v434
      %v468 = vpop.xlane.xlu0 %467
      %469 = vadd.xlane.f32.xlu0 %v435
      %v470 = vpop.xlane.xlu0 %469
      %471 = vadd.xlane.f32.xlu0 %v436
      %v472 = vpop.xlane.xlu0 %471
      %473 = vadd.xlane.f32.xlu0 %v437
      %v474 = vpop.xlane.xlu0 %473
      %475 = vadd.xlane.f32.xlu0 %v438
      %v476 = vpop.xlane.xlu0 %475
      %477 = vadd.xlane.f32.xlu0 %v439
      %v478 = vpop.xlane.xlu0 %477
      %479 = vadd.xlane.f32.xlu0 %v440
      %v480 = vpop.xlane.xlu0 %479
      %481 = vadd.xlane.f32.xlu0 %v441
      %v482 = vpop.xlane.xlu0 %481
      %483 = vadd.xlane.f32.xlu0 %v442
      %v484 = vpop.xlane.xlu0 %483
      %485 = vadd.xlane.f32.xlu0 %v443
      %v486 = vpop.xlane.xlu0 %485
      %487 = vadd.xlane.f32.xlu0 %v444
      %v488 = vpop.xlane.xlu0 %487
      %489 = vadd.xlane.f32.xlu0 %v445
      %v490 = vpop.xlane.xlu0 %489
      %491 = vadd.xlane.f32.xlu0 %v446
      %v492 = vpop.xlane.xlu0 %491
      %493 = vadd.xlane.f32.xlu0 %v447
      %v494 = vpop.xlane.xlu0 %493
      %495 = vadd.xlane.f32.xlu0 %v448
      %v496 = vpop.xlane.xlu0 %495
      %497 = vadd.xlane.f32.xlu0 %v449
      %v498 = vpop.xlane.xlu0 %497
      %499 = vadd.xlane.f32.xlu0 %v450
      %v500 = vpop.xlane.xlu0 %499
      %501 = vadd.xlane.f32.xlu0 %v451
      %v502 = vpop.xlane.xlu0 %501
      %503 = vadd.xlane.f32.xlu0 %v452
      %v504 = vpop.xlane.xlu0 %503
      %505 = vadd.xlane.f32.xlu0 %v453
      %v506 = vpop.xlane.xlu0 %505
      %507 = vadd.xlane.f32.xlu0 %v454
      %v508 = vpop.xlane.xlu0 %507
      %509 = vadd.xlane.f32.xlu0 %v455
      %v510 = vpop.xlane.xlu0 %509
      %511 = vadd.xlane.f32.xlu0 %v456
      %v512 = vpop.xlane.xlu0 %511
      %513 = vadd.xlane.f32.xlu0 %v457
      %v514 = vpop.xlane.xlu0 %513
      %515 = vadd.xlane.f32.xlu0 %v458
      %v516 = vpop.xlane.xlu0 %515
      %517 = vadd.xlane.f32.xlu0 %v459
      %v518 = vpop.xlane.xlu0 %517
      %519 = vadd.xlane.f32.xlu0 %v460
      %v520 = vpop.xlane.xlu0 %519
      %521 = vadd.xlane.f32.xlu0 %v461
      %v522 = vpop.xlane.xlu0 %521
      %523 = vadd.xlane.f32.xlu0 %v462
      %v524 = vpop.xlane.xlu0 %523
      %525 = vadd.xlane.f32.xlu0 %v463
      %v526 = vpop.xlane.xlu0 %525
      %527 = vadd.xlane.f32.xlu0 %v464
      %v528 = vpop.xlane.xlu0 %527
      %v529 = vrcp.pop 128.0
      %v530 = vmul.f32 %v466, %v529
      %v531 = vmul.f32 %v468, %v529
      %v532 = vmul.f32 %v470, %v529
      %v533 = vmul.f32 %v472, %v529
      %v534 = vmul.f32 %v474, %v529
      %v535 = vmul.f32 %v476, %v529
      %v536 = vmul.f32 %v478, %v529
      %v537 = vmul.f32 %v480, %v529
      %v538 = vmul.f32 %v482, %v529
      %v539 = vmul.f32 %v484, %v529
      %v540 = vmul.f32 %v486, %v529
      %v541 = vmul.f32 %v488, %v529
      %v542 = vmul.f32 %v490, %v529
      %v543 = vmul.f32 %v492, %v529
      %v544 = vmul.f32 %v494, %v529
      %v545 = vmul.f32 %v496, %v529
      %v546 = vmul.f32 %v498, %v529
      %v547 = vmul.f32 %v500, %v529
      %v548 = vmul.f32 %v502, %v529
      %v549 = vmul.f32 %v504, %v529
      %v550 = vmul.f32 %v506, %v529
      %v551 = vmul.f32 %v508, %v529
      %v552 = vmul.f32 %v510, %v529
      %v553 = vmul.f32 %v512, %v529
      %v554 = vmul.f32 %v514, %v529
      %v555 = vmul.f32 %v516, %v529
      %v556 = vmul.f32 %v518, %v529
      %v557 = vmul.f32 %v520, %v529
      %v558 = vmul.f32 %v522, %v529
      %v559 = vmul.f32 %v524, %v529
      %v560 = vmul.f32 %v526, %v529
      %v561 = vmul.f32 %v528, %v529
      %v562 = vsub.f32 %v433, %v530
      %v563 = vsub.f32 %v434, %v531
      %v564 = vsub.f32 %v435, %v532
      %v565 = vsub.f32 %v436, %v533
      %v566 = vsub.f32 %v437, %v534
      %v567 = vsub.f32 %v438, %v535
      %v568 = vsub.f32 %v439, %v536
      %v569 = vsub.f32 %v440, %v537
      %v570 = vsub.f32 %v441, %v538
      %v571 = vsub.f32 %v442, %v539
      %v572 = vsub.f32 %v443, %v540
      %v573 = vsub.f32 %v444, %v541
      %v574 = vsub.f32 %v445, %v542
      %v575 = vsub.f32 %v446, %v543
      %v576 = vsub.f32 %v447, %v544
      %v577 = vsub.f32 %v448, %v545
      %v578 = vsub.f32 %v449, %v546
      %v579 = vsub.f32 %v450, %v547
      %v580 = vsub.f32 %v451, %v548
      %v581 = vsub.f32 %v452, %v549
      %v582 = vsub.f32 %v453, %v550
      %v583 = vsub.f32 %v454, %v551
      %v584 = vsub.f32 %v455, %v552
      %v585 = vsub.f32 %v456, %v553
      %v586 = vsub.f32 %v457, %v554
      %v587 = vsub.f32 %v458, %v555
      %v588 = vsub.f32 %v459, %v556
      %v589 = vsub.f32 %v460, %v557
      %v590 = vsub.f32 %v461, %v558
      %v591 = vsub.f32 %v462, %v559
      %v592 = vsub.f32 %v463, %v560
      %v593 = vsub.f32 %v464, %v561
      %v594 = vmul.f32 %v562, %v562
      %v595 = vmul.f32 %v563, %v563
      %v596 = vmul.f32 %v564, %v564
      %v597 = vmul.f32 %v565, %v565
      %v598 = vmul.f32 %v566, %v566
      %v599 = vmul.f32 %v567, %v567
      %v600 = vmul.f32 %v568, %v568
      %v601 = vmul.f32 %v569, %v569
      %v602 = vmul.f32 %v570, %v570
      %v603 = vmul.f32 %v571, %v571
      %v604 = vmul.f32 %v572, %v572
      %v605 = vmul.f32 %v573, %v573
      %v606 = vmul.f32 %v574, %v574
      %v607 = vmul.f32 %v575, %v575
      %v608 = vmul.f32 %v576, %v576
      %v609 = vmul.f32 %v577, %v577
      %v610 = vmul.f32 %v578, %v578
      %v611 = vmul.f32 %v579, %v579
      %v612 = vmul.f32 %v580, %v580
      %v613 = vmul.f32 %v581, %v581
      %v614 = vmul.f32 %v582, %v582
      %v615 = vmul.f32 %v583, %v583
      %v616 = vmul.f32 %v584, %v584
      %v617 = vmul.f32 %v585, %v585
      %v618 = vmul.f32 %v586, %v586
      %v619 = vmul.f32 %v587, %v587
      %v620 = vmul.f32 %v588, %v588
      %v621 = vmul.f32 %v589, %v589
      %v622 = vmul.f32 %v590, %v590
      %v623 = vmul.f32 %v591, %v591
      %v624 = vmul.f32 %v592, %v592
      %v625 = vmul.f32 %v593, %v593
      %626 = vadd.xlane.f32.xlu0 %v594
      %v627 = vpop.xlane.xlu0 %626
      %628 = vadd.xlane.f32.xlu0 %v595
      %v629 = vpop.xlane.xlu0 %628
      %630 = vadd.xlane.f32.xlu0 %v596
      %v631 = vpop.xlane.xlu0 %630
      %632 = vadd.xlane.f32.xlu0 %v597
      %v633 = vpop.xlane.xlu0 %632
      %634 = vadd.xlane.f32.xlu0 %v598
      %v635 = vpop.xlane.xlu0 %634
      %636 = vadd.xlane.f32.xlu0 %v599
      %v637 = vpop.xlane.xlu0 %636
      %638 = vadd.xlane.f32.xlu0 %v600
      %v639 = vpop.xlane.xlu0 %638
      %640 = vadd.xlane.f32.xlu0 %v601
      %v641 = vpop.xlane.xlu0 %640
      %642 = vadd.xlane.f32.xlu0 %v602
      %v643 = vpop.xlane.xlu0 %642
      %644 = vadd.xlane.f32.xlu0 %v603
      %v645 = vpop.xlane.xlu0 %644
      %646 = vadd.xlane.f32.xlu0 %v604
      %v647 = vpop.xlane.xlu0 %646
      %648 = vadd.xlane.f32.xlu0 %v605
      %v649 = vpop.xlane.xlu0 %648
      %650 = vadd.xlane.f32.xlu0 %v606
      %v651 = vpop.xlane.xlu0 %650
      %652 = vadd.xlane.f32.xlu0 %v607
      %v653 = vpop.xlane.xlu0 %652
      %654 = vadd.xlane.f32.xlu0 %v608
      %v655 = vpop.xlane.xlu0 %654
      %656 = vadd.xlane.f32.xlu0 %v609
      %v657 = vpop.xlane.xlu0 %656
      %658 = vadd.xlane.f32.xlu0 %v610
      %v659 = vpop.xlane.xlu0 %658
      %660 = vadd.xlane.f32.xlu0 %v611
      %v661 = vpop.xlane.xlu0 %660
      %662 = vadd.xlane.f32.xlu0 %v612
      %v663 = vpop.xlane.xlu0 %662
      %664 = vadd.xlane.f32.xlu0 %v613
      %v665 = vpop.xlane.xlu0 %664
      %666 = vadd.xlane.f32.xlu0 %v614
      %v667 = vpop.xlane.xlu0 %666
      %668 = vadd.xlane.f32.xlu0 %v615
      %v669 = vpop.xlane.xlu0 %668
      %670 = vadd.xlane.f32.xlu0 %v616
      %v671 = vpop.xlane.xlu0 %670
      %672 = vadd.xlane.f32.xlu0 %v617
      %v673 = vpop.xlane.xlu0 %672
      %674 = vadd.xlane.f32.xlu0 %v618
      %v675 = vpop.xlane.xlu0 %674
      %676 = vadd.xlane.f32.xlu0 %v619
      %v677 = vpop.xlane.xlu0 %676
      %678 = vadd.xlane.f32.xlu0 %v620
      %v679 = vpop.xlane.xlu0 %678
      %680 = vadd.xlane.f32.xlu0 %v621
      %v681 = vpop.xlane.xlu0 %680
      %682 = vadd.xlane.f32.xlu0 %v622
      %v683 = vpop.xlane.xlu0 %682
      %684 = vadd.xlane.f32.xlu0 %v623
      %v685 = vpop.xlane.xlu0 %684
      %686 = vadd.xlane.f32.xlu0 %v624
      %v687 = vpop.xlane.xlu0 %686
      %688 = vadd.xlane.f32.xlu0 %v625
      %v689 = vpop.xlane.xlu0 %688
      %v690 = vmul.f32 %v627, %v529
      %v691 = vmul.f32 %v629, %v529
      %v692 = vmul.f32 %v631, %v529
      %v693 = vmul.f32 %v633, %v529
      %v694 = vmul.f32 %v635, %v529
      %v695 = vmul.f32 %v637, %v529
      %v696 = vmul.f32 %v639, %v529
      %v697 = vmul.f32 %v641, %v529
      %v698 = vmul.f32 %v643, %v529
      %v699 = vmul.f32 %v645, %v529
      %v700 = vmul.f32 %v647, %v529
      %v701 = vmul.f32 %v649, %v529
      %v702 = vmul.f32 %v651, %v529
      %v703 = vmul.f32 %v653, %v529
      %v704 = vmul.f32 %v655, %v529
      %v705 = vmul.f32 %v657, %v529
      %v706 = vmul.f32 %v659, %v529
      %v707 = vmul.f32 %v661, %v529
      %v708 = vmul.f32 %v663, %v529
      %v709 = vmul.f32 %v665, %v529
      %v710 = vmul.f32 %v667, %v529
      %v711 = vmul.f32 %v669, %v529
      %v712 = vmul.f32 %v671, %v529
      %v713 = vmul.f32 %v673, %v529
      %v714 = vmul.f32 %v675, %v529
      %v715 = vmul.f32 %v677, %v529
      %v716 = vmul.f32 %v679, %v529
      %v717 = vmul.f32 %v681, %v529
      %v718 = vmul.f32 %v683, %v529
      %v719 = vmul.f32 %v685, %v529
      %v720 = vmul.f32 %v687, %v529
      %v721 = vmul.f32 %v689, %v529
      %v722 = vadd.f32 %v690, 1e-06
      %v723 = vadd.f32 %v691, 1e-06
      %v724 = vadd.f32 %v692, 1e-06
      %v725 = vadd.f32 %v693, 1e-06
      %v726 = vadd.f32 %v694, 1e-06
      %v727 = vadd.f32 %v695, 1e-06
      %v728 = vadd.f32 %v696, 1e-06
      %v729 = vadd.f32 %v697, 1e-06
      %v730 = vadd.f32 %v698, 1e-06
      %v731 = vadd.f32 %v699, 1e-06
      %v732 = vadd.f32 %v700, 1e-06
      %v733 = vadd.f32 %v701, 1e-06
      %v734 = vadd.f32 %v702, 1e-06
      %v735 = vadd.f32 %v703, 1e-06
      %v736 = vadd.f32 %v704, 1e-06
      %v737 = vadd.f32 %v705, 1e-06
      %v738 = vadd.f32 %v706, 1e-06
      %v739 = vadd.f32 %v707, 1e-06
      %v740 = vadd.f32 %v708, 1e-06
      %v741 = vadd.f32 %v709, 1e-06
      %v742 = vadd.f32 %v710, 1e-06
      %v743 = vadd.f32 %v711, 1e-06
      %v744 = vadd.f32 %v712, 1e-06
      %v745 = vadd.f32 %v713, 1e-06
      %v746 = vadd.f32 %v714, 1e-06
      %v747 = vadd.f32 %v715, 1e-06
      %v748 = vadd.f32 %v716, 1e-06
      %v749 = vadd.f32 %v717, 1e-06
      %v750 = vadd.f32 %v718, 1e-06
      %v751 = vadd.f32 %v719, 1e-06
      %v752 = vadd.f32 %v720, 1e-06
      %v753 = vadd.f32 %v721, 1e-06
      %v754 = vrsqrt.pop %v722
      %v755 = vrsqrt.pop %v723
      %v756 = vrsqrt.pop %v724
      %v757 = vrsqrt.pop %v725
      %v758 = vrsqrt.pop %v726
      %v759 = vrsqrt.pop %v727
      %v760 = vrsqrt.pop %v728
      %v761 = vrsqrt.pop %v729
      %v762 = vrsqrt.pop %v730
      %v763 = vrsqrt.pop %v731
      %v764 = vrsqrt.pop %v732
      %v765 = vrsqrt.pop %v733
      %v766 = vrsqrt.pop %v734
      %v767 = vrsqrt.pop %v735
      %v768 = vrsqrt.pop %v736
      %v769 = vrsqrt.pop %v737
      %v770 = vrsqrt.pop %v738
      %v771 = vrsqrt.pop %v739
      %v772 = vrsqrt.pop %v740
      %v773 = vrsqrt.pop %v741
      %v774 = vrsqrt.pop %v742
      %v775 = vrsqrt.pop %v743
      %v776 = vrsqrt.pop %v744
      %v777 = vrsqrt.pop %v745
      %v778 = vrsqrt.pop %v746
      %v779 = vrsqrt.pop %v747
      %v780 = vrsqrt.pop %v748
      %v781 = vrsqrt.pop %v749
      %v782 = vrsqrt.pop %v750
      %v783 = vrsqrt.pop %v751
      %v784 = vrsqrt.pop %v752
      %v785 = vrsqrt.pop %v753
      %v786 = vmul.f32 %v562, %v754
      %v787 = vmul.f32 %v563, %v755
      %v788 = vmul.f32 %v564, %v756
      %v789 = vmul.f32 %v565, %v757
      %v790 = vmul.f32 %v566, %v758
      %v791 = vmul.f32 %v567, %v759
      %v792 = vmul.f32 %v568, %v760
      %v793 = vmul.f32 %v569, %v761
      %v794 = vmul.f32 %v570, %v762
      %v795 = vmul.f32 %v571, %v763
      %v796 = vmul.f32 %v572, %v764
      %v797 = vmul.f32 %v573, %v765
      %v798 = vmul.f32 %v574, %v766
      %v799 = vmul.f32 %v575, %v767
      %v800 = vmul.f32 %v576, %v768
      %v801 = vmul.f32 %v577, %v769
      %v802 = vmul.f32 %v578, %v770
      %v803 = vmul.f32 %v579, %v771
      %v804 = vmul.f32 %v580, %v772
      %v805 = vmul.f32 %v581, %v773
      %v806 = vmul.f32 %v582, %v774
      %v807 = vmul.f32 %v583, %v775
      %v808 = vmul.f32 %v584, %v776
      %v809 = vmul.f32 %v585, %v777
      %v810 = vmul.f32 %v586, %v778
      %v811 = vmul.f32 %v587, %v779
      %v812 = vmul.f32 %v588, %v780
      %v813 = vmul.f32 %v589, %v781
      %v814 = vmul.f32 %v590, %v782
      %v815 = vmul.f32 %v591, %v783
      %v816 = vmul.f32 %v592, %v784
      %v817 = vmul.f32 %v593, %v785
      %v818 = vld [vmem:[%s3] sm:$0x1]
      %v820 = vlaneseq
      %v821 = vshrl.u32 %v820, 7
      %v822 = vsub.s32 0, %v821
      %v823 = vrot.slane %v818, %v822
      %v825 = vmul.f32 %v786, %v823
      %v826 = vmul.f32 %v787, %v823
      %v827 = vmul.f32 %v788, %v823
      %v828 = vmul.f32 %v789, %v823
      %v829 = vmul.f32 %v790, %v823
      %v830 = vmul.f32 %v791, %v823
      %v831 = vmul.f32 %v792, %v823
      %v832 = vmul.f32 %v793, %v823
      %v833 = vmul.f32 %v794, %v823
      %v834 = vmul.f32 %v795, %v823
      %v835 = vmul.f32 %v796, %v823
      %v836 = vmul.f32 %v797, %v823
      %v837 = vmul.f32 %v798, %v823
      %v838 = vmul.f32 %v799, %v823
      %v839 = vmul.f32 %v800, %v823
      %v840 = vmul.f32 %v801, %v823
      %v841 = vmul.f32 %v802, %v823
      %v842 = vmul.f32 %v803, %v823
      %v843 = vmul.f32 %v804, %v823
      %v844 = vmul.f32 %v805, %v823
      %v845 = vmul.f32 %v806, %v823
      %v846 = vmul.f32 %v807, %v823
      %v847 = vmul.f32 %v808, %v823
      %v848 = vmul.f32 %v809, %v823
      %v849 = vmul.f32 %v810, %v823
      %v850 = vmul.f32 %v811, %v823
      %v851 = vmul.f32 %v812, %v823
      %v852 = vmul.f32 %v813, %v823
      %v853 = vmul.f32 %v814, %v823
      %v854 = vmul.f32 %v815, %v823
      %v855 = vmul.f32 %v816, %v823
      %v856 = vmul.f32 %v817, %v823
      %v857 = vld [vmem:[%s4] sm:$0x1]
      %v859 = vlaneseq
      %v860 = vshrl.u32 %v859, 7
      %v861 = vsub.s32 0, %v860
      %v862 = vrot.slane %v857, %v861
      %v864 = vadd.f32 %v825, %v862
      %v865 = vadd.f32 %v826, %v862
      %v866 = vadd.f32 %v827, %v862
      %v867 = vadd.f32 %v828, %v862
      %v868 = vadd.f32 %v829, %v862
      %v869 = vadd.f32 %v830, %v862
      %v870 = vadd.f32 %v831, %v862
      %v871 = vadd.f32 %v832, %v862
      %v872 = vadd.f32 %v833, %v862
      %v873 = vadd.f32 %v834, %v862
      %v874 = vadd.f32 %v835, %v862
      %v875 = vadd.f32 %v836, %v862
      %v876 = vadd.f32 %v837, %v862
      %v877 = vadd.f32 %v838, %v862
      %v878 = vadd.f32 %v839, %v862
      %v879 = vadd.f32 %v840, %v862
      %v880 = vadd.f32 %v841, %v862
      %v881 = vadd.f32 %v842, %v862
      %v882 = vadd.f32 %v843, %v862
      %v883 = vadd.f32 %v844, %v862
      %v884 = vadd.f32 %v845, %v862
      %v885 = vadd.f32 %v846, %v862
      %v886 = vadd.f32 %v847, %v862
      %v887 = vadd.f32 %v848, %v862
      %v888 = vadd.f32 %v849, %v862
      %v889 = vadd.f32 %v850, %v862
      %v890 = vadd.f32 %v851, %v862
      %v891 = vadd.f32 %v852, %v862
      %v892 = vadd.f32 %v853, %v862
      %v893 = vadd.f32 %v854, %v862
      %v894 = vadd.f32 %v855, %v862
      %v895 = vadd.f32 %v856, %v862
      %v896 = vpack.c.bf16 %v865, %v864
      %v897 = vpack.c.bf16 %v867, %v866
      %v898 = vpack.c.bf16 %v869, %v868
      %v899 = vpack.c.bf16 %v871, %v870
      %v900 = vpack.c.bf16 %v873, %v872
      %v901 = vpack.c.bf16 %v875, %v874
      %v902 = vpack.c.bf16 %v877, %v876
      %v903 = vpack.c.bf16 %v879, %v878
      %v904 = vpack.c.bf16 %v881, %v880
      %v905 = vpack.c.bf16 %v883, %v882
      %v906 = vpack.c.bf16 %v885, %v884
      %v907 = vpack.c.bf16 %v887, %v886
      %v908 = vpack.c.bf16 %v889, %v888
      %v909 = vpack.c.bf16 %v891, %v890
      %v910 = vpack.c.bf16 %v893, %v892
      %v911 = vpack.c.bf16 %v895, %v894
      %v928 = vunpack.c.l.b16 %v896
      %v929 = vunpack.c.h.b16 %v896
      %v930 = vunpack.c.l.b16 %v897
      %v931 = vunpack.c.h.b16 %v897
      %v932 = vunpack.c.l.b16 %v898
      %v933 = vunpack.c.h.b16 %v898
      %v934 = vunpack.c.l.b16 %v899
      %v935 = vunpack.c.h.b16 %v899
      %v936 = vunpack.c.l.b16 %v900
      %v937 = vunpack.c.h.b16 %v900
      %v938 = vunpack.c.l.b16 %v901
      %v939 = vunpack.c.h.b16 %v901
      %v940 = vunpack.c.l.b16 %v902
      %v941 = vunpack.c.h.b16 %v902
      %v942 = vunpack.c.l.b16 %v903
      %v943 = vunpack.c.h.b16 %v903
      %v944 = vunpack.c.l.b16 %v904
      %v945 = vunpack.c.h.b16 %v904
      %v946 = vunpack.c.l.b16 %v905
      %v947 = vunpack.c.h.b16 %v905
      %v948 = vunpack.c.l.b16 %v906
      %v949 = vunpack.c.h.b16 %v906
      %v950 = vunpack.c.l.b16 %v907
      %v951 = vunpack.c.h.b16 %v907
      %v952 = vunpack.c.l.b16 %v908
      %v953 = vunpack.c.h.b16 %v908
      %v954 = vunpack.c.l.b16 %v909
      %v955 = vunpack.c.h.b16 %v909
      %v956 = vunpack.c.l.b16 %v910
      %v957 = vunpack.c.h.b16 %v910
      %v958 = vunpack.c.l.b16 %v911
      %v959 = vunpack.c.h.b16 %v911
      %v960 = vpack.c.b16 %v928, %v928
      %v961 = vpack.c.b16 %v929, %v929
      %v962 = vpack.c.b16 %v930, %v930
      %v963 = vpack.c.b16 %v931, %v931
      %v964 = vpack.c.b16 %v932, %v932
      %v965 = vpack.c.b16 %v933, %v933
      %v966 = vpack.c.b16 %v934, %v934
      %v967 = vpack.c.b16 %v935, %v935
      %v968 = vpack.c.b16 %v936, %v936
      %v969 = vpack.c.b16 %v937, %v937
      %v970 = vpack.c.b16 %v938, %v938
      %v971 = vpack.c.b16 %v939, %v939
      %v972 = vpack.c.b16 %v940, %v940
      %v973 = vpack.c.b16 %v941, %v941
      %v974 = vpack.c.b16 %v942, %v942
      %v975 = vpack.c.b16 %v943, %v943
      %v976 = vpack.c.b16 %v944, %v944
      %v977 = vpack.c.b16 %v945, %v945
      %v978 = vpack.c.b16 %v946, %v946
      %v979 = vpack.c.b16 %v947, %v947
      %v980 = vpack.c.b16 %v948, %v948
      %v981 = vpack.c.b16 %v949, %v949
      %v982 = vpack.c.b16 %v950, %v950
      %v983 = vpack.c.b16 %v951, %v951
      %v984 = vpack.c.b16 %v952, %v952
      %v985 = vpack.c.b16 %v953, %v953
      %v986 = vpack.c.b16 %v954, %v954
      %v987 = vpack.c.b16 %v955, %v955
      %v988 = vpack.c.b16 %v956, %v956
      %v989 = vpack.c.b16 %v957, %v957
      %v990 = vpack.c.b16 %v958, %v958
      %v991 = vpack.c.b16 %v959, %v959
      %1024 = vst [vmem:[#allocation2] sm:$0xf] %v960
      %1025 = vst [vmem:[#allocation2 + $0x4] sm:$0xf] %v961
      %1026 = vst [vmem:[#allocation2 + $0x8] sm:$0xf] %v962
      %1027 = vst [vmem:[#allocation2 + $0xc] sm:$0xf] %v963
      %1028 = vst [vmem:[#allocation2 + $0x10] sm:$0xf] %v964
      %1029 = vst [vmem:[#allocation2 + $0x14] sm:$0xf] %v965
      %1030 = vst [vmem:[#allocation2 + $0x18] sm:$0xf] %v966
      %1031 = vst [vmem:[#allocation2 + $0x1c] sm:$0xf] %v967
      %1032 = vst [vmem:[#allocation2 + $0x20] sm:$0xf] %v968
      %1033 = vst [vmem:[#allocation2 + $0x24] sm:$0xf] %v969
      %1034 = vst [vmem:[#allocation2 + $0x28] sm:$0xf] %v970
      %1035 = vst [vmem:[#allocation2 + $0x2c] sm:$0xf] %v971
      %1036 = vst [vmem:[#allocation2 + $0x30] sm:$0xf] %v972
      %1037 = vst [vmem:[#allocation2 + $0x34] sm:$0xf] %v973
      %1038 = vst [vmem:[#allocation2 + $0x38] sm:$0xf] %v974
      %1039 = vst [vmem:[#allocation2 + $0x3c] sm:$0xf] %v975
      %1040 = vst [vmem:[#allocation2 + $0x40] sm:$0xf] %v976
      %1041 = vst [vmem:[#allocation2 + $0x44] sm:$0xf] %v977
      %1042 = vst [vmem:[#allocation2 + $0x48] sm:$0xf] %v978
      %1043 = vst [vmem:[#allocation2 + $0x4c] sm:$0xf] %v979
      %1044 = vst [vmem:[#allocation2 + $0x50] sm:$0xf] %v980
      %1045 = vst [vmem:[#allocation2 + $0x54] sm:$0xf] %v981
      %1046 = vst [vmem:[#allocation2 + $0x58] sm:$0xf] %v982
      %1047 = vst [vmem:[#allocation2 + $0x5c] sm:$0xf] %v983
      %1048 = vst [vmem:[#allocation2 + $0x60] sm:$0xf] %v984
      %1049 = vst [vmem:[#allocation2 + $0x64] sm:$0xf] %v985
      %1050 = vst [vmem:[#allocation2 + $0x68] sm:$0xf] %v986
      %1051 = vst [vmem:[#allocation2 + $0x6c] sm:$0xf] %v987
      %1052 = vst [vmem:[#allocation2 + $0x70] sm:$0xf] %v988
      %1053 = vst [vmem:[#allocation2 + $0x74] sm:$0xf] %v989
      %1054 = vst [vmem:[#allocation2 + $0x78] sm:$0xf] %v990
      %1055 = vst [vmem:[#allocation2 + $0x7c] sm:$0xf] %v991
    $region45: #{tpu_custom_call.1} parent=1 // pred_fallthru
      _
    %v1056 = vld [vmem:[#allocation2] sm:$0xf]
    %v1057 = vld [vmem:[#allocation2 + $0x4] sm:$0xf]
    %v1058 = vld [vmem:[#allocation2 + $0x8] sm:$0xf]
    %v1059 = vld [vmem:[#allocation2 + $0xc] sm:$0xf]
    %v1060 = vld [vmem:[#allocation2 + $0x10] sm:$0xf]
    %v1061 = vld [vmem:[#allocation2 + $0x14] sm:$0xf]
    %v1062 = vld [vmem:[#allocation2 + $0x18] sm:$0xf]
    %v1063 = vld [vmem:[#allocation2 + $0x1c] sm:$0xf]
    %v1064 = vld [vmem:[#allocation2 + $0x20] sm:$0xf]
    %v1065 = vld [vmem:[#allocation2 + $0x24] sm:$0xf]
    %v1066 = vld [vmem:[#allocation2 + $0x28] sm:$0xf]
    %v1067 = vld [vmem:[#allocation2 + $0x2c] sm:$0xf]
    %v1068 = vld [vmem:[#allocation2 + $0x30] sm:$0xf]
    %v1069 = vld [vmem:[#allocation2 + $0x34] sm:$0xf]
    %v1070 = vld [vmem:[#allocation2 + $0x38] sm:$0xf]
    %v1071 = vld [vmem:[#allocation2 + $0x3c] sm:$0xf]
    %v1072 = vld [vmem:[#allocation2 + $0x40] sm:$0xf]
    %v1073 = vld [vmem:[#allocation2 + $0x44] sm:$0xf]
    %v1074 = vld [vmem:[#allocation2 + $0x48] sm:$0xf]
    %v1075 = vld [vmem:[#allocation2 + $0x4c] sm:$0xf]
    %v1076 = vld [vmem:[#allocation2 + $0x50] sm:$0xf]
    %v1077 = vld [vmem:[#allocation2 + $0x54] sm:$0xf]
    %v1078 = vld [vmem:[#allocation2 + $0x58] sm:$0xf]
    %v1079 = vld [vmem:[#allocation2 + $0x5c] sm:$0xf]
    %v1080 = vld [vmem:[#allocation2 + $0x60] sm:$0xf]
    %v1081 = vld [vmem:[#allocation2 + $0x64] sm:$0xf]
    %v1082 = vld [vmem:[#allocation2 + $0x68] sm:$0xf]
    %v1083 = vld [vmem:[#allocation2 + $0x6c] sm:$0xf]
    %v1084 = vld [vmem:[#allocation2 + $0x70] sm:$0xf]
    %v1085 = vld [vmem:[#allocation2 + $0x74] sm:$0xf]
    %v1086 = vld [vmem:[#allocation2 + $0x78] sm:$0xf]
    %v1087 = vld [vmem:[#allocation2 + $0x7c] sm:$0xf]
    %v1088 = vld [vmem:[#allocation8] sm:$0xff]
    %v1089 = vld [vmem:[#allocation8 + $0x8] sm:$0xff]
    %v1090 = vld [vmem:[#allocation8 + $0x10] sm:$0xff]
    %v1091 = vld [vmem:[#allocation8 + $0x18] sm:$0xff]
    %v1092 = vld [vmem:[#allocation8 + $0x20] sm:$0xff]
    %v1093 = vld [vmem:[#allocation8 + $0x28] sm:$0xff]
    %v1094 = vld [vmem:[#allocation8 + $0x30] sm:$0xff]
    %v1095 = vld [vmem:[#allocation8 + $0x38] sm:$0xff]
    %v1096 = vld [vmem:[#allocation8 + $0x40] sm:$0xff]
    %v1097 = vld [vmem:[#allocation8 + $0x48] sm:$0xff]
    %v1098 = vld [vmem:[#allocation8 + $0x50] sm:$0xff]
    %v1099 = vld [vmem:[#allocation8 + $0x58] sm:$0xff]
    %v1100 = vld [vmem:[#allocation8 + $0x60] sm:$0xff]
    %v1101 = vld [vmem:[#allocation8 + $0x68] sm:$0xff]
    %v1102 = vld [vmem:[#allocation8 + $0x70] sm:$0xff]
    %v1103 = vld [vmem:[#allocation8 + $0x78] sm:$0xff]
    %v1104 = vld [vmem:[%s6] sm:$0x3]
    %v1106 = vlaneseq
    %v1107 = vshrl.u32 %v1106, 7
    %v1108 = vsub.s32 0, %v1107
    %v1109 = vrot.slane %v1104, %v1108
    %v1110 = vlaneseq
    %v1111 = vshrl.u32 %v1110, 7
    %v1112 = vsub.s32 1, %v1111
    %v1113 = vrot.slane %v1104, %v1112
    %v1148 = vunpack.c.l.b16 %v1056
    %v1149 = vunpack.c.l.b16 %v1057
    %v1150 = vunpack.c.l.b16 %v1058
    %v1151 = vunpack.c.l.b16 %v1059
    %v1152 = vunpack.c.l.b16 %v1060
    %v1153 = vunpack.c.l.b16 %v1061
    %v1154 = vunpack.c.l.b16 %v1062
    %v1155 = vunpack.c.l.b16 %v1063
    %v1156 = vunpack.c.l.b16 %v1064
    %v1157 = vunpack.c.l.b16 %v1065
    %v1158 = vunpack.c.l.b16 %v1066
    %v1159 = vunpack.c.l.b16 %v1067
    %v1160 = vunpack.c.l.b16 %v1068
    %v1161 = vunpack.c.l.b16 %v1069
    %v1162 = vunpack.c.l.b16 %v1070
    %v1163 = vunpack.c.l.b16 %v1071
    %v1164 = vunpack.c.l.b16 %v1072
    %v1165 = vunpack.c.l.b16 %v1073
    %v1166 = vunpack.c.l.b16 %v1074
    %v1167 = vunpack.c.l.b16 %v1075
    %v1168 = vunpack.c.l.b16 %v1076
    %v1169 = vunpack.c.l.b16 %v1077
    %v1170 = vunpack.c.l.b16 %v1078
    %v1171 = vunpack.c.l.b16 %v1079
    %v1172 = vunpack.c.l.b16 %v1080
    %v1173 = vunpack.c.l.b16 %v1081
    %v1174 = vunpack.c.l.b16 %v1082
    %v1175 = vunpack.c.l.b16 %v1083
    %v1176 = vunpack.c.l.b16 %v1084
    %v1177 = vunpack.c.l.b16 %v1085
    %v1178 = vunpack.c.l.b16 %v1086
    %v1179 = vunpack.c.l.b16 %v1087
    %v1180 = vpack.c.b16 %v1149, %v1148
    %v1181 = vpack.c.b16 %v1151, %v1150
    %v1182 = vpack.c.b16 %v1153, %v1152
    %v1183 = vpack.c.b16 %v1155, %v1154
    %v1184 = vpack.c.b16 %v1157, %v1156
    %v1185 = vpack.c.b16 %v1159, %v1158
    %v1186 = vpack.c.b16 %v1161, %v1160
    %v1187 = vpack.c.b16 %v1163, %v1162
    %v1188 = vpack.c.b16 %v1165, %v1164
    %v1189 = vpack.c.b16 %v1167, %v1166
    %v1190 = vpack.c.b16 %v1169, %v1168
    %v1191 = vpack.c.b16 %v1171, %v1170
    %v1192 = vpack.c.b16 %v1173, %v1172
    %v1193 = vpack.c.b16 %v1175, %v1174
    %v1194 = vpack.c.b16 %v1177, %v1176
    %v1195 = vpack.c.b16 %v1179, %v1178
    %v1228 = vunpack.c.l.b16 %v1088
    %v1229 = vunpack.c.h.b16 %v1088
    %v1230 = vunpack.c.l.b16 %v1089
    %v1231 = vunpack.c.h.b16 %v1089
    %v1232 = vunpack.c.l.b16 %v1090
    %v1233 = vunpack.c.h.b16 %v1090
    %v1234 = vunpack.c.l.b16 %v1091
    %v1235 = vunpack.c.h.b16 %v1091
    %v1236 = vunpack.c.l.b16 %v1092
    %v1237 = vunpack.c.h.b16 %v1092
    %v1238 = vunpack.c.l.b16 %v1093
    %v1239 = vunpack.c.h.b16 %v1093
    %v1240 = vunpack.c.l.b16 %v1094
    %v1241 = vunpack.c.h.b16 %v1094
    %v1242 = vunpack.c.l.b16 %v1095
    %v1243 = vunpack.c.h.b16 %v1095
    %v1244 = vunpack.c.l.b16 %v1096
    %v1245 = vunpack.c.h.b16 %v1096
    %v1246 = vunpack.c.l.b16 %v1097
    %v1247 = vunpack.c.h.b16 %v1097
    %v1248 = vunpack.c.l.b16 %v1098
    %v1249 = vunpack.c.h.b16 %v1098
    %v1250 = vunpack.c.l.b16 %v1099
    %v1251 = vunpack.c.h.b16 %v1099
    %v1252 = vunpack.c.l.b16 %v1100
    %v1253 = vunpack.c.h.b16 %v1100
    %v1254 = vunpack.c.l.b16 %v1101
    %v1255 = vunpack.c.h.b16 %v1101
    %v1256 = vunpack.c.l.b16 %v1102
    %v1257 = vunpack.c.h.b16 %v1102
    %v1258 = vunpack.c.l.b16 %v1103
    %v1259 = vunpack.c.h.b16 %v1103
    %v1260 = vpack.c.b16 %v1230, %v1228
    %v1261 = vpack.c.b16 %v1231, %v1229
    %v1262 = vpack.c.b16 %v1234, %v1232
    %v1263 = vpack.c.b16 %v1235, %v1233
    %v1264 = vpack.c.b16 %v1238, %v1236
    %v1265 = vpack.c.b16 %v1239, %v1237
    %v1266 = vpack.c.b16 %v1242, %v1240
    %v1267 = vpack.c.b16 %v1243, %v1241
    %v1268 = vpack.c.b16 %v1246, %v1244
    %v1269 = vpack.c.b16 %v1247, %v1245
    %v1270 = vpack.c.b16 %v1250, %v1248
    %v1271 = vpack.c.b16 %v1251, %v1249
    %v1272 = vpack.c.b16 %v1254, %v1252
    %v1273 = vpack.c.b16 %v1255, %v1253
    %v1274 = vpack.c.b16 %v1258, %v1256
    %v1275 = vpack.c.b16 %v1259, %v1257
    %1292 = vmatprep.subr.bf16.mxu0 %v1275
    %1293 = vmatpush1.bf16.msra.mxu0 %v1274
    %1294 = vmatprep.subr.bf16.mxu0 %v1273
    %1295 = vmatpush1.bf16.msra.mxu0 %v1272
    %1296 = vmatprep.subr.bf16.mxu0 %v1271
    %1297 = vmatpush1.bf16.msra.mxu0 %v1270
    %1298 = vmatprep.subr.bf16.mxu0 %v1269
    %1299 = vmatpush1.bf16.msra.mxu0 %v1268
    %1300 = vmatprep.subr.bf16.mxu0 %v1267
    %1301 = vmatpush1.bf16.msra.mxu0 %v1266
    %1302 = vmatprep.subr.bf16.mxu0 %v1265
    %1303 = vmatpush1.bf16.msra.mxu0 %v1264
    %1304 = vmatprep.subr.bf16.mxu0 %v1263
    %1305 = vmatpush1.bf16.msra.mxu0 %v1262
    %1306 = vmatprep.subr.bf16.mxu0 %v1261
    %1307 = vmatpush1.bf16.msra.mxu0 %v1260
    %1308 = vmatprep.subr.bf16.mxu0 0
    %1309 = vmatpush2.bf16.msra.mxu0 0
    %1310 = vmatprep.subr.bf16.mxu0 0
    %1311 = vmatpush2.bf16.msra.mxu0 0
    %1312 = vmatprep.subr.bf16.mxu0 0
    %1313 = vmatpush2.bf16.msra.mxu0 0
    %1314 = vmatprep.subr.bf16.mxu0 0
    %1315 = vmatpush2.bf16.msra.mxu0 0
    %1316 = vmatprep.subr.bf16.mxu0 0
    %1317 = vmatpush2.bf16.msra.mxu0 0
    %1318 = vmatprep.subr.bf16.mxu0 0
    %1319 = vmatpush2.bf16.msra.mxu0 0
    %1320 = vmatprep.subr.bf16.mxu0 0
    %1321 = vmatpush2.bf16.msra.mxu0 0
    %1322 = vmatprep.subr.bf16.mxu0 0
    %1323 = vmatpush2.bf16.msra.mxu0 0
    %1324 = vmatprep.mubr.bf16.mxu0 0
    %1325 = vmatmul.mubr.bf16.gmra.mxu0 %v1180
    %v1326 = vpop.f32.mrf.mxu0
    %v1327 = vadd.f32 %v1109, %v1326
    %v1328 = vpop.f32.mrf.mxu0
    %v1329 = vadd.f32 %v1113, %v1328
    %v1330 = vpop.f32.mrf.mxu0
    %v1331 = vadd.f32 %v1109, %v1330
    %v1332 = vpop.f32.mrf.mxu0
    %v1333 = vadd.f32 %v1113, %v1332
    %1334 = vmatprep.mubr.bf16.mxu0 0
    %1335 = vmatmul.mubr.bf16.gmra.mxu0 %v1181
    %v1336 = vpop.f32.mrf.mxu0
    %v1337 = vadd.f32 %v1109, %v1336
    %v1338 = vpop.f32.mrf.mxu0
    %v1339 = vadd.f32 %v1113, %v1338
    %v1340 = vpop.f32.mrf.mxu0
    %v1341 = vadd.f32 %v1109, %v1340
    %v1342 = vpop.f32.mrf.mxu0
    %v1343 = vadd.f32 %v1113, %v1342
    %1344 = vmatprep.mubr.bf16.mxu0 0
    %1345 = vmatmul.mubr.bf16.gmra.mxu0 %v1182
    %v1346 = vpop.f32.mrf.mxu0
    %v1347 = vadd.f32 %v1109, %v1346
    %v1348 = vpop.f32.mrf.mxu0
    %v1349 = vadd.f32 %v1113, %v1348
    %v1350 = vpop.f32.mrf.mxu0
    %v1351 = vadd.f32 %v1109, %v1350
    %v1352 = vpop.f32.mrf.mxu0
    %v1353 = vadd.f32 %v1113, %v1352
    %1354 = vmatprep.mubr.bf16.mxu0 0
    %1355 = vmatmul.mubr.bf16.gmra.mxu0 %v1183
    %v1356 = vpop.f32.mrf.mxu0
    %v1357 = vadd.f32 %v1109, %v1356
    %v1358 = vpop.f32.mrf.mxu0
    %v1359 = vadd.f32 %v1113, %v1358
    %v1360 = vpop.f32.mrf.mxu0
    %v1361 = vadd.f32 %v1109, %v1360
    %v1362 = vpop.f32.mrf.mxu0
    %v1363 = vadd.f32 %v1113, %v1362
    %1364 = vmatprep.mubr.bf16.mxu0 0
    %1365 = vmatmul.mubr.bf16.gmra.mxu0 %v1184
    %v1366 = vpop.f32.mrf.mxu0
    %v1367 = vadd.f32 %v1109, %v1366
    %v1368 = vpop.f32.mrf.mxu0
    %v1369 = vadd.f32 %v1113, %v1368
    %v1370 = vpop.f32.mrf.mxu0
    %v1371 = vadd.f32 %v1109, %v1370
    %v1372 = vpop.f32.mrf.mxu0
    %v1373 = vadd.f32 %v1113, %v1372
    %1374 = vmatprep.mubr.bf16.mxu0 0
    %1375 = vmatmul.mubr.bf16.gmra.mxu0 %v1185
    %v1376 = vpop.f32.mrf.mxu0
    %v1377 = vadd.f32 %v1109, %v1376
    %v1378 = vpop.f32.mrf.mxu0
    %v1379 = vadd.f32 %v1113, %v1378
    %v1380 = vpop.f32.mrf.mxu0
    %v1381 = vadd.f32 %v1109, %v1380
    %v1382 = vpop.f32.mrf.mxu0
    %v1383 = vadd.f32 %v1113, %v1382
    %1384 = vmatprep.mubr.bf16.mxu0 0
    %1385 = vmatmul.mubr.bf16.gmra.mxu0 %v1186
    %v1386 = vpop.f32.mrf.mxu0
    %v1387 = vadd.f32 %v1109, %v1386
    %v1388 = vpop.f32.mrf.mxu0
    %v1389 = vadd.f32 %v1113, %v1388
    %v1390 = vpop.f32.mrf.mxu0
    %v1391 = vadd.f32 %v1109, %v1390
    %v1392 = vpop.f32.mrf.mxu0
    %v1393 = vadd.f32 %v1113, %v1392
    %1394 = vmatprep.mubr.bf16.mxu0 0
    %1395 = vmatmul.mubr.bf16.gmra.mxu0 %v1187
    %v1396 = vpop.f32.mrf.mxu0
    %v1397 = vadd.f32 %v1109, %v1396
    %v1398 = vpop.f32.mrf.mxu0
    %v1399 = vadd.f32 %v1113, %v1398
    %v1400 = vpop.f32.mrf.mxu0
    %v1401 = vadd.f32 %v1109, %v1400
    %v1402 = vpop.f32.mrf.mxu0
    %v1403 = vadd.f32 %v1113, %v1402
    %1404 = vmatprep.mubr.bf16.mxu0 0
    %1405 = vmatmul.mubr.bf16.gmra.mxu0 %v1188
    %v1406 = vpop.f32.mrf.mxu0
    %v1407 = vadd.f32 %v1109, %v1406
    %v1408 = vpop.f32.mrf.mxu0
    %v1409 = vadd.f32 %v1113, %v1408
    %v1410 = vpop.f32.mrf.mxu0
    %v1411 = vadd.f32 %v1109, %v1410
    %v1412 = vpop.f32.mrf.mxu0
    %v1413 = vadd.f32 %v1113, %v1412
    %1414 = vmatprep.mubr.bf16.mxu0 0
    %1415 = vmatmul.mubr.bf16.gmra.mxu0 %v1189
    %v1416 = vpop.f32.mrf.mxu0
    %v1417 = vadd.f32 %v1109, %v1416
    %v1418 = vpop.f32.mrf.mxu0
    %v1419 = vadd.f32 %v1113, %v1418
    %v1420 = vpop.f32.mrf.mxu0
    %v1421 = vadd.f32 %v1109, %v1420
    %v1422 = vpop.f32.mrf.mxu0
    %v1423 = vadd.f32 %v1113, %v1422
    %1424 = vmatprep.mubr.bf16.mxu0 0
    %1425 = vmatmul.mubr.bf16.gmra.mxu0 %v1190
    %v1426 = vpop.f32.mrf.mxu0
    %v1427 = vadd.f32 %v1109, %v1426
    %v1428 = vpop.f32.mrf.mxu0
    %v1429 = vadd.f32 %v1113, %v1428
    %v1430 = vpop.f32.mrf.mxu0
    %v1431 = vadd.f32 %v1109, %v1430
    %v1432 = vpop.f32.mrf.mxu0
    %v1433 = vadd.f32 %v1113, %v1432
    %1434 = vmatprep.mubr.bf16.mxu0 0
    %1435 = vmatmul.mubr.bf16.gmra.mxu0 %v1191
    %v1436 = vpop.f32.mrf.mxu0
    %v1437 = vadd.f32 %v1109, %v1436
    %v1438 = vpop.f32.mrf.mxu0
    %v1439 = vadd.f32 %v1113, %v1438
    %v1440 = vpop.f32.mrf.mxu0
    %v1441 = vadd.f32 %v1109, %v1440
    %v1442 = vpop.f32.mrf.mxu0
    %v1443 = vadd.f32 %v1113, %v1442
    %1444 = vmatprep.mubr.bf16.mxu0 0
    %1445 = vmatmul.mubr.bf16.gmra.mxu0 %v1192
    %v1446 = vpop.f32.mrf.mxu0
    %v1447 = vadd.f32 %v1109, %v1446
    %v1448 = vpop.f32.mrf.mxu0
    %v1449 = vadd.f32 %v1113, %v1448
    %v1450 = vpop.f32.mrf.mxu0
    %v1451 = vadd.f32 %v1109, %v1450
    %v1452 = vpop.f32.mrf.mxu0
    %v1453 = vadd.f32 %v1113, %v1452
    %1454 = vmatprep.mubr.bf16.mxu0 0
    %1455 = vmatmul.mubr.bf16.gmra.mxu0 %v1193
    %v1456 = vpop.f32.mrf.mxu0
    %v1457 = vadd.f32 %v1109, %v1456
    %v1458 = vpop.f32.mrf.mxu0
    %v1459 = vadd.f32 %v1113, %v1458
    %v1460 = vpop.f32.mrf.mxu0
    %v1461 = vadd.f32 %v1109, %v1460
    %v1462 = vpop.f32.mrf.mxu0
    %v1463 = vadd.f32 %v1113, %v1462
    %1464 = vmatprep.mubr.bf16.mxu0 0
    %1465 = vmatmul.mubr.bf16.gmra.mxu0 %v1194
    %v1466 = vpop.f32.mrf.mxu0
    %v1467 = vadd.f32 %v1109, %v1466
    %v1468 = vpop.f32.mrf.mxu0
    %v1469 = vadd.f32 %v1113, %v1468
    %v1470 = vpop.f32.mrf.mxu0
    %v1471 = vadd.f32 %v1109, %v1470
    %v1472 = vpop.f32.mrf.mxu0
    %v1473 = vadd.f32 %v1113, %v1472
    %1474 = vmatprep.mubr.bf16.mxu0 0
    %1475 = vmatmul.mubr.bf16.gmra.mxu0 %v1195
    %v1476 = vpop.f32.mrf.mxu0
    %v1477 = vadd.f32 %v1109, %v1476
    %v1478 = vpop.f32.mrf.mxu0
    %v1479 = vadd.f32 %v1113, %v1478
    %v1480 = vpop.f32.mrf.mxu0
    %v1481 = vadd.f32 %v1109, %v1480
    %v1482 = vpop.f32.mrf.mxu0
    %v1483 = vadd.f32 %v1113, %v1482
    %1484 = vdwg.mxu0
    %v1485 = vpack.c.bf16 %v1331, %v1327
    %v1486 = vpack.c.bf16 %v1333, %v1329
    %v1487 = vpack.c.bf16 %v1341, %v1337
    %v1488 = vpack.c.bf16 %v1343, %v1339
    %v1489 = vpack.c.bf16 %v1351, %v1347
    %v1490 = vpack.c.bf16 %v1353, %v1349
    %v1491 = vpack.c.bf16 %v1361, %v1357
    %v1492 = vpack.c.bf16 %v1363, %v1359
    %v1493 = vpack.c.bf16 %v1371, %v1367
    %v1494 = vpack.c.bf16 %v1373, %v1369
    %v1495 = vpack.c.bf16 %v1381, %v1377
    %v1496 = vpack.c.bf16 %v1383, %v1379
    %v1497 = vpack.c.bf16 %v1391, %v1387
    %v1498 = vpack.c.bf16 %v1393, %v1389
    %v1499 = vpack.c.bf16 %v1401, %v1397
    %v1500 = vpack.c.bf16 %v1403, %v1399
    %v1501 = vpack.c.bf16 %v1411, %v1407
    %v1502 = vpack.c.bf16 %v1413, %v1409
    %v1503 = vpack.c.bf16 %v1421, %v1417
    %v1504 = vpack.c.bf16 %v1423, %v1419
    %v1505 = vpack.c.bf16 %v1431, %v1427
    %v1506 = vpack.c.bf16 %v1433, %v1429
    %v1507 = vpack.c.bf16 %v1441, %v1437
    %v1508 = vpack.c.bf16 %v1443, %v1439
    %v1509 = vpack.c.bf16 %v1451, %v1447
    %v1510 = vpack.c.bf16 %v1453, %v1449
    %v1511 = vpack.c.bf16 %v1461, %v1457
    %v1512 = vpack.c.bf16 %v1463, %v1459
    %v1513 = vpack.c.bf16 %v1471, %v1467
    %v1514 = vpack.c.bf16 %v1473, %v1469
    %v1515 = vpack.c.bf16 %v1481, %v1477
    %v1516 = vpack.c.bf16 %v1483, %v1479
    %v1549 = vunpack.c.l.b16 %v1485
    %v1550 = vunpack.c.l.b16 %v1486
    %v1551 = vunpack.c.h.b16 %v1485
    %v1552 = vunpack.c.h.b16 %v1486
    %v1553 = vunpack.c.l.b16 %v1487
    %v1554 = vunpack.c.l.b16 %v1488
    %v1555 = vunpack.c.h.b16 %v1487
    %v1556 = vunpack.c.h.b16 %v1488
    %v1557 = vunpack.c.l.b16 %v1489
    %v1558 = vunpack.c.l.b16 %v1490
    %v1559 = vunpack.c.h.b16 %v1489
    %v1560 = vunpack.c.h.b16 %v1490
    %v1561 = vunpack.c.l.b16 %v1491
    %v1562 = vunpack.c.l.b16 %v1492
    %v1563 = vunpack.c.h.b16 %v1491
    %v1564 = vunpack.c.h.b16 %v1492
    %v1565 = vunpack.c.l.b16 %v1493
    %v1566 = vunpack.c.l.b16 %v1494
    %v1567 = vunpack.c.h.b16 %v1493
    %v1568 = vunpack.c.h.b16 %v1494
    %v1569 = vunpack.c.l.b16 %v1495
    %v1570 = vunpack.c.l.b16 %v1496
    %v1571 = vunpack.c.h.b16 %v1495
    %v1572 = vunpack.c.h.b16 %v1496
    %v1573 = vunpack.c.l.b16 %v1497
    %v1574 = vunpack.c.l.b16 %v1498
    %v1575 = vunpack.c.h.b16 %v1497
    %v1576 = vunpack.c.h.b16 %v1498
    %v1577 = vunpack.c.l.b16 %v1499
    %v1578 = vunpack.c.l.b16 %v1500
    %v1579 = vunpack.c.h.b16 %v1499
    %v1580 = vunpack.c.h.b16 %v1500
    %v1581 = vunpack.c.l.b16 %v1501
    %v1582 = vunpack.c.l.b16 %v1502
    %v1583 = vunpack.c.h.b16 %v1501
    %v1584 = vunpack.c.h.b16 %v1502
    %v1585 = vunpack.c.l.b16 %v1503
    %v1586 = vunpack.c.l.b16 %v1504
    %v1587 = vunpack.c.h.b16 %v1503
    %v1588 = vunpack.c.h.b16 %v1504
    %v1589 = vunpack.c.l.b16 %v1505
    %v1590 = vunpack.c.l.b16 %v1506
    %v1591 = vunpack.c.h.b16 %v1505
    %v1592 = vunpack.c.h.b16 %v1506
    %v1593 = vunpack.c.l.b16 %v1507
    %v1594 = vunpack.c.l.b16 %v1508
    %v1595 = vunpack.c.h.b16 %v1507
    %v1596 = vunpack.c.h.b16 %v1508
    %v1597 = vunpack.c.l.b16 %v1509
    %v1598 = vunpack.c.l.b16 %v1510
    %v1599 = vunpack.c.h.b16 %v1509
    %v1600 = vunpack.c.h.b16 %v1510
    %v1601 = vunpack.c.l.b16 %v1511
    %v1602 = vunpack.c.l.b16 %v1512
    %v1603 = vunpack.c.h.b16 %v1511
    %v1604 = vunpack.c.h.b16 %v1512
    %v1605 = vunpack.c.l.b16 %v1513
    %v1606 = vunpack.c.l.b16 %v1514
    %v1607 = vunpack.c.h.b16 %v1513
    %v1608 = vunpack.c.h.b16 %v1514
    %v1609 = vunpack.c.l.b16 %v1515
    %v1610 = vunpack.c.l.b16 %v1516
    %v1611 = vunpack.c.h.b16 %v1515
    %v1612 = vunpack.c.h.b16 %v1516
    %v1613 = vpack.c.b16 %v1550, %v1549
    %v1614 = vpack.c.b16 %v1552, %v1551
    %v1615 = vpack.c.b16 %v1554, %v1553
    %v1616 = vpack.c.b16 %v1556, %v1555
    %v1617 = vpack.c.b16 %v1558, %v1557
    %v1618 = vpack.c.b16 %v1560, %v1559
    %v1619 = vpack.c.b16 %v1562, %v1561
    %v1620 = vpack.c.b16 %v1564, %v1563
    %v1621 = vpack.c.b16 %v1566, %v1565
    %v1622 = vpack.c.b16 %v1568, %v1567
    %v1623 = vpack.c.b16 %v1570, %v1569
    %v1624 = vpack.c.b16 %v1572, %v1571
    %v1625 = vpack.c.b16 %v1574, %v1573
    %v1626 = vpack.c.b16 %v1576, %v1575
    %v1627 = vpack.c.b16 %v1578, %v1577
    %v1628 = vpack.c.b16 %v1580, %v1579
    %v1629 = vpack.c.b16 %v1582, %v1581
    %v1630 = vpack.c.b16 %v1584, %v1583
    %v1631 = vpack.c.b16 %v1586, %v1585
    %v1632 = vpack.c.b16 %v1588, %v1587
    %v1633 = vpack.c.b16 %v1590, %v1589
    %v1634 = vpack.c.b16 %v1592, %v1591
    %v1635 = vpack.c.b16 %v1594, %v1593
    %v1636 = vpack.c.b16 %v1596, %v1595
    %v1637 = vpack.c.b16 %v1598, %v1597
    %v1638 = vpack.c.b16 %v1600, %v1599
    %v1639 = vpack.c.b16 %v1602, %v1601
    %v1640 = vpack.c.b16 %v1604, %v1603
    %v1641 = vpack.c.b16 %v1606, %v1605
    %v1642 = vpack.c.b16 %v1608, %v1607
    %v1643 = vpack.c.b16 %v1610, %v1609
    %v1644 = vpack.c.b16 %v1612, %v1611
    %1677 = vst [vmem:[#allocation9] sm:$0xff] %v1613
    %1678 = vst [vmem:[#allocation9 + $0x8] sm:$0xff] %v1614
    %1679 = vst [vmem:[#allocation9 + $0x10] sm:$0xff] %v1615
    %1680 = vst [vmem:[#allocation9 + $0x18] sm:$0xff] %v1616
    %1681 = vst [vmem:[#allocation9 + $0x20] sm:$0xff] %v1617
    %1682 = vst [vmem:[#allocation9 + $0x28] sm:$0xff] %v1618
    %1683 = vst [vmem:[#allocation9 + $0x30] sm:$0xff] %v1619
    %1684 = vst [vmem:[#allocation9 + $0x38] sm:$0xff] %v1620
    %1685 = vst [vmem:[#allocation9 + $0x40] sm:$0xff] %v1621
    %1686 = vst [vmem:[#allocation9 + $0x48] sm:$0xff] %v1622
    %1687 = vst [vmem:[#allocation9 + $0x50] sm:$0xff] %v1623
    %1688 = vst [vmem:[#allocation9 + $0x58] sm:$0xff] %v1624
    %1689 = vst [vmem:[#allocation9 + $0x60] sm:$0xff] %v1625
    %1690 = vst [vmem:[#allocation9 + $0x68] sm:$0xff] %v1626
    %1691 = vst [vmem:[#allocation9 + $0x70] sm:$0xff] %v1627
    %1692 = vst [vmem:[#allocation9 + $0x78] sm:$0xff] %v1628
    %1693 = vst [vmem:[#allocation9 + $0x80] sm:$0xff] %v1629
    %1694 = vst [vmem:[#allocation9 + $0x88] sm:$0xff] %v1630
    %1695 = vst [vmem:[#allocation9 + $0x90] sm:$0xff] %v1631
    %1696 = vst [vmem:[#allocation9 + $0x98] sm:$0xff] %v1632
    %1697 = vst [vmem:[#allocation9 + $0xa0] sm:$0xff] %v1633
    %1698 = vst [vmem:[#allocation9 + $0xa8] sm:$0xff] %v1634
    %1699 = vst [vmem:[#allocation9 + $0xb0] sm:$0xff] %v1635
    %1700 = vst [vmem:[#allocation9 + $0xb8] sm:$0xff] %v1636
    %1701 = vst [vmem:[#allocation9 + $0xc0] sm:$0xff] %v1637
    %1702 = vst [vmem:[#allocation9 + $0xc8] sm:$0xff] %v1638
    %1703 = vst [vmem:[#allocation9 + $0xd0] sm:$0xff] %v1639
    %1704 = vst [vmem:[#allocation9 + $0xd8] sm:$0xff] %v1640
    %1705 = vst [vmem:[#allocation9 + $0xe0] sm:$0xff] %v1641
    %1706 = vst [vmem:[#allocation9 + $0xe8] sm:$0xff] %v1642
    %1707 = vst [vmem:[#allocation9 + $0xf0] sm:$0xff] %v1643
    %1708 = vst [vmem:[#allocation9 + $0xf8] sm:$0xff] %v1644
    // Predicated region
    $region46: #{tpu_custom_call.1} parent=1 // pred_check
      _
    $region47: #{tpu_custom_call.1} parent=1 // pred_check_branch
      %1710 = sbr.rel (0) target = $region49
    $region48: #{tpu_custom_call.1} parent=1 // pred_region
      %s1712 = ssub.s32 4096, 4096
      %1713 = vsyncadd [#allocation5], %s1712
      %s1714 = sshll.u32 [#allocation9], 4
      %s1715 = int_to_ptr.vmem [resolvable:$true] %s1714
      %1720 = dma.vmem_to_hbm [thread:$0]  %s1715, 4096, %s7, [#allocation5], 128, 128, 8
    $region49: #{tpu_custom_call.1} parent=1 // pred_fallthru
      _
    // Predicated region
    $region50: #{tpu_custom_call.1} parent=1 // pred_check
      _
    $region51: #{tpu_custom_call.1} parent=1 // pred_check_branch
      %1722 = sbr.rel (0) target = $region53
    $region52: #{tpu_custom_call.1} parent=1 // pred_region
      %1723 = dma.done [#allocation5], 4096
    $region53: #{tpu_custom_call.1} parent=1 // pred_fallthru
      _
    %1724 = vsyncpa [#allocation4], 1
    %1725 = vsyncpa [#allocation7], 1
    %1726 = vsyncpa [#allocation5], 1

// kernel: tpu_custom_call.1
$region0: #{tpu_custom_call.1}
  #allocation0 [shape = 'u32[]', space=smem, size = 0x4, offset = 0x4, fixed_abs, tag = 'smem constant byte address 0x4 - core index']
  #allocation1 [shape = 'u32[144,128]{1,0:T(1,128)}', space=vmem, size = 0x12000, scoped, tag = 'internal scratch']
  #allocation2 [shape = 'bf16[256,128]{1,0:T(8,128)(2,1)}', space=vmem, size = 0x10000, scoped, tag = 'scratch operand']
  %s0 = inlined_call_operand.hbm [shape: bf16[256,128], index: 0, kind: input, shape index: {}]
  %s1 = inlined_call_operand.hbm [shape: bf16[128,128], index: 1, kind: input, shape index: {}]
  %s2 = inlined_call_operand.vmem [shape: f32[1,128], index: 2, kind: input, shape index: {}]
  %s3 = inlined_call_operand.vmem [shape: f32[1,128], index: 3, kind: input, shape index: {}]
  %s4 = inlined_call_operand.vmem [shape: f32[1,128], index: 4, kind: input, shape index: {}]
  %s5 = inlined_call_operand.hbm [shape: bf16[128,256], index: 5, kind: input, shape index: {}]
  %s6 = inlined_call_operand.vmem [shape: f32[1,256], index: 6, kind: input, shape index: {}]
  %s7 = inlined_call_operand.hbm [shape: bf16[256,256], index: 7, kind: output, shape index: {}]
  %s8 = sld [smem:[#allocation0]]
  $region54: #{tpu_custom_call.1} parent=0
    _
  %s10 = ssub.s32 1, %s8
  %s11 = scalar_select 0, %s10, %s8
  $region1: #{tpu_custom_call.1} parent=0
    #allocation3 [shape = 'u8[65536]{0}', space=vmem, size = 0x10000, scoped, tag = 'input window, operand 0, single buffered']
    #allocation4 [shape = 's32[1]{0}', space=sflag, size = 0x4, scoped, tag = 'scoped memory for tpu_custom_call.1']
    #allocation5 [shape = 's32[1]{0}', space=sflag, size = 0x4, scoped, tag = 'scoped memory for tpu_custom_call.1']
    #allocation6 [shape = 'u8[32768]{0}', space=vmem, size = 0x8000, scoped, tag = 'input window, operand 1, single buffered']
    #allocation7 [shape = 's32[1]{0}', space=sflag, size = 0x4, scoped, tag = 'scoped memory for tpu_custom_call.1']
    #allocation8 [shape = 'u8[65536]{0}', space=vmem, size = 0x10000, scoped, tag = 'input window, operand 5, single buffered']
    #allocation9 [shape = 'u8[131072]{0}', space=vmem, size = 0x20000, scoped, tag = 'output window, operand 0, single buffered']
    %12 = vsyncpa [#allocation4], 0
    %13 = vsyncpa [#allocation7], 0
    %14 = vsyncpa [#allocation5], 0
    // Predicated region
    $region2: #{tpu_custom_call.1} parent=1 // pred_check
      _
    $region3: #{tpu_custom_call.1} parent=1 // pred_check_branch
      %16 = sbr.rel (0) target = $region5
    $region4: #{tpu_custom_call.1} parent=1 // pred_region
      %s18 = ssub.s32 2048, 2048
      %19 = vsyncadd [#allocation4], %s18
      %s20 = sshll.u32 [#allocation3], 4
      %s21 = int_to_ptr.vmem [resolvable:$true] %s20
      %26 = dma.hbm_to_vmem [thread:$0]  %s0, 2048, %s21, [#allocation4], 64, 64, 4
    $region5: #{tpu_custom_call.1} parent=1 // pred_fallthru
      _
    // Predicated region
    $region6: #{tpu_custom_call.1} parent=1 // pred_check
      _
    $region7: #{tpu_custom_call.1} parent=1 // pred_check_branch
      %28 = sbr.rel (0) target = $region9
    $region8: #{tpu_custom_call.1} parent=1 // pred_region
      %s30 = ssub.s32 1024, 1024
      %31 = vsyncadd [#allocation7], %s30
      %s32 = sshll.u32 [#allocation6], 4
      %s33 = int_to_ptr.vmem [resolvable:$true] %s32
      %38 = dma.hbm_to_vmem [thread:$0]  %s1, 1024, %s33, [#allocation7], 64, 64, 4
    $region9: #{tpu_custom_call.1} parent=1 // pred_fallthru
      _
    // Predicated region
    $region10: #{tpu_custom_call.1} parent=1 // pred_check
      _
    $region11: #{tpu_custom_call.1} parent=1 // pred_check_branch
      %40 = sbr.rel (0) target = $region13
    $region12: #{tpu_custom_call.1} parent=1 // pred_region
      _
    $region13: #{tpu_custom_call.1} parent=1 // pred_fallthru
      _
    // Predicated region
    $region14: #{tpu_custom_call.1} parent=1 // pred_check
      _
    $region15: #{tpu_custom_call.1} parent=1 // pred_check_branch
      %42 = sbr.rel (0) target = $region17
    $region16: #{tpu_custom_call.1} parent=1 // pred_region
      _
    $region17: #{tpu_custom_call.1} parent=1 // pred_fallthru
      _
    // Predicated region
    $region18: #{tpu_custom_call.1} parent=1 // pred_check
      _
    $region19: #{tpu_custom_call.1} parent=1 // pred_check_branch
      %44 = sbr.rel (0) target = $region21
    $region20: #{tpu_custom_call.1} parent=1 // pred_region
      _
    $region21: #{tpu_custom_call.1} parent=1 // pred_fallthru
      _
    // Predicated region
    $region22: #{tpu_custom_call.1} parent=1 // pred_check
      _
    $region23: #{tpu_custom_call.1} parent=1 // pred_check_branch
      %46 = sbr.rel (0) target = $region25
    $region24: #{tpu_custom_call.1} parent=1 // pred_region
      %s48 = ssub.s32 2048, 2048
      %49 = vsyncadd [#allocation7], %s48
      %s50 = sshll.u32 [#allocation8], 4
      %s51 = int_to_ptr.vmem [resolvable:$true] %s50
      %56 = dma.hbm_to_vmem [thread:$0]  %s5, 2048, %s51, [#allocation7], 128, 128, 8
    $region25: #{tpu_custom_call.1} parent=1 // pred_fallthru
      _
    // Predicated region
    $region26: #{tpu_custom_call.1} parent=1 // pred_check
      _
    $region27: #{tpu_custom_call.1} parent=1 // pred_check_branch
      %58 = sbr.rel (0) target = $region29
    $region28: #{tpu_custom_call.1} parent=1 // pred_region
      _
    $region29: #{tpu_custom_call.1} parent=1 // pred_fallthru
      _
    // Predicated region
    $region30: #{tpu_custom_call.1} parent=1 // pred_check
      _
    $region31: #{tpu_custom_call.1} parent=1 // pred_check_branch
      %60 = sbr.rel (0) target = $region33
    $region32: #{tpu_custom_call.1} parent=1 // pred_region
      %61 = dma.done [#allocation4], 2048
    $region33: #{tpu_custom_call.1} parent=1 // pred_fallthru
      _
    // Predicated region
    $region34: #{tpu_custom_call.1} parent=1 // pred_check
      _
    $region35: #{tpu_custom_call.1} parent=1 // pred_check_branch
      %63 = sbr.rel (0) target = $region37
    $region36: #{tpu_custom_call.1} parent=1 // pred_region
      %64 = dma.done [#allocation7], 1024
    $region37: #{tpu_custom_call.1} parent=1 // pred_fallthru
      _
    // Predicated region
    $region38: #{tpu_custom_call.1} parent=1 // pred_check
      _
    $region39: #{tpu_custom_call.1} parent=1 // pred_check_branch
      %66 = sbr.rel (0) target = $region41
    $region40: #{tpu_custom_call.1} parent=1 // pred_region
      %67 = dma.done [#allocation7], 2048
    $region41: #{tpu_custom_call.1} parent=1 // pred_fallthru
      _
    %p69 = scmp.eq.s32.totalorder 0, 0
    // Predicated region
    $region42: #{tpu_custom_call.1} parent=1 // pred_check
      %p70 = pneg %p69
    $region43: #{tpu_custom_call.1} parent=1 // pred_check_branch
      %72 = sbr.rel (%p70) target = $region45
    $region44: #{tpu_custom_call.1} parent=1 // pred_region
      %v73 = vld [vmem:[#allocation3] sm:$0xf]
      %v74 = vld [vmem:[#allocation3 + $0x4] sm:$0xf]
      %v75 = vld [vmem:[#allocation3 + $0x8] sm:$0xf]
      %v76 = vld [vmem:[#allocation3 + $0xc] sm:$0xf]
      %v77 = vld [vmem:[#allocation3 + $0x10] sm:$0xf]
      %v78 = vld [vmem:[#allocation3 + $0x14] sm:$0xf]
      %v79 = vld [vmem:[#allocation3 + $0x18] sm:$0xf]
      %v80 = vld [vmem:[#allocation3 + $0x1c] sm:$0xf]
      %v81 = vld [vmem:[#allocation3 + $0x20] sm:$0xf]
      %v82 = vld [vmem:[#allocation3 + $0x24] sm:$0xf]
      %v83 = vld [vmem:[#allocation3 + $0x28] sm:$0xf]
      %v84 = vld [vmem:[#allocation3 + $0x2c] sm:$0xf]
      %v85 = vld [vmem:[#allocation3 + $0x30] sm:$0xf]
      %v86 = vld [vmem:[#allocation3 + $0x34] sm:$0xf]
      %v87 = vld [vmem:[#allocation3 + $0x38] sm:$0xf]
      %v88 = vld [vmem:[#allocation3 + $0x3c] sm:$0xf]
      %v89 = vld [vmem:[#allocation3 + $0x40] sm:$0xf]
      %v90 = vld [vmem:[#allocation3 + $0x44] sm:$0xf]
      %v91 = vld [vmem:[#allocation3 + $0x48] sm:$0xf]
      %v92 = vld [vmem:[#allocation3 + $0x4c] sm:$0xf]
      %v93 = vld [vmem:[#allocation3 + $0x50] sm:$0xf]
      %v94 = vld [vmem:[#allocation3 + $0x54] sm:$0xf]
      %v95 = vld [vmem:[#allocation3 + $0x58] sm:$0xf]
      %v96 = vld [vmem:[#allocation3 + $0x5c] sm:$0xf]
      %v97 = vld [vmem:[#allocation3 + $0x60] sm:$0xf]
      %v98 = vld [vmem:[#allocation3 + $0x64] sm:$0xf]
      %v99 = vld [vmem:[#allocation3 + $0x68] sm:$0xf]
      %v100 = vld [vmem:[#allocation3 + $0x6c] sm:$0xf]
      %v101 = vld [vmem:[#allocation3 + $0x70] sm:$0xf]
      %v102 = vld [vmem:[#allocation3 + $0x74] sm:$0xf]
      %v103 = vld [vmem:[#allocation3 + $0x78] sm:$0xf]
      %v104 = vld [vmem:[#allocation3 + $0x7c] sm:$0xf]
      %v105 = vld [vmem:[#allocation6] sm:$0xf]
      %v106 = vld [vmem:[#allocation6 + $0x4] sm:$0xf]
      %v107 = vld [vmem:[#allocation6 + $0x8] sm:$0xf]
      %v108 = vld [vmem:[#allocation6 + $0xc] sm:$0xf]
      %v109 = vld [vmem:[#allocation6 + $0x10] sm:$0xf]
      %v110 = vld [vmem:[#allocation6 + $0x14] sm:$0xf]
      %v111 = vld [vmem:[#allocation6 + $0x18] sm:$0xf]
      %v112 = vld [vmem:[#allocation6 + $0x1c] sm:$0xf]
      %v113 = vld [vmem:[#allocation6 + $0x20] sm:$0xf]
      %v114 = vld [vmem:[#allocation6 + $0x24] sm:$0xf]
      %v115 = vld [vmem:[#allocation6 + $0x28] sm:$0xf]
      %v116 = vld [vmem:[#allocation6 + $0x2c] sm:$0xf]
      %v117 = vld [vmem:[#allocation6 + $0x30] sm:$0xf]
      %v118 = vld [vmem:[#allocation6 + $0x34] sm:$0xf]
      %v119 = vld [vmem:[#allocation6 + $0x38] sm:$0xf]
      %v120 = vld [vmem:[#allocation6 + $0x3c] sm:$0xf]
      %v121 = vld [vmem:[%s2] sm:$0x1]
      %v123 = vlaneseq
      %v124 = vshrl.u32 %v123, 7
      %v125 = vsub.s32 0, %v124
      %v126 = vrot.slane %v121, %v125
      %v160 = vunpack.c.l.b16 %v73
      %v161 = vunpack.c.l.b16 %v74
      %v162 = vunpack.c.l.b16 %v75
      %v163 = vunpack.c.l.b16 %v76
      %v164 = vunpack.c.l.b16 %v77
      %v165 = vunpack.c.l.b16 %v78
      %v166 = vunpack.c.l.b16 %v79
      %v167 = vunpack.c.l.b16 %v80
      %v168 = vunpack.c.l.b16 %v81
      %v169 = vunpack.c.l.b16 %v82
      %v170 = vunpack.c.l.b16 %v83
      %v171 = vunpack.c.l.b16 %v84
      %v172 = vunpack.c.l.b16 %v85
      %v173 = vunpack.c.l.b16 %v86
      %v174 = vunpack.c.l.b16 %v87
      %v175 = vunpack.c.l.b16 %v88
      %v176 = vunpack.c.l.b16 %v89
      %v177 = vunpack.c.l.b16 %v90
      %v178 = vunpack.c.l.b16 %v91
      %v179 = vunpack.c.l.b16 %v92
      %v180 = vunpack.c.l.b16 %v93
      %v181 = vunpack.c.l.b16 %v94
      %v182 = vunpack.c.l.b16 %v95
      %v183 = vunpack.c.l.b16 %v96
      %v184 = vunpack.c.l.b16 %v97
      %v185 = vunpack.c.l.b16 %v98
      %v186 = vunpack.c.l.b16 %v99
      %v187 = vunpack.c.l.b16 %v100
      %v188 = vunpack.c.l.b16 %v101
      %v189 = vunpack.c.l.b16 %v102
      %v190 = vunpack.c.l.b16 %v103
      %v191 = vunpack.c.l.b16 %v104
      %v192 = vpack.c.b16 %v161, %v160
      %v193 = vpack.c.b16 %v163, %v162
      %v194 = vpack.c.b16 %v165, %v164
      %v195 = vpack.c.b16 %v167, %v166
      %v196 = vpack.c.b16 %v169, %v168
      %v197 = vpack.c.b16 %v171, %v170
      %v198 = vpack.c.b16 %v173, %v172
      %v199 = vpack.c.b16 %v175, %v174
      %v200 = vpack.c.b16 %v177, %v176
      %v201 = vpack.c.b16 %v179, %v178
      %v202 = vpack.c.b16 %v181, %v180
      %v203 = vpack.c.b16 %v183, %v182
      %v204 = vpack.c.b16 %v185, %v184
      %v205 = vpack.c.b16 %v187, %v186
      %v206 = vpack.c.b16 %v189, %v188
      %v207 = vpack.c.b16 %v191, %v190
      %v240 = vunpack.c.l.b16 %v105
      %v241 = vunpack.c.l.b16 %v106
      %v242 = vunpack.c.l.b16 %v107
      %v243 = vunpack.c.l.b16 %v108
      %v244 = vunpack.c.l.b16 %v109
      %v245 = vunpack.c.l.b16 %v110
      %v246 = vunpack.c.l.b16 %v111
      %v247 = vunpack.c.l.b16 %v112
      %v248 = vunpack.c.l.b16 %v113
      %v249 = vunpack.c.l.b16 %v114
      %v250 = vunpack.c.l.b16 %v115
      %v251 = vunpack.c.l.b16 %v116
      %v252 = vunpack.c.l.b16 %v117
      %v253 = vunpack.c.l.b16 %v118
      %v254 = vunpack.c.l.b16 %v119
      %v255 = vunpack.c.l.b16 %v120
      %v256 = vpack.c.b16 %v241, %v240
      %v257 = vpack.c.b16 %v243, %v242
      %v258 = vpack.c.b16 %v245, %v244
      %v259 = vpack.c.b16 %v247, %v246
      %v260 = vpack.c.b16 %v249, %v248
      %v261 = vpack.c.b16 %v251, %v250
      %v262 = vpack.c.b16 %v253, %v252
      %v263 = vpack.c.b16 %v255, %v254
      %272 = vmatprep.subr.bf16.mxu0 0
      %273 = vmatpush1.bf16.msra.mxu0 %v263
      %274 = vmatprep.subr.bf16.mxu0 0
      %275 = vmatpush1.bf16.msra.mxu0 %v262
      %276 = vmatprep.subr.bf16.mxu0 0
      %277 = vmatpush1.bf16.msra.mxu0 %v261
      %278 = vmatprep.subr.bf16.mxu0 0
      %279 = vmatpush1.bf16.msra.mxu0 %v260
      %280 = vmatprep.subr.bf16.mxu0 0
      %281 = vmatpush1.bf16.msra.mxu0 %v259
      %282 = vmatprep.subr.bf16.mxu0 0
      %283 = vmatpush1.bf16.msra.mxu0 %v258
      %284 = vmatprep.subr.bf16.mxu0 0
      %285 = vmatpush1.bf16.msra.mxu0 %v257
      %286 = vmatprep.subr.bf16.mxu0 0
      %287 = vmatpush1.bf16.msra.mxu0 %v256
      %288 = vmatprep.subr.bf16.mxu0 0
      %289 = vmatpush2.bf16.msra.mxu0 0
      %290 = vmatprep.subr.bf16.mxu0 0
      %291 = vmatpush2.bf16.msra.mxu0 0
      %292 = vmatprep.subr.bf16.mxu0 0
      %293 = vmatpush2.bf16.msra.mxu0 0
      %294 = vmatprep.subr.bf16.mxu0 0
      %295 = vmatpush2.bf16.msra.mxu0 0
      %296 = vmatprep.subr.bf16.mxu0 0
      %297 = vmatpush2.bf16.msra.mxu0 0
      %298 = vmatprep.subr.bf16.mxu0 0
      %299 = vmatpush2.bf16.msra.mxu0 0
      %300 = vmatprep.subr.bf16.mxu0 0
      %301 = vmatpush2.bf16.msra.mxu0 0
      %302 = vmatprep.subr.bf16.mxu0 0
      %303 = vmatpush2.bf16.msra.mxu0 0
      %304 = vmatprep.mubr.bf16.mxu0 0
      %305 = vmatmul.mubr.bf16.gmra.mxu0 %v192
      %v306 = vpop.f32.mrf.mxu0
      %v307 = vadd.f32 %v126, %v306
      %v308 = vpop.f32.mrf.mxu0
      %v309 = vpop.f32.mrf.mxu0
      %v310 = vadd.f32 %v126, %v309
      %v311 = vpop.f32.mrf.mxu0
      %312 = vmatprep.mubr.bf16.mxu0 0
      %313 = vmatmul.mubr.bf16.gmra.mxu0 %v193
      %v314 = vpop.f32.mrf.mxu0
      %v315 = vadd.f32 %v126, %v314
      %v316 = vpop.f32.mrf.mxu0
      %v317 = vpop.f32.mrf.mxu0
      %v318 = vadd.f32 %v126, %v317
      %v319 = vpop.f32.mrf.mxu0
      %320 = vmatprep.mubr.bf16.mxu0 0
      %321 = vmatmul.mubr.bf16.gmra.mxu0 %v194
      %v322 = vpop.f32.mrf.mxu0
      %v323 = vadd.f32 %v126, %v322
      %v324 = vpop.f32.mrf.mxu0
      %v325 = vpop.f32.mrf.mxu0
      %v326 = vadd.f32 %v126, %v325
      %v327 = vpop.f32.mrf.mxu0
      %328 = vmatprep.mubr.bf16.mxu0 0
      %329 = vmatmul.mubr.bf16.gmra.mxu0 %v195
      %v330 = vpop.f32.mrf.mxu0
      %v331 = vadd.f32 %v126, %v330
      %v332 = vpop.f32.mrf.mxu0
      %v333 = vpop.f32.mrf.mxu0
      %v334 = vadd.f32 %v126, %v333
      %v335 = vpop.f32.mrf.mxu0
      %336 = vmatprep.mubr.bf16.mxu0 0
      %337 = vmatmul.mubr.bf16.gmra.mxu0 %v196
      %v338 = vpop.f32.mrf.mxu0
      %v339 = vadd.f32 %v126, %v338
      %v340 = vpop.f32.mrf.mxu0
      %v341 = vpop.f32.mrf.mxu0
      %v342 = vadd.f32 %v126, %v341
      %v343 = vpop.f32.mrf.mxu0
      %344 = vmatprep.mubr.bf16.mxu0 0
      %345 = vmatmul.mubr.bf16.gmra.mxu0 %v197
      %v346 = vpop.f32.mrf.mxu0
      %v347 = vadd.f32 %v126, %v346
      %v348 = vpop.f32.mrf.mxu0
      %v349 = vpop.f32.mrf.mxu0
      %v350 = vadd.f32 %v126, %v349
      %v351 = vpop.f32.mrf.mxu0
      %352 = vmatprep.mubr.bf16.mxu0 0
      %353 = vmatmul.mubr.bf16.gmra.mxu0 %v198
      %v354 = vpop.f32.mrf.mxu0
      %v355 = vadd.f32 %v126, %v354
      %v356 = vpop.f32.mrf.mxu0
      %v357 = vpop.f32.mrf.mxu0
      %v358 = vadd.f32 %v126, %v357
      %v359 = vpop.f32.mrf.mxu0
      %360 = vmatprep.mubr.bf16.mxu0 0
      %361 = vmatmul.mubr.bf16.gmra.mxu0 %v199
      %v362 = vpop.f32.mrf.mxu0
      %v363 = vadd.f32 %v126, %v362
      %v364 = vpop.f32.mrf.mxu0
      %v365 = vpop.f32.mrf.mxu0
      %v366 = vadd.f32 %v126, %v365
      %v367 = vpop.f32.mrf.mxu0
      %368 = vmatprep.mubr.bf16.mxu0 0
      %369 = vmatmul.mubr.bf16.gmra.mxu0 %v200
      %v370 = vpop.f32.mrf.mxu0
      %v371 = vadd.f32 %v126, %v370
      %v372 = vpop.f32.mrf.mxu0
      %v373 = vpop.f32.mrf.mxu0
      %v374 = vadd.f32 %v126, %v373
      %v375 = vpop.f32.mrf.mxu0
      %376 = vmatprep.mubr.bf16.mxu0 0
      %377 = vmatmul.mubr.bf16.gmra.mxu0 %v201
      %v378 = vpop.f32.mrf.mxu0
      %v379 = vadd.f32 %v126, %v378
      %v380 = vpop.f32.mrf.mxu0
      %v381 = vpop.f32.mrf.mxu0
      %v382 = vadd.f32 %v126, %v381
      %v383 = vpop.f32.mrf.mxu0
      %384 = vmatprep.mubr.bf16.mxu0 0
      %385 = vmatmul.mubr.bf16.gmra.mxu0 %v202
      %v386 = vpop.f32.mrf.mxu0
      %v387 = vadd.f32 %v126, %v386
      %v388 = vpop.f32.mrf.mxu0
      %v389 = vpop.f32.mrf.mxu0
      %v390 = vadd.f32 %v126, %v389
      %v391 = vpop.f32.mrf.mxu0
      %392 = vmatprep.mubr.bf16.mxu0 0
      %393 = vmatmul.mubr.bf16.gmra.mxu0 %v203
      %v394 = vpop.f32.mrf.mxu0
      %v395 = vadd.f32 %v126, %v394
      %v396 = vpop.f32.mrf.mxu0
      %v397 = vpop.f32.mrf.mxu0
      %v398 = vadd.f32 %v126, %v397
      %v399 = vpop.f32.mrf.mxu0
      %400 = vmatprep.mubr.bf16.mxu0 0
      %401 = vmatmul.mubr.bf16.gmra.mxu0 %v204
      %v402 = vpop.f32.mrf.mxu0
      %v403 = vadd.f32 %v126, %v402
      %v404 = vpop.f32.mrf.mxu0
      %v405 = vpop.f32.mrf.mxu0
      %v406 = vadd.f32 %v126, %v405
      %v407 = vpop.f32.mrf.mxu0
      %408 = vmatprep.mubr.bf16.mxu0 0
      %409 = vmatmul.mubr.bf16.gmra.mxu0 %v205
      %v410 = vpop.f32.mrf.mxu0
      %v411 = vadd.f32 %v126, %v410
      %v412 = vpop.f32.mrf.mxu0
      %v413 = vpop.f32.mrf.mxu0
      %v414 = vadd.f32 %v126, %v413
      %v415 = vpop.f32.mrf.mxu0
      %416 = vmatprep.mubr.bf16.mxu0 0
      %417 = vmatmul.mubr.bf16.gmra.mxu0 %v206
      %v418 = vpop.f32.mrf.mxu0
      %v419 = vadd.f32 %v126, %v418
      %v420 = vpop.f32.mrf.mxu0
      %v421 = vpop.f32.mrf.mxu0
      %v422 = vadd.f32 %v126, %v421
      %v423 = vpop.f32.mrf.mxu0
      %424 = vmatprep.mubr.bf16.mxu0 0
      %425 = vmatmul.mubr.bf16.gmra.mxu0 %v207
      %v426 = vpop.f32.mrf.mxu0
      %v427 = vadd.f32 %v126, %v426
      %v428 = vpop.f32.mrf.mxu0
      %v429 = vpop.f32.mrf.mxu0
      %v430 = vadd.f32 %v126, %v429
      %v431 = vpop.f32.mrf.mxu0
      %432 = vdwg.mxu0
      %v433 = vmax.f32 %v307, 0.0
      %v434 = vmax.f32 %v310, 0.0
      %v435 = vmax.f32 %v315, 0.0
      %v436 = vmax.f32 %v318, 0.0
      %v437 = vmax.f32 %v323, 0.0
      %v438 = vmax.f32 %v326, 0.0
      %v439 = vmax.f32 %v331, 0.0
      %v440 = vmax.f32 %v334, 0.0
      %v441 = vmax.f32 %v339, 0.0
      %v442 = vmax.f32 %v342, 0.0
      %v443 = vmax.f32 %v347, 0.0
      %v444 = vmax.f32 %v350, 0.0
      %v445 = vmax.f32 %v355, 0.0
      %v446 = vmax.f32 %v358, 0.0
      %v447 = vmax.f32 %v363, 0.0
      %v448 = vmax.f32 %v366, 0.0
      %v449 = vmax.f32 %v371, 0.0
      %v450 = vmax.f32 %v374, 0.0
      %v451 = vmax.f32 %v379, 0.0
      %v452 = vmax.f32 %v382, 0.0
      %v453 = vmax.f32 %v387, 0.0
      %v454 = vmax.f32 %v390, 0.0
      %v455 = vmax.f32 %v395, 0.0
      %v456 = vmax.f32 %v398, 0.0
      %v457 = vmax.f32 %v403, 0.0
      %v458 = vmax.f32 %v406, 0.0
      %v459 = vmax.f32 %v411, 0.0
      %v460 = vmax.f32 %v414, 0.0
      %v461 = vmax.f32 %v419, 0.0
      %v462 = vmax.f32 %v422, 0.0
      %v463 = vmax.f32 %v427, 0.0
      %v464 = vmax.f32 %v430, 0.0
      %465 = vadd.xlane.f32.xlu0 %v433
      %v466 = vpop.xlane.xlu0 %465
      %467 = vadd.xlane.f32.xlu0 %v434
      %v468 = vpop.xlane.xlu0 %467
      %469 = vadd.xlane.f32.xlu0 %v435
      %v470 = vpop.xlane.xlu0 %469
      %471 = vadd.xlane.f32.xlu0 %v436
      %v472 = vpop.xlane.xlu0 %471
      %473 = vadd.xlane.f32.xlu0 %v437
      %v474 = vpop.xlane.xlu0 %473
      %475 = vadd.xlane.f32.xlu0 %v438
      %v476 = vpop.xlane.xlu0 %475
      %477 = vadd.xlane.f32.xlu0 %v439
      %v478 = vpop.xlane.xlu0 %477
      %479 = vadd.xlane.f32.xlu0 %v440
      %v480 = vpop.xlane.xlu0 %479
      %481 = vadd.xlane.f32.xlu0 %v441
      %v482 = vpop.xlane.xlu0 %481
      %483 = vadd.xlane.f32.xlu0 %v442
      %v484 = vpop.xlane.xlu0 %483
      %485 = vadd.xlane.f32.xlu0 %v443
      %v486 = vpop.xlane.xlu0 %485
      %487 = vadd.xlane.f32.xlu0 %v444
      %v488 = vpop.xlane.xlu0 %487
      %489 = vadd.xlane.f32.xlu0 %v445
      %v490 = vpop.xlane.xlu0 %489
      %491 = vadd.xlane.f32.xlu0 %v446
      %v492 = vpop.xlane.xlu0 %491
      %493 = vadd.xlane.f32.xlu0 %v447
      %v494 = vpop.xlane.xlu0 %493
      %495 = vadd.xlane.f32.xlu0 %v448
      %v496 = vpop.xlane.xlu0 %495
      %497 = vadd.xlane.f32.xlu0 %v449
      %v498 = vpop.xlane.xlu0 %497
      %499 = vadd.xlane.f32.xlu0 %v450
      %v500 = vpop.xlane.xlu0 %499
      %501 = vadd.xlane.f32.xlu0 %v451
      %v502 = vpop.xlane.xlu0 %501
      %503 = vadd.xlane.f32.xlu0 %v452
      %v504 = vpop.xlane.xlu0 %503
      %505 = vadd.xlane.f32.xlu0 %v453
      %v506 = vpop.xlane.xlu0 %505
      %507 = vadd.xlane.f32.xlu0 %v454
      %v508 = vpop.xlane.xlu0 %507
      %509 = vadd.xlane.f32.xlu0 %v455
      %v510 = vpop.xlane.xlu0 %509
      %511 = vadd.xlane.f32.xlu0 %v456
      %v512 = vpop.xlane.xlu0 %511
      %513 = vadd.xlane.f32.xlu0 %v457
      %v514 = vpop.xlane.xlu0 %513
      %515 = vadd.xlane.f32.xlu0 %v458
      %v516 = vpop.xlane.xlu0 %515
      %517 = vadd.xlane.f32.xlu0 %v459
      %v518 = vpop.xlane.xlu0 %517
      %519 = vadd.xlane.f32.xlu0 %v460
      %v520 = vpop.xlane.xlu0 %519
      %521 = vadd.xlane.f32.xlu0 %v461
      %v522 = vpop.xlane.xlu0 %521
      %523 = vadd.xlane.f32.xlu0 %v462
      %v524 = vpop.xlane.xlu0 %523
      %525 = vadd.xlane.f32.xlu0 %v463
      %v526 = vpop.xlane.xlu0 %525
      %527 = vadd.xlane.f32.xlu0 %v464
      %v528 = vpop.xlane.xlu0 %527
      %v529 = vrcp.pop 128.0
      %v530 = vmul.f32 %v466, %v529
      %v531 = vmul.f32 %v468, %v529
      %v532 = vmul.f32 %v470, %v529
      %v533 = vmul.f32 %v472, %v529
      %v534 = vmul.f32 %v474, %v529
      %v535 = vmul.f32 %v476, %v529
      %v536 = vmul.f32 %v478, %v529
      %v537 = vmul.f32 %v480, %v529
      %v538 = vmul.f32 %v482, %v529
      %v539 = vmul.f32 %v484, %v529
      %v540 = vmul.f32 %v486, %v529
      %v541 = vmul.f32 %v488, %v529
      %v542 = vmul.f32 %v490, %v529
      %v543 = vmul.f32 %v492, %v529
      %v544 = vmul.f32 %v494, %v529
      %v545 = vmul.f32 %v496, %v529
      %v546 = vmul.f32 %v498, %v529
      %v547 = vmul.f32 %v500, %v529
      %v548 = vmul.f32 %v502, %v529
      %v549 = vmul.f32 %v504, %v529
      %v550 = vmul.f32 %v506, %v529
      %v551 = vmul.f32 %v508, %v529
      %v552 = vmul.f32 %v510, %v529
      %v553 = vmul.f32 %v512, %v529
      %v554 = vmul.f32 %v514, %v529
      %v555 = vmul.f32 %v516, %v529
      %v556 = vmul.f32 %v518, %v529
      %v557 = vmul.f32 %v520, %v529
      %v558 = vmul.f32 %v522, %v529
      %v559 = vmul.f32 %v524, %v529
      %v560 = vmul.f32 %v526, %v529
      %v561 = vmul.f32 %v528, %v529
      %v562 = vsub.f32 %v433, %v530
      %v563 = vsub.f32 %v434, %v531
      %v564 = vsub.f32 %v435, %v532
      %v565 = vsub.f32 %v436, %v533
      %v566 = vsub.f32 %v437, %v534
      %v567 = vsub.f32 %v438, %v535
      %v568 = vsub.f32 %v439, %v536
      %v569 = vsub.f32 %v440, %v537
      %v570 = vsub.f32 %v441, %v538
      %v571 = vsub.f32 %v442, %v539
      %v572 = vsub.f32 %v443, %v540
      %v573 = vsub.f32 %v444, %v541
      %v574 = vsub.f32 %v445, %v542
      %v575 = vsub.f32 %v446, %v543
      %v576 = vsub.f32 %v447, %v544
      %v577 = vsub.f32 %v448, %v545
      %v578 = vsub.f32 %v449, %v546
      %v579 = vsub.f32 %v450, %v547
      %v580 = vsub.f32 %v451, %v548
      %v581 = vsub.f32 %v452, %v549
      %v582 = vsub.f32 %v453, %v550
      %v583 = vsub.f32 %v454, %v551
      %v584 = vsub.f32 %v455, %v552
      %v585 = vsub.f32 %v456, %v553
      %v586 = vsub.f32 %v457, %v554
      %v587 = vsub.f32 %v458, %v555
      %v588 = vsub.f32 %v459, %v556
      %v589 = vsub.f32 %v460, %v557
      %v590 = vsub.f32 %v461, %v558
      %v591 = vsub.f32 %v462, %v559
      %v592 = vsub.f32 %v463, %v560
      %v593 = vsub.f32 %v464, %v561
      %v594 = vmul.f32 %v562, %v562
      %v595 = vmul.f32 %v563, %v563
      %v596 = vmul.f32 %v564, %v564
      %v597 = vmul.f32 %v565, %v565
      %v598 = vmul.f32 %v566, %v566
      %v599 = vmul.f32 %v567, %v567
      %v600 = vmul.f32 %v568, %v568
      %v601 = vmul.f32 %v569, %v569
      %v602 = vmul.f32 %v570, %v570
      %v603 = vmul.f32 %v571, %v571
      %v604 = vmul.f32 %v572, %v572
      %v605 = vmul.f32 %v573, %v573
      %v606 = vmul.f32 %v574, %v574
      %v607 = vmul.f32 %v575, %v575
      %v608 = vmul.f32 %v576, %v576
      %v609 = vmul.f32 %v577, %v577
      %v610 = vmul.f32 %v578, %v578
      %v611 = vmul.f32 %v579, %v579
      %v612 = vmul.f32 %v580, %v580
      %v613 = vmul.f32 %v581, %v581
      %v614 = vmul.f32 %v582, %v582
      %v615 = vmul.f32 %v583, %v583
      %v616 = vmul.f32 %v584, %v584
      %v617 = vmul.f32 %v585, %v585
      %v618 = vmul.f32 %v586, %v586
      %v619 = vmul.f32 %v587, %v587
      %v620 = vmul.f32 %v588, %v588
      %v621 = vmul.f32 %v589, %v589
      %v622 = vmul.f32 %v590, %v590
      %v623 = vmul.f32 %v591, %v591
      %v624 = vmul.f32 %v592, %v592
      %v625 = vmul.f32 %v593, %v593
      %626 = vadd.xlane.f32.xlu0 %v594
      %v627 = vpop.xlane.xlu0 %626
      %628 = vadd.xlane.f32.xlu0 %v595
      %v629 = vpop.xlane.xlu0 %628
      %630 = vadd.xlane.f32.xlu0 %v596
      %v631 = vpop.xlane.xlu0 %630
      %632 = vadd.xlane.f32.xlu0 %v597
      %v633 = vpop.xlane.xlu0 %632
      %634 = vadd.xlane.f32.xlu0 %v598
      %v635 = vpop.xlane.xlu0 %634
      %636 = vadd.xlane.f32.xlu0 %v599
      %v637 = vpop.xlane.xlu0 %636
      %638 = vadd.xlane.f32.xlu0 %v600
      %v639 = vpop.xlane.xlu0 %638
      %640 = vadd.xlane.f32.xlu0 %v601
      %v641 = vpop.xlane.xlu0 %640
      %642 = vadd.xlane.f32.xlu0 %v602
      %v643 = vpop.xlane.xlu0 %642
      %644 = vadd.xlane.f32.xlu0 %v603
      %v645 = vpop.xlane.xlu0 %644
      %646 = vadd.xlane.f32.xlu0 %v604
      %v647 = vpop.xlane.xlu0 %646
      %648 = vadd.xlane.f32.xlu0 %v605
      %v649 = vpop.xlane.xlu0 %648
      %650 = vadd.xlane.f32.xlu0 %v606
      %v651 = vpop.xlane.xlu0 %650
      %652 = vadd.xlane.f32.xlu0 %v607
      %v653 = vpop.xlane.xlu0 %652
      %654 = vadd.xlane.f32.xlu0 %v608
      %v655 = vpop.xlane.xlu0 %654
      %656 = vadd.xlane.f32.xlu0 %v609
      %v657 = vpop.xlane.xlu0 %656
      %658 = vadd.xlane.f32.xlu0 %v610
      %v659 = vpop.xlane.xlu0 %658
      %660 = vadd.xlane.f32.xlu0 %v611
      %v661 = vpop.xlane.xlu0 %660
      %662 = vadd.xlane.f32.xlu0 %v612
      %v663 = vpop.xlane.xlu0 %662
      %664 = vadd.xlane.f32.xlu0 %v613
      %v665 = vpop.xlane.xlu0 %664
      %666 = vadd.xlane.f32.xlu0 %v614
      %v667 = vpop.xlane.xlu0 %666
      %668 = vadd.xlane.f32.xlu0 %v615
      %v669 = vpop.xlane.xlu0 %668
      %670 = vadd.xlane.f32.xlu0 %v616
      %v671 = vpop.xlane.xlu0 %670
      %672 = vadd.xlane.f32.xlu0 %v617
      %v673 = vpop.xlane.xlu0 %672
      %674 = vadd.xlane.f32.xlu0 %v618
      %v675 = vpop.xlane.xlu0 %674
      %676 = vadd.xlane.f32.xlu0 %v619
      %v677 = vpop.xlane.xlu0 %676
      %678 = vadd.xlane.f32.xlu0 %v620
      %v679 = vpop.xlane.xlu0 %678
      %680 = vadd.xlane.f32.xlu0 %v621
      %v681 = vpop.xlane.xlu0 %680
      %682 = vadd.xlane.f32.xlu0 %v622
      %v683 = vpop.xlane.xlu0 %682
      %684 = vadd.xlane.f32.xlu0 %v623
      %v685 = vpop.xlane.xlu0 %684
      %686 = vadd.xlane.f32.xlu0 %v624
      %v687 = vpop.xlane.xlu0 %686
      %688 = vadd.xlane.f32.xlu0 %v625
      %v689 = vpop.xlane.xlu0 %688
      %v690 = vmul.f32 %v627, %v529
      %v691 = vmul.f32 %v629, %v529
      %v692 = vmul.f32 %v631, %v529
      %v693 = vmul.f32 %v633, %v529
      %v694 = vmul.f32 %v635, %v529
      %v695 = vmul.f32 %v637, %v529
      %v696 = vmul.f32 %v639, %v529
      %v697 = vmul.f32 %v641, %v529
      %v698 = vmul.f32 %v643, %v529
      %v699 = vmul.f32 %v645, %v529
      %v700 = vmul.f32 %v647, %v529
      %v701 = vmul.f32 %v649, %v529
      %v702 = vmul.f32 %v651, %v529
      %v703 = vmul.f32 %v653, %v529
      %v704 = vmul.f32 %v655, %v529
      %v705 = vmul.f32 %v657, %v529
      %v706 = vmul.f32 %v659, %v529
      %v707 = vmul.f32 %v661, %v529
      %v708 = vmul.f32 %v663, %v529
      %v709 = vmul.f32 %v665, %v529
      %v710 = vmul.f32 %v667, %v529
      %v711 = vmul.f32 %v669, %v529
      %v712 = vmul.f32 %v671, %v529
      %v713 = vmul.f32 %v673, %v529
      %v714 = vmul.f32 %v675, %v529
      %v715 = vmul.f32 %v677, %v529
      %v716 = vmul.f32 %v679, %v529
      %v717 = vmul.f32 %v681, %v529
      %v718 = vmul.f32 %v683, %v529
      %v719 = vmul.f32 %v685, %v529
      %v720 = vmul.f32 %v687, %v529
      %v721 = vmul.f32 %v689, %v529
      %v722 = vadd.f32 %v690, 1e-06
      %v723 = vadd.f32 %v691, 1e-06
      %v724 = vadd.f32 %v692, 1e-06
      %v725 = vadd.f32 %v693, 1e-06
      %v726 = vadd.f32 %v694, 1e-06
      %v727 = vadd.f32 %v695, 1e-06
      %v728 = vadd.f32 %v696, 1e-06
      %v729 = vadd.f32 %v697, 1e-06
      %v730 = vadd.f32 %v698, 1e-06
      %v731 = vadd.f32 %v699, 1e-06
      %v732 = vadd.f32 %v700, 1e-06
      %v733 = vadd.f32 %v701, 1e-06
      %v734 = vadd.f32 %v702, 1e-06
      %v735 = vadd.f32 %v703, 1e-06
      %v736 = vadd.f32 %v704, 1e-06
      %v737 = vadd.f32 %v705, 1e-06
      %v738 = vadd.f32 %v706, 1e-06
      %v739 = vadd.f32 %v707, 1e-06
      %v740 = vadd.f32 %v708, 1e-06
      %v741 = vadd.f32 %v709, 1e-06
      %v742 = vadd.f32 %v710, 1e-06
      %v743 = vadd.f32 %v711, 1e-06
      %v744 = vadd.f32 %v712, 1e-06
      %v745 = vadd.f32 %v713, 1e-06
      %v746 = vadd.f32 %v714, 1e-06
      %v747 = vadd.f32 %v715, 1e-06
      %v748 = vadd.f32 %v716, 1e-06
      %v749 = vadd.f32 %v717, 1e-06
      %v750 = vadd.f32 %v718, 1e-06
      %v751 = vadd.f32 %v719, 1e-06
      %v752 = vadd.f32 %v720, 1e-06
      %v753 = vadd.f32 %v721, 1e-06
      %v754 = vrsqrt.pop %v722
      %v755 = vrsqrt.pop %v723
      %v756 = vrsqrt.pop %v724
      %v757 = vrsqrt.pop %v725
      %v758 = vrsqrt.pop %v726
      %v759 = vrsqrt.pop %v727
      %v760 = vrsqrt.pop %v728
      %v761 = vrsqrt.pop %v729
      %v762 = vrsqrt.pop %v730
      %v763 = vrsqrt.pop %v731
      %v764 = vrsqrt.pop %v732
      %v765 = vrsqrt.pop %v733
      %v766 = vrsqrt.pop %v734
      %v767 = vrsqrt.pop %v735
      %v768 = vrsqrt.pop %v736
      %v769 = vrsqrt.pop %v737
      %v770 = vrsqrt.pop %v738
      %v771 = vrsqrt.pop %v739
      %v772 = vrsqrt.pop %v740
      %v773 = vrsqrt.pop %v741
      %v774 = vrsqrt.pop %v742
      %v775 = vrsqrt.pop %v743
      %v776 = vrsqrt.pop %v744
      %v777 = vrsqrt.pop %v745
      %v778 = vrsqrt.pop %v746
      %v779 = vrsqrt.pop %v747
      %v780 = vrsqrt.pop %v748
      %v781 = vrsqrt.pop %v749
      %v782 = vrsqrt.pop %v750
      %v783 = vrsqrt.pop %v751
      %v784 = vrsqrt.pop %v752
      %v785 = vrsqrt.pop %v753
      %v786 = vmul.f32 %v562, %v754
      %v787 = vmul.f32 %v563, %v755
      %v788 = vmul.f32 %v564, %v756
      %v789 = vmul.f32 %v565, %v757
      %v790 = vmul.f32 %v566, %v758
      %v791 = vmul.f32 %v567, %v759
      %v792 = vmul.f32 %v568, %v760
      %v793 = vmul.f32 %v569, %v761
      %v794 = vmul.f32 %v570, %v762
      %v795 = vmul.f32 %v571, %v763
      %v796 = vmul.f32 %v572, %v764
      %v797 = vmul.f32 %v573, %v765
      %v798 = vmul.f32 %v574, %v766
      %v799 = vmul.f32 %v575, %v767
      %v800 = vmul.f32 %v576, %v768
      %v801 = vmul.f32 %v577, %v769
      %v802 = vmul.f32 %v578, %v770
      %v803 = vmul.f32 %v579, %v771
      %v804 = vmul.f32 %v580, %v772
      %v805 = vmul.f32 %v581, %v773
      %v806 = vmul.f32 %v582, %v774
      %v807 = vmul.f32 %v583, %v775
      %v808 = vmul.f32 %v584, %v776
      %v809 = vmul.f32 %v585, %v777
      %v810 = vmul.f32 %v586, %v778
      %v811 = vmul.f32 %v587, %v779
      %v812 = vmul.f32 %v588, %v780
      %v813 = vmul.f32 %v589, %v781
      %v814 = vmul.f32 %v590, %v782
      %v815 = vmul.f32 %v591, %v783
      %v816 = vmul.f32 %v592, %v784
      %v817 = vmul.f32 %v593, %v785
      %v818 = vld [vmem:[%s3] sm:$0x1]
      %v820 = vlaneseq
      %v821 = vshrl.u32 %v820, 7
      %v822 = vsub.s32 0, %v821
      %v823 = vrot.slane %v818, %v822
      %v825 = vmul.f32 %v786, %v823
      %v826 = vmul.f32 %v787, %v823
      %v827 = vmul.f32 %v788, %v823
      %v828 = vmul.f32 %v789, %v823
      %v829 = vmul.f32 %v790, %v823
      %v830 = vmul.f32 %v791, %v823
      %v831 = vmul.f32 %v792, %v823
      %v832 = vmul.f32 %v793, %v823
      %v833 = vmul.f32 %v794, %v823
      %v834 = vmul.f32 %v795, %v823
      %v835 = vmul.f32 %v796, %v823
      %v836 = vmul.f32 %v797, %v823
      %v837 = vmul.f32 %v798, %v823
      %v838 = vmul.f32 %v799, %v823
      %v839 = vmul.f32 %v800, %v823
      %v840 = vmul.f32 %v801, %v823
      %v841 = vmul.f32 %v802, %v823
      %v842 = vmul.f32 %v803, %v823
      %v843 = vmul.f32 %v804, %v823
      %v844 = vmul.f32 %v805, %v823
      %v845 = vmul.f32 %v806, %v823
      %v846 = vmul.f32 %v807, %v823
      %v847 = vmul.f32 %v808, %v823
      %v848 = vmul.f32 %v809, %v823
      %v849 = vmul.f32 %v810, %v823
      %v850 = vmul.f32 %v811, %v823
      %v851 = vmul.f32 %v812, %v823
      %v852 = vmul.f32 %v813, %v823
      %v853 = vmul.f32 %v814, %v823
      %v854 = vmul.f32 %v815, %v823
      %v855 = vmul.f32 %v816, %v823
      %v856 = vmul.f32 %v817, %v823
      %v857 = vld [vmem:[%s4] sm:$0x1]
      %v859 = vlaneseq
      %v860 = vshrl.u32 %v859, 7
      %v861 = vsub.s32 0, %v860
      %v862 = vrot.slane %v857, %v861
      %v864 = vadd.f32 %v825, %v862
      %v865 = vadd.f32 %v826, %v862
      %v866 = vadd.f32 %v827, %v862
      %v867 = vadd.f32 %v828, %v862
      %v868 = vadd.f32 %v829, %v862
      %v869 = vadd.f32 %v830, %v862
      %v870 = vadd.f32 %v831, %v862
      %v871 = vadd.f32 %v832, %v862
      %v872 = vadd.f32 %v833, %v862
      %v873 = vadd.f32 %v834, %v862
      %v874 = vadd.f32 %v835, %v862
      %v875 = vadd.f32 %v836, %v862
      %v876 = vadd.f32 %v837, %v862
      %v877 = vadd.f32 %v838, %v862
      %v878 = vadd.f32 %v839, %v862
      %v879 = vadd.f32 %v840, %v862
      %v880 = vadd.f32 %v841, %v862
      %v881 = vadd.f32 %v842, %v862
      %v882 = vadd.f32 %v843, %v862
      %v883 = vadd.f32 %v844, %v862
      %v884 = vadd.f32 %v845, %v862
      %v885 = vadd.f32 %v846, %v862
      %v886 = vadd.f32 %v847, %v862
      %v887 = vadd.f32 %v848, %v862
      %v888 = vadd.f32 %v849, %v862
      %v889 = vadd.f32 %v850, %v862
      %v890 = vadd.f32 %v851, %v862
      %v891 = vadd.f32 %v852, %v862
      %v892 = vadd.f32 %v853, %v862
      %v893 = vadd.f32 %v854, %v862
      %v894 = vadd.f32 %v855, %v862
      %v895 = vadd.f32 %v856, %v862
      %v896 = vpack.c.bf16 %v865, %v864
      %v897 = vpack.c.bf16 %v867, %v866
      %v898 = vpack.c.bf16 %v869, %v868
      %v899 = vpack.c.bf16 %v871, %v870
      %v900 = vpack.c.bf16 %v873, %v872
      %v901 = vpack.c.bf16 %v875, %v874
      %v902 = vpack.c.bf16 %v877, %v876
      %v903 = vpack.c.bf16 %v879, %v878
      %v904 = vpack.c.bf16 %v881, %v880
      %v905 = vpack.c.bf16 %v883, %v882
      %v906 = vpack.c.bf16 %v885, %v884
      %v907 = vpack.c.bf16 %v887, %v886
      %v908 = vpack.c.bf16 %v889, %v888
      %v909 = vpack.c.bf16 %v891, %v890
      %v910 = vpack.c.bf16 %v893, %v892
      %v911 = vpack.c.bf16 %v895, %v894
      %v928 = vunpack.c.l.b16 %v896
      %v929 = vunpack.c.h.b16 %v896
      %v930 = vunpack.c.l.b16 %v897
      %v931 = vunpack.c.h.b16 %v897
      %v932 = vunpack.c.l.b16 %v898
      %v933 = vunpack.c.h.b16 %v898
      %v934 = vunpack.c.l.b16 %v899
      %v935 = vunpack.c.h.b16 %v899
      %v936 = vunpack.c.l.b16 %v900
      %v937 = vunpack.c.h.b16 %v900
      %v938 = vunpack.c.l.b16 %v901
      %v939 = vunpack.c.h.b16 %v901
      %v940 = vunpack.c.l.b16 %v902
      %v941 = vunpack.c.h.b16 %v902
      %v942 = vunpack.c.l.b16 %v903
      %v943 = vunpack.c.h.b16 %v903
      %v944 = vunpack.c.l.b16 %v904
      %v945 = vunpack.c.h.b16 %v904
      %v946 = vunpack.c.l.b16 %v905
      %v947 = vunpack.c.h.b16 %v905
      %v948 = vunpack.c.l.b16 %v906
      %v949 = vunpack.c.h.b16 %v906
      %v950 = vunpack.c.l.b16 %v907
      %v951 = vunpack.c.h.b16 %v907
      %v952 = vunpack.c.l.b16 %v908
      %v953 = vunpack.c.h.b16 %v908
      %v954 = vunpack.c.l.b16 %v909
      %v955 = vunpack.c.h.b16 %v909
      %v956 = vunpack.c.l.b16 %v910
      %v957 = vunpack.c.h.b16 %v910
      %v958 = vunpack.c.l.b16 %v911
      %v959 = vunpack.c.h.b16 %v911
      %v960 = vpack.c.b16 %v928, %v928
      %v961 = vpack.c.b16 %v929, %v929
      %v962 = vpack.c.b16 %v930, %v930
      %v963 = vpack.c.b16 %v931, %v931
      %v964 = vpack.c.b16 %v932, %v932
      %v965 = vpack.c.b16 %v933, %v933
      %v966 = vpack.c.b16 %v934, %v934
      %v967 = vpack.c.b16 %v935, %v935
      %v968 = vpack.c.b16 %v936, %v936
      %v969 = vpack.c.b16 %v937, %v937
      %v970 = vpack.c.b16 %v938, %v938
      %v971 = vpack.c.b16 %v939, %v939
      %v972 = vpack.c.b16 %v940, %v940
      %v973 = vpack.c.b16 %v941, %v941
      %v974 = vpack.c.b16 %v942, %v942
      %v975 = vpack.c.b16 %v943, %v943
      %v976 = vpack.c.b16 %v944, %v944
      %v977 = vpack.c.b16 %v945, %v945
      %v978 = vpack.c.b16 %v946, %v946
      %v979 = vpack.c.b16 %v947, %v947
      %v980 = vpack.c.b16 %v948, %v948
      %v981 = vpack.c.b16 %v949, %v949
      %v982 = vpack.c.b16 %v950, %v950
      %v983 = vpack.c.b16 %v951, %v951
      %v984 = vpack.c.b16 %v952, %v952
      %v985 = vpack.c.b16 %v953, %v953
      %v986 = vpack.c.b16 %v954, %v954
      %v987 = vpack.c.b16 %v955, %v955
      %v988 = vpack.c.b16 %v956, %v956
      %v989 = vpack.c.b16 %v957, %v957
      %v990 = vpack.c.b16 %v958, %v958
      %v991 = vpack.c.b16 %v959, %v959
      %1024 = vst [vmem:[#allocation2] sm:$0xf] %v960
      %1025 = vst [vmem:[#allocation2 + $0x4] sm:$0xf] %v961
      %1026 = vst [vmem:[#allocation2 + $0x8] sm:$0xf] %v962
      %1027 = vst [vmem:[#allocation2 + $0xc] sm:$0xf] %v963
      %1028 = vst [vmem:[#allocation2 + $0x10] sm:$0xf] %v964
      %1029 = vst [vmem:[#allocation2 + $0x14] sm:$0xf] %v965
      %1030 = vst [vmem:[#allocation2 + $0x18] sm:$0xf] %v966
      %1031 = vst [vmem:[#allocation2 + $0x1c] sm:$0xf] %v967
      %1032 = vst [vmem:[#allocation2 + $0x20] sm:$0xf] %v968
      %1033 = vst [vmem:[#allocation2 + $0x24] sm:$0xf] %v969
      %1034 = vst [vmem:[#allocation2 + $0x28] sm:$0xf] %v970
      %1035 = vst [vmem:[#allocation2 + $0x2c] sm:$0xf] %v971
      %1036 = vst [vmem:[#allocation2 + $0x30] sm:$0xf] %v972
      %1037 = vst [vmem:[#allocation2 + $0x34] sm:$0xf] %v973
      %1038 = vst [vmem:[#allocation2 + $0x38] sm:$0xf] %v974
      %1039 = vst [vmem:[#allocation2 + $0x3c] sm:$0xf] %v975
      %1040 = vst [vmem:[#allocation2 + $0x40] sm:$0xf] %v976
      %1041 = vst [vmem:[#allocation2 + $0x44] sm:$0xf] %v977
      %1042 = vst [vmem:[#allocation2 + $0x48] sm:$0xf] %v978
      %1043 = vst [vmem:[#allocation2 + $0x4c] sm:$0xf] %v979
      %1044 = vst [vmem:[#allocation2 + $0x50] sm:$0xf] %v980
      %1045 = vst [vmem:[#allocation2 + $0x54] sm:$0xf] %v981
      %1046 = vst [vmem:[#allocation2 + $0x58] sm:$0xf] %v982
      %1047 = vst [vmem:[#allocation2 + $0x5c] sm:$0xf] %v983
      %1048 = vst [vmem:[#allocation2 + $0x60] sm:$0xf] %v984
      %1049 = vst [vmem:[#allocation2 + $0x64] sm:$0xf] %v985
      %1050 = vst [vmem:[#allocation2 + $0x68] sm:$0xf] %v986
      %1051 = vst [vmem:[#allocation2 + $0x6c] sm:$0xf] %v987
      %1052 = vst [vmem:[#allocation2 + $0x70] sm:$0xf] %v988
      %1053 = vst [vmem:[#allocation2 + $0x74] sm:$0xf] %v989
      %1054 = vst [vmem:[#allocation2 + $0x78] sm:$0xf] %v990
      %1055 = vst [vmem:[#allocation2 + $0x7c] sm:$0xf] %v991
    $region45: #{tpu_custom_call.1} parent=1 // pred_fallthru
      _
    %v1056 = vld [vmem:[#allocation2] sm:$0xf]
    %v1057 = vld [vmem:[#allocation2 + $0x4] sm:$0xf]
    %v1058 = vld [vmem:[#allocation2 + $0x8] sm:$0xf]
    %v1059 = vld [vmem:[#allocation2 + $0xc] sm:$0xf]
    %v1060 = vld [vmem:[#allocation2 + $0x10] sm:$0xf]
    %v1061 = vld [vmem:[#allocation2 + $0x14] sm:$0xf]
    %v1062 = vld [vmem:[#allocation2 + $0x18] sm:$0xf]
    %v1063 = vld [vmem:[#allocation2 + $0x1c] sm:$0xf]
    %v1064 = vld [vmem:[#allocation2 + $0x20] sm:$0xf]
    %v1065 = vld [vmem:[#allocation2 + $0x24] sm:$0xf]
    %v1066 = vld [vmem:[#allocation2 + $0x28] sm:$0xf]
    %v1067 = vld [vmem:[#allocation2 + $0x2c] sm:$0xf]
    %v1068 = vld [vmem:[#allocation2 + $0x30] sm:$0xf]
    %v1069 = vld [vmem:[#allocation2 + $0x34] sm:$0xf]
    %v1070 = vld [vmem:[#allocation2 + $0x38] sm:$0xf]
    %v1071 = vld [vmem:[#allocation2 + $0x3c] sm:$0xf]
    %v1072 = vld [vmem:[#allocation2 + $0x40] sm:$0xf]
    %v1073 = vld [vmem:[#allocation2 + $0x44] sm:$0xf]
    %v1074 = vld [vmem:[#allocation2 + $0x48] sm:$0xf]
    %v1075 = vld [vmem:[#allocation2 + $0x4c] sm:$0xf]
    %v1076 = vld [vmem:[#allocation2 + $0x50] sm:$0xf]
    %v1077 = vld [vmem:[#allocation2 + $0x54] sm:$0xf]
    %v1078 = vld [vmem:[#allocation2 + $0x58] sm:$0xf]
    %v1079 = vld [vmem:[#allocation2 + $0x5c] sm:$0xf]
    %v1080 = vld [vmem:[#allocation2 + $0x60] sm:$0xf]
    %v1081 = vld [vmem:[#allocation2 + $0x64] sm:$0xf]
    %v1082 = vld [vmem:[#allocation2 + $0x68] sm:$0xf]
    %v1083 = vld [vmem:[#allocation2 + $0x6c] sm:$0xf]
    %v1084 = vld [vmem:[#allocation2 + $0x70] sm:$0xf]
    %v1085 = vld [vmem:[#allocation2 + $0x74] sm:$0xf]
    %v1086 = vld [vmem:[#allocation2 + $0x78] sm:$0xf]
    %v1087 = vld [vmem:[#allocation2 + $0x7c] sm:$0xf]
    %v1088 = vld [vmem:[#allocation8] sm:$0xff]
    %v1089 = vld [vmem:[#allocation8 + $0x8] sm:$0xff]
    %v1090 = vld [vmem:[#allocation8 + $0x10] sm:$0xff]
    %v1091 = vld [vmem:[#allocation8 + $0x18] sm:$0xff]
    %v1092 = vld [vmem:[#allocation8 + $0x20] sm:$0xff]
    %v1093 = vld [vmem:[#allocation8 + $0x28] sm:$0xff]
    %v1094 = vld [vmem:[#allocation8 + $0x30] sm:$0xff]
    %v1095 = vld [vmem:[#allocation8 + $0x38] sm:$0xff]
    %v1096 = vld [vmem:[#allocation8 + $0x40] sm:$0xff]
    %v1097 = vld [vmem:[#allocation8 + $0x48] sm:$0xff]
    %v1098 = vld [vmem:[#allocation8 + $0x50] sm:$0xff]
    %v1099 = vld [vmem:[#allocation8 + $0x58] sm:$0xff]
    %v1100 = vld [vmem:[#allocation8 + $0x60] sm:$0xff]
    %v1101 = vld [vmem:[#allocation8 + $0x68] sm:$0xff]
    %v1102 = vld [vmem:[#allocation8 + $0x70] sm:$0xff]
    %v1103 = vld [vmem:[#allocation8 + $0x78] sm:$0xff]
    %v1104 = vld [vmem:[%s6] sm:$0x3]
    %v1106 = vlaneseq
    %v1107 = vshrl.u32 %v1106, 7
    %v1108 = vsub.s32 0, %v1107
    %v1109 = vrot.slane %v1104, %v1108
    %v1110 = vlaneseq
    %v1111 = vshrl.u32 %v1110, 7
    %v1112 = vsub.s32 1, %v1111
    %v1113 = vrot.slane %v1104, %v1112
    %v1148 = vunpack.c.l.b16 %v1056
    %v1149 = vunpack.c.l.b16 %v1057
    %v1150 = vunpack.c.l.b16 %v1058
    %v1151 = vunpack.c.l.b16 %v1059
    %v1152 = vunpack.c.l.b16 %v1060
    %v1153 = vunpack.c.l.b16 %v1061
    %v1154 = vunpack.c.l.b16 %v1062
    %v1155 = vunpack.c.l.b16 %v1063
    %v1156 = vunpack.c.l.b16 %v1064
    %v1157 = vunpack.c.l.b16 %v1065
    %v1158 = vunpack.c.l.b16 %v1066
    %v1159 = vunpack.c.l.b16 %v1067
    %v1160 = vunpack.c.l.b16 %v1068
    %v1161 = vunpack.c.l.b16 %v1069
    %v1162 = vunpack.c.l.b16 %v1070
    %v1163 = vunpack.c.l.b16 %v1071
    %v1164 = vunpack.c.l.b16 %v1072
    %v1165 = vunpack.c.l.b16 %v1073
    %v1166 = vunpack.c.l.b16 %v1074
    %v1167 = vunpack.c.l.b16 %v1075
    %v1168 = vunpack.c.l.b16 %v1076
    %v1169 = vunpack.c.l.b16 %v1077
    %v1170 = vunpack.c.l.b16 %v1078
    %v1171 = vunpack.c.l.b16 %v1079
    %v1172 = vunpack.c.l.b16 %v1080
    %v1173 = vunpack.c.l.b16 %v1081
    %v1174 = vunpack.c.l.b16 %v1082
    %v1175 = vunpack.c.l.b16 %v1083
    %v1176 = vunpack.c.l.b16 %v1084
    %v1177 = vunpack.c.l.b16 %v1085
    %v1178 = vunpack.c.l.b16 %v1086
    %v1179 = vunpack.c.l.b16 %v1087
    %v1180 = vpack.c.b16 %v1149, %v1148
    %v1181 = vpack.c.b16 %v1151, %v1150
    %v1182 = vpack.c.b16 %v1153, %v1152
    %v1183 = vpack.c.b16 %v1155, %v1154
    %v1184 = vpack.c.b16 %v1157, %v1156
    %v1185 = vpack.c.b16 %v1159, %v1158
    %v1186 = vpack.c.b16 %v1161, %v1160
    %v1187 = vpack.c.b16 %v1163, %v1162
    %v1188 = vpack.c.b16 %v1165, %v1164
    %v1189 = vpack.c.b16 %v1167, %v1166
    %v1190 = vpack.c.b16 %v1169, %v1168
    %v1191 = vpack.c.b16 %v1171, %v1170
    %v1192 = vpack.c.b16 %v1173, %v1172
    %v1193 = vpack.c.b16 %v1175, %v1174
    %v1194 = vpack.c.b16 %v1177, %v1176
    %v1195 = vpack.c.b16 %v1179, %v1178
    %v1228 = vunpack.c.l.b16 %v1088
    %v1229 = vunpack.c.h.b16 %v1088
    %v1230 = vunpack.c.l.b16 %v1089
    %v1231 = vunpack.c.h.b16 %v1089
    %v1232 = vunpack.c.l.b16 %v1090
    %v1233 = vunpack.c.h.b16 %v1090
    %v1234 = vunpack.c.l.b16 %v1091
    %v1235 = vunpack.c.h.b16 %v1091
    %v1236 = vunpack.c.l.b16 %v1092
    %v1237 = vunpack.c.h.b16 %v1092
    %v1238 = vunpack.c.l.b16 %v1093
    %v1239 = vunpack.c.h.b16 %v1093
    %v1240 = vunpack.c.l.b16 %v1094
    %v1241 = vunpack.c.h.b16 %v1094
    %v1242 = vunpack.c.l.b16 %v1095
    %v1243 = vunpack.c.h.b16 %v1095
    %v1244 = vunpack.c.l.b16 %v1096
    %v1245 = vunpack.c.h.b16 %v1096
    %v1246 = vunpack.c.l.b16 %v1097
    %v1247 = vunpack.c.h.b16 %v1097
    %v1248 = vunpack.c.l.b16 %v1098
    %v1249 = vunpack.c.h.b16 %v1098
    %v1250 = vunpack.c.l.b16 %v1099
    %v1251 = vunpack.c.h.b16 %v1099
    %v1252 = vunpack.c.l.b16 %v1100
    %v1253 = vunpack.c.h.b16 %v1100
    %v1254 = vunpack.c.l.b16 %v1101
    %v1255 = vunpack.c.h.b16 %v1101
    %v1256 = vunpack.c.l.b16 %v1102
    %v1257 = vunpack.c.h.b16 %v1102
    %v1258 = vunpack.c.l.b16 %v1103
    %v1259 = vunpack.c.h.b16 %v1103
    %v1260 = vpack.c.b16 %v1230, %v1228
    %v1261 = vpack.c.b16 %v1231, %v1229
    %v1262 = vpack.c.b16 %v1234, %v1232
    %v1263 = vpack.c.b16 %v1235, %v1233
    %v1264 = vpack.c.b16 %v1238, %v1236
    %v1265 = vpack.c.b16 %v1239, %v1237
    %v1266 = vpack.c.b16 %v1242, %v1240
    %v1267 = vpack.c.b16 %v1243, %v1241
    %v1268 = vpack.c.b16 %v1246, %v1244
    %v1269 = vpack.c.b16 %v1247, %v1245
    %v1270 = vpack.c.b16 %v1250, %v1248
    %v1271 = vpack.c.b16 %v1251, %v1249
    %v1272 = vpack.c.b16 %v1254, %v1252
    %v1273 = vpack.c.b16 %v1255, %v1253
    %v1274 = vpack.c.b16 %v1258, %v1256
    %v1275 = vpack.c.b16 %v1259, %v1257
    %1292 = vmatprep.subr.bf16.mxu0 %v1275
    %1293 = vmatpush1.bf16.msra.mxu0 %v1274
    %1294 = vmatprep.subr.bf16.mxu0 %v1273
    %1295 = vmatpush1.bf16.msra.mxu0 %v1272
    %1296 = vmatprep.subr.bf16.mxu0 %v1271
    %1297 = vmatpush1.bf16.msra.mxu0 %v1270
    %1298 = vmatprep.subr.bf16.mxu0 %v1269
    %1299 = vmatpush1.bf16.msra.mxu0 %v1268
    %1300 = vmatprep.subr.bf16.mxu0 %v1267
    %1301 = vmatpush1.bf16.msra.mxu0 %v1266
    %1302 = vmatprep.subr.bf16.mxu0 %v1265
    %1303 = vmatpush1.bf16.msra.mxu0 %v1264
    %1304 = vmatprep.subr.bf16.mxu0 %v1263
    %1305 = vmatpush1.bf16.msra.mxu0 %v1262
    %1306 = vmatprep.subr.bf16.mxu0 %v1261
    %1307 = vmatpush1.bf16.msra.mxu0 %v1260
    %1308 = vmatprep.subr.bf16.mxu0 0
    %1309 = vmatpush2.bf16.msra.mxu0 0
    %1310 = vmatprep.subr.bf16.mxu0 0
    %1311 = vmatpush2.bf16.msra.mxu0 0
    %1312 = vmatprep.subr.bf16.mxu0 0
    %1313 = vmatpush2.bf16.msra.mxu0 0
    %1314 = vmatprep.subr.bf16.mxu0 0
    %1315 = vmatpush2.bf16.msra.mxu0 0
    %1316 = vmatprep.subr.bf16.mxu0 0
    %1317 = vmatpush2.bf16.msra.mxu0 0
    %1318 = vmatprep.subr.bf16.mxu0 0
    %1319 = vmatpush2.bf16.msra.mxu0 0
    %1320 = vmatprep.subr.bf16.mxu0 0
    %1321 = vmatpush2.bf16.msra.mxu0 0
    %1322 = vmatprep.subr.bf16.mxu0 0
    %1323 = vmatpush2.bf16.msra.mxu0 0
    %1324 = vmatprep.mubr.bf16.mxu0 0
    %1325 = vmatmul.mubr.bf16.gmra.mxu0 %v1180
    %v1326 = vpop.f32.mrf.mxu0
    %v1327 = vadd.f32 %v1109, %v1326
    %v1328 = vpop.f32.mrf.mxu0
    %v1329 = vadd.f32 %v1113, %v1328
    %v1330 = vpop.f32.mrf.mxu0
    %v1331 = vadd.f32 %v1109, %v1330
    %v1332 = vpop.f32.mrf.mxu0
    %v1333 = vadd.f32 %v1113, %v1332
    %1334 = vmatprep.mubr.bf16.mxu0 0
    %1335 = vmatmul.mubr.bf16.gmra.mxu0 %v1181
    %v1336 = vpop.f32.mrf.mxu0
    %v1337 = vadd.f32 %v1109, %v1336
    %v1338 = vpop.f32.mrf.mxu0
    %v1339 = vadd.f32 %v1113, %v1338
    %v1340 = vpop.f32.mrf.mxu0
    %v1341 = vadd.f32 %v1109, %v1340
    %v1342 = vpop.f32.mrf.mxu0
    %v1343 = vadd.f32 %v1113, %v1342
    %1344 = vmatprep.mubr.bf16.mxu0 0
    %1345 = vmatmul.mubr.bf16.gmra.mxu0 %v1182
    %v1346 = vpop.f32.mrf.mxu0
    %v1347 = vadd.f32 %v1109, %v1346
    %v1348 = vpop.f32.mrf.mxu0
    %v1349 = vadd.f32 %v1113, %v1348
    %v1350 = vpop.f32.mrf.mxu0
    %v1351 = vadd.f32 %v1109, %v1350
    %v1352 = vpop.f32.mrf.mxu0
    %v1353 = vadd.f32 %v1113, %v1352
    %1354 = vmatprep.mubr.bf16.mxu0 0
    %1355 = vmatmul.mubr.bf16.gmra.mxu0 %v1183
    %v1356 = vpop.f32.mrf.mxu0
    %v1357 = vadd.f32 %v1109, %v1356
    %v1358 = vpop.f32.mrf.mxu0
    %v1359 = vadd.f32 %v1113, %v1358
    %v1360 = vpop.f32.mrf.mxu0
    %v1361 = vadd.f32 %v1109, %v1360
    %v1362 = vpop.f32.mrf.mxu0
    %v1363 = vadd.f32 %v1113, %v1362
    %1364 = vmatprep.mubr.bf16.mxu0 0
    %1365 = vmatmul.mubr.bf16.gmra.mxu0 %v1184
    %v1366 = vpop.f32.mrf.mxu0
    %v1367 = vadd.f32 %v1109, %v1366
    %v1368 = vpop.f32.mrf.mxu0
    %v1369 = vadd.f32 %v1113, %v1368
    %v1370 = vpop.f32.mrf.mxu0
    %v1371 = vadd.f32 %v1109, %v1370
    %v1372 = vpop.f32.mrf.mxu0
    %v1373 = vadd.f32 %v1113, %v1372
    %1374 = vmatprep.mubr.bf16.mxu0 0
    %1375 = vmatmul.mubr.bf16.gmra.mxu0 %v1185
    %v1376 = vpop.f32.mrf.mxu0
    %v1377 = vadd.f32 %v1109, %v1376
    %v1378 = vpop.f32.mrf.mxu0
    %v1379 = vadd.f32 %v1113, %v1378
    %v1380 = vpop.f32.mrf.mxu0
    %v1381 = vadd.f32 %v1109, %v1380
    %v1382 = vpop.f32.mrf.mxu0
    %v1383 = vadd.f32 %v1113, %v1382
    %1384 = vmatprep.mubr.bf16.mxu0 0
    %1385 = vmatmul.mubr.bf16.gmra.mxu0 %v1186
    %v1386 = vpop.f32.mrf.mxu0
    %v1387 = vadd.f32 %v1109, %v1386
    %v1388 = vpop.f32.mrf.mxu0
    %v1389 = vadd.f32 %v1113, %v1388
    %v1390 = vpop.f32.mrf.mxu0
    %v1391 = vadd.f32 %v1109, %v1390
    %v1392 = vpop.f32.mrf.mxu0
    %v1393 = vadd.f32 %v1113, %v1392
    %1394 = vmatprep.mubr.bf16.mxu0 0
    %1395 = vmatmul.mubr.bf16.gmra.mxu0 %v1187
    %v1396 = vpop.f32.mrf.mxu0
    %v1397 = vadd.f32 %v1109, %v1396
    %v1398 = vpop.f32.mrf.mxu0
    %v1399 = vadd.f32 %v1113, %v1398
    %v1400 = vpop.f32.mrf.mxu0
    %v1401 = vadd.f32 %v1109, %v1400
    %v1402 = vpop.f32.mrf.mxu0
    %v1403 = vadd.f32 %v1113, %v1402
    %1404 = vmatprep.mubr.bf16.mxu0 0
    %1405 = vmatmul.mubr.bf16.gmra.mxu0 %v1188
    %v1406 = vpop.f32.mrf.mxu0
    %v1407 = vadd.f32 %v1109, %v1406
    %v1408 = vpop.f32.mrf.mxu0
    %v1409 = vadd.f32 %v1113, %v1408
    %v1410 = vpop.f32.mrf.mxu0
    %v1411 = vadd.f32 %v1109, %v1410
    %v1412 = vpop.f32.mrf.mxu0
    %v1413 = vadd.f32 %v1113, %v1412
    %1414 = vmatprep.mubr.bf16.mxu0 0
    %1415 = vmatmul.mubr.bf16.gmra.mxu0 %v1189
    %v1416 = vpop.f32.mrf.mxu0
    %v1417 = vadd.f32 %v1109, %v1416
    %v1418 = vpop.f32.mrf.mxu0
    %v1419 = vadd.f32 %v1113, %v1418
    %v1420 = vpop.f32.mrf.mxu0
    %v1421 = vadd.f32 %v1109, %v1420
    %v1422 = vpop.f32.mrf.mxu0
    %v1423 = vadd.f32 %v1113, %v1422
    %1424 = vmatprep.mubr.bf16.mxu0 0
    %1425 = vmatmul.mubr.bf16.gmra.mxu0 %v1190
    %v1426 = vpop.f32.mrf.mxu0
    %v1427 = vadd.f32 %v1109, %v1426
    %v1428 = vpop.f32.mrf.mxu0
    %v1429 = vadd.f32 %v1113, %v1428
    %v1430 = vpop.f32.mrf.mxu0
    %v1431 = vadd.f32 %v1109, %v1430
    %v1432 = vpop.f32.mrf.mxu0
    %v1433 = vadd.f32 %v1113, %v1432
    %1434 = vmatprep.mubr.bf16.mxu0 0
    %1435 = vmatmul.mubr.bf16.gmra.mxu0 %v1191
    %v1436 = vpop.f32.mrf.mxu0
    %v1437 = vadd.f32 %v1109, %v1436
    %v1438 = vpop.f32.mrf.mxu0
    %v1439 = vadd.f32 %v1113, %v1438
    %v1440 = vpop.f32.mrf.mxu0
    %v1441 = vadd.f32 %v1109, %v1440
    %v1442 = vpop.f32.mrf.mxu0
    %v1443 = vadd.f32 %v1113, %v1442
    %1444 = vmatprep.mubr.bf16.mxu0 0
    %1445 = vmatmul.mubr.bf16.gmra.mxu0 %v1192
    %v1446 = vpop.f32.mrf.mxu0
    %v1447 = vadd.f32 %v1109, %v1446
    %v1448 = vpop.f32.mrf.mxu0
    %v1449 = vadd.f32 %v1113, %v1448
    %v1450 = vpop.f32.mrf.mxu0
    %v1451 = vadd.f32 %v1109, %v1450
    %v1452 = vpop.f32.mrf.mxu0
    %v1453 = vadd.f32 %v1113, %v1452
    %1454 = vmatprep.mubr.bf16.mxu0 0
    %1455 = vmatmul.mubr.bf16.gmra.mxu0 %v1193
    %v1456 = vpop.f32.mrf.mxu0
    %v1457 = vadd.f32 %v1109, %v1456
    %v1458 = vpop.f32.mrf.mxu0
    %v1459 = vadd.f32 %v1113, %v1458
    %v1460 = vpop.f32.mrf.mxu0
    %v1461 = vadd.f32 %v1109, %v1460
    %v1462 = vpop.f32.mrf.mxu0
    %v1463 = vadd.f32 %v1113, %v1462
    %1464 = vmatprep.mubr.bf16.mxu0 0
    %1465 = vmatmul.mubr.bf16.gmra.mxu0 %v1194
    %v1466 = vpop.f32.mrf.mxu0
    %v1467 = vadd.f32 %v1109, %v1466
    %v1468 = vpop.f32.mrf.mxu0
    %v1469 = vadd.f32 %v1113, %v1468
    %v1470 = vpop.f32.mrf.mxu0
    %v1471 = vadd.f32 %v1109, %v1470
    %v1472 = vpop.f32.mrf.mxu0
    %v1473 = vadd.f32 %v1113, %v1472
    %1474 = vmatprep.mubr.bf16.mxu0 0
    %1475 = vmatmul.mubr.bf16.gmra.mxu0 %v1195
    %v1476 = vpop.f32.mrf.mxu0
    %v1477 = vadd.f32 %v1109, %v1476
    %v1478 = vpop.f32.mrf.mxu0
    %v1479 = vadd.f32 %v1113, %v1478
    %v1480 = vpop.f32.mrf.mxu0
    %v1481 = vadd.f32 %v1109, %v1480
    %v1482 = vpop.f32.mrf.mxu0
    %v1483 = vadd.f32 %v1113, %v1482
    %1484 = vdwg.mxu0
    %v1485 = vpack.c.bf16 %v1331, %v1327
    %v1486 = vpack.c.bf16 %v1333, %v1329
    %v1487 = vpack.c.bf16 %v1341, %v1337
    %v1488 = vpack.c.bf16 %v1343, %v1339
    %v1489 = vpack.c.bf16 %v1351, %v1347
    %v1490 = vpack.c.bf16 %v1353, %v1349
    %v1491 = vpack.c.bf16 %v1361, %v1357
    %v1492 = vpack.c.bf16 %v1363, %v1359
    %v1493 = vpack.c.bf16 %v1371, %v1367
    %v1494 = vpack.c.bf16 %v1373, %v1369
    %v1495 = vpack.c.bf16 %v1381, %v1377
    %v1496 = vpack.c.bf16 %v1383, %v1379
    %v1497 = vpack.c.bf16 %v1391, %v1387
    %v1498 = vpack.c.bf16 %v1393, %v1389
    %v1499 = vpack.c.bf16 %v1401, %v1397
    %v1500 = vpack.c.bf16 %v1403, %v1399
    %v1501 = vpack.c.bf16 %v1411, %v1407
    %v1502 = vpack.c.bf16 %v1413, %v1409
    %v1503 = vpack.c.bf16 %v1421, %v1417
    %v1504 = vpack.c.bf16 %v1423, %v1419
    %v1505 = vpack.c.bf16 %v1431, %v1427
    %v1506 = vpack.c.bf16 %v1433, %v1429
    %v1507 = vpack.c.bf16 %v1441, %v1437
    %v1508 = vpack.c.bf16 %v1443, %v1439
    %v1509 = vpack.c.bf16 %v1451, %v1447
    %v1510 = vpack.c.bf16 %v1453, %v1449
    %v1511 = vpack.c.bf16 %v1461, %v1457
    %v1512 = vpack.c.bf16 %v1463, %v1459
    %v1513 = vpack.c.bf16 %v1471, %v1467
    %v1514 = vpack.c.bf16 %v1473, %v1469
    %v1515 = vpack.c.bf16 %v1481, %v1477
    %v1516 = vpack.c.bf16 %v1483, %v1479
    %v1549 = vunpack.c.l.b16 %v1485
    %v1550 = vunpack.c.l.b16 %v1486
    %v1551 = vunpack.c.h.b16 %v1485
    %v1552 = vunpack.c.h.b16 %v1486
    %v1553 = vunpack.c.l.b16 %v1487
    %v1554 = vunpack.c.l.b16 %v1488
    %v1555 = vunpack.c.h.b16 %v1487
    %v1556 = vunpack.c.h.b16 %v1488
    %v1557 = vunpack.c.l.b16 %v1489
    %v1558 = vunpack.c.l.b16 %v1490
    %v1559 = vunpack.c.h.b16 %v1489
    %v1560 = vunpack.c.h.b16 %v1490
    %v1561 = vunpack.c.l.b16 %v1491
    %v1562 = vunpack.c.l.b16 %v1492
    %v1563 = vunpack.c.h.b16 %v1491
    %v1564 = vunpack.c.h.b16 %v1492
    %v1565 = vunpack.c.l.b16 %v1493
    %v1566 = vunpack.c.l.b16 %v1494
    %v1567 = vunpack.c.h.b16 %v1493
    %v1568 = vunpack.c.h.b16 %v1494
    %v1569 = vunpack.c.l.b16 %v1495
    %v1570 = vunpack.c.l.b16 %v1496
    %v1571 = vunpack.c.h.b16 %v1495
    %v1572 = vunpack.c.h.b16 %v1496
    %v1573 = vunpack.c.l.b16 %v1497
    %v1574 = vunpack.c.l.b16 %v1498
    %v1575 = vunpack.c.h.b16 %v1497
    %v1576 = vunpack.c.h.b16 %v1498
    %v1577 = vunpack.c.l.b16 %v1499
    %v1578 = vunpack.c.l.b16 %v1500
    %v1579 = vunpack.c.h.b16 %v1499
    %v1580 = vunpack.c.h.b16 %v1500
    %v1581 = vunpack.c.l.b16 %v1501
    %v1582 = vunpack.c.l.b16 %v1502
    %v1583 = vunpack.c.h.b16 %v1501
    %v1584 = vunpack.c.h.b16 %v1502
    %v1585 = vunpack.c.l.b16 %v1503
    %v1586 = vunpack.c.l.b16 %v1504
    %v1587 = vunpack.c.h.b16 %v1503
    %v1588 = vunpack.c.h.b16 %v1504
    %v1589 = vunpack.c.l.b16 %v1505
    %v1590 = vunpack.c.l.b16 %v1506
    %v1591 = vunpack.c.h.b16 %v1505
    %v1592 = vunpack.c.h.b16 %v1506
    %v1593 = vunpack.c.l.b16 %v1507
    %v1594 = vunpack.c.l.b16 %v1508
    %v1595 = vunpack.c.h.b16 %v1507
    %v1596 = vunpack.c.h.b16 %v1508
    %v1597 = vunpack.c.l.b16 %v1509
    %v1598 = vunpack.c.l.b16 %v1510
    %v1599 = vunpack.c.h.b16 %v1509
    %v1600 = vunpack.c.h.b16 %v1510
    %v1601 = vunpack.c.l.b16 %v1511
    %v1602 = vunpack.c.l.b16 %v1512
    %v1603 = vunpack.c.h.b16 %v1511
    %v1604 = vunpack.c.h.b16 %v1512
    %v1605 = vunpack.c.l.b16 %v1513
    %v1606 = vunpack.c.l.b16 %v1514
    %v1607 = vunpack.c.h.b16 %v1513
    %v1608 = vunpack.c.h.b16 %v1514
    %v1609 = vunpack.c.l.b16 %v1515
    %v1610 = vunpack.c.l.b16 %v1516
    %v1611 = vunpack.c.h.b16 %v1515
    %v1612 = vunpack.c.h.b16 %v1516
    %v1613 = vpack.c.b16 %v1550, %v1549
    %v1614 = vpack.c.b16 %v1552, %v1551
    %v1615 = vpack.c.b16 %v1554, %v1553
    %v1616 = vpack.c.b16 %v1556, %v1555
    %v1617 = vpack.c.b16 %v1558, %v1557
    %v1618 = vpack.c.b16 %v1560, %v1559
    %v1619 = vpack.c.b16 %v1562, %v1561
    %v1620 = vpack.c.b16 %v1564, %v1563
    %v1621 = vpack.c.b16 %v1566, %v1565
    %v1622 = vpack.c.b16 %v1568, %v1567
    %v1623 = vpack.c.b16 %v1570, %v1569
    %v1624 = vpack.c.b16 %v1572, %v1571
    %v1625 = vpack.c.b16 %v1574, %v1573
    %v1626 = vpack.c.b16 %v1576, %v1575
    %v1627 = vpack.c.b16 %v1578, %v1577
    %v1628 = vpack.c.b16 %v1580, %v1579
    %v1629 = vpack.c.b16 %v1582, %v1581
    %v1630 = vpack.c.b16 %v1584, %v1583
    %v1631 = vpack.c.b16 %v1586, %v1585
    %v1632 = vpack.c.b16 %v1588, %v1587
    %v1633 = vpack.c.b16 %v1590, %v1589
    %v1634 = vpack.c.b16 %v1592, %v1591
    %v1635 = vpack.c.b16 %v1594, %v1593
    %v1636 = vpack.c.b16 %v1596, %v1595
    %v1637 = vpack.c.b16 %v1598, %v1597
    %v1638 = vpack.c.b16 %v1600, %v1599
    %v1639 = vpack.c.b16 %v1602, %v1601
    %v1640 = vpack.c.b16 %v1604, %v1603
    %v1641 = vpack.c.b16 %v1606, %v1605
    %v1642 = vpack.c.b16 %v1608, %v1607
    %v1643 = vpack.c.b16 %v1610, %v1609
    %v1644 = vpack.c.b16 %v1612, %v1611
    %1677 = vst [vmem:[#allocation9] sm:$0xff] %v1613
    %1678 = vst [vmem:[#allocation9 + $0x8] sm:$0xff] %v1614
    %1679 = vst [vmem:[#allocation9 + $0x10] sm:$0xff] %v1615
    %1680 = vst [vmem:[#allocation9 + $0x18] sm:$0xff] %v1616
    %1681 = vst [vmem:[#allocation9 + $0x20] sm:$0xff] %v1617
    %1682 = vst [vmem:[#allocation9 + $0x28] sm:$0xff] %v1618
    %1683 = vst [vmem:[#allocation9 + $0x30] sm:$0xff] %v1619
    %1684 = vst [vmem:[#allocation9 + $0x38] sm:$0xff] %v1620
    %1685 = vst [vmem:[#allocation9 + $0x40] sm:$0xff] %v1621
    %1686 = vst [vmem:[#allocation9 + $0x48] sm:$0xff] %v1622
    %1687 = vst [vmem:[#allocation9 + $0x50] sm:$0xff] %v1623
    %1688 = vst [vmem:[#allocation9 + $0x58] sm:$0xff] %v1624
    %1689 = vst [vmem:[#allocation9 + $0x60] sm:$0xff] %v1625
    %1690 = vst [vmem:[#allocation9 + $0x68] sm:$0xff] %v1626
    %1691 = vst [vmem:[#allocation9 + $0x70] sm:$0xff] %v1627
    %1692 = vst [vmem:[#allocation9 + $0x78] sm:$0xff] %v1628
    %1693 = vst [vmem:[#allocation9 + $0x80] sm:$0xff] %v1629
    %1694 = vst [vmem:[#allocation9 + $0x88] sm:$0xff] %v1630
    %1695 = vst [vmem:[#allocation9 + $0x90] sm:$0xff] %v1631
    %1696 = vst [vmem:[#allocation9 + $0x98] sm:$0xff] %v1632
    %1697 = vst [vmem:[#allocation9 + $0xa0] sm:$0xff] %v1633
    %1698 = vst [vmem:[#allocation9 + $0xa8] sm:$0xff] %v1634
    %1699 = vst [vmem:[#allocation9 + $0xb0] sm:$0xff] %v1635
    %1700 = vst [vmem:[#allocation9 + $0xb8] sm:$0xff] %v1636
    %1701 = vst [vmem:[#allocation9 + $0xc0] sm:$0xff] %v1637
    %1702 = vst [vmem:[#allocation9 + $0xc8] sm:$0xff] %v1638
    %1703 = vst [vmem:[#allocation9 + $0xd0] sm:$0xff] %v1639
    %1704 = vst [vmem:[#allocation9 + $0xd8] sm:$0xff] %v1640
    %1705 = vst [vmem:[#allocation9 + $0xe0] sm:$0xff] %v1641
    %1706 = vst [vmem:[#allocation9 + $0xe8] sm:$0xff] %v1642
    %1707 = vst [vmem:[#allocation9 + $0xf0] sm:$0xff] %v1643
    %1708 = vst [vmem:[#allocation9 + $0xf8] sm:$0xff] %v1644
    // Predicated region
    $region46: #{tpu_custom_call.1} parent=1 // pred_check
      _
    $region47: #{tpu_custom_call.1} parent=1 // pred_check_branch
      %1710 = sbr.rel (0) target = $region49
    $region48: #{tpu_custom_call.1} parent=1 // pred_region
      %s1712 = ssub.s32 4096, 4096
      %1713 = vsyncadd [#allocation5], %s1712
      %s1714 = sshll.u32 [#allocation9], 4
      %s1715 = int_to_ptr.vmem [resolvable:$true] %s1714
      %1720 = dma.vmem_to_hbm [thread:$0]  %s1715, 4096, %s7, [#allocation5], 128, 128, 8
    $region49: #{tpu_custom_call.1} parent=1 // pred_fallthru
      _
    // Predicated region
    $region50: #{tpu_custom_call.1} parent=1 // pred_check
      _
    $region51: #{tpu_custom_call.1} parent=1 // pred_check_branch
      %1722 = sbr.rel (0) target = $region53
    $region52: #{tpu_custom_call.1} parent=1 // pred_region
      %1723 = dma.done [#allocation5], 4096
    $region53: #{tpu_custom_call.1} parent=1 // pred_fallthru
      _
    %1724 = vsyncpa [#allocation4], 1
    %1725 = vsyncpa [#allocation7], 1
    %1726 = vsyncpa [#allocation5], 1

</llo_original>
